<compile_context>
chip_gen: v7x
topology: tpu7x:2x2x1
jax: 0.10.0
libtpu: 0.0.40
codegen_flags: <defaults>
</compile_context>

<pallas_src>
import math

import jax
import jax.numpy as jnp
from jax.experimental import pallas as pl
from jax.experimental.pallas import tpu as pltpu


def _silu(x):
    return x * (1.0 / (1.0 + jnp.exp(-x)))


def _round_up(x, m):
    return ((x + m - 1) // m) * m


def make_output_block_kernel(n_pad, te, n_residual):
    inv_sqrt2 = 1.0 / math.sqrt(2.0)

    def kernel(*refs):
        it = iter(refs)
        m_ref = next(it)                                   # (TE, De)  f32
        rbf_ref = next(it)                                 # (TE, Dr)  f32
        idx_ref = next(it)                                 # (1, TE)   int32
        w_rbf = next(it)                                   # (Dr, De)  bf16
        w_e0 = next(it)                                    # (De, Da)  bf16 (scale folded)
        we_res = [(next(it), next(it)) for _ in range(n_residual)]
        w_e_out = next(it)                                 # (Da, Tp)  bf16 (zero-padded)
        w_f0 = next(it)                                    # (De, De)  bf16 (scale folded)
        wf_res = [(next(it), next(it)) for _ in range(n_residual)]
        w_f_out = next(it)                                 # (De, Tp)  bf16 (zero-padded)
        e_out = next(it)                                   # (N_pad, Tp) f32, resident
        f_out = next(it)                                   # (TE, Tp)   f32, streamed
        xE_acc = next(it)                                  # (N_pad, De) f32 scratch

        step = pl.program_id(0)
        last = pl.num_programs(0) - 1

        @pl.when(step == 0)
        def _init():
            xE_acc[...] = jnp.zeros_like(xE_acc)

        # dense_rbf (bf16 MXU, f32 accumulate) + elementwise gate (f32 VPU)
        rbf_mlp = jnp.dot(rbf_ref[...].astype(jnp.bfloat16), w_rbf[...],
                          preferred_element_type=jnp.float32)
        x = m_ref[...] * rbf_mlp                           # (TE, De) f32
        x_bf = x.astype(jnp.bfloat16)

        # scatter-add of this edge tile: per-tile one-hot (N_pad, TE) matmul.
        # Padded edges carry idx == N_pad and match no atom row.
        seg = idx_ref[...]                                 # (1, TE)
        rows = jax.lax.broadcasted_iota(jnp.int32, (n_pad, te), 0)
        onehot = jnp.where(rows == seg, 1.0, 0.0).astype(jnp.bfloat16)
        xE_acc[...] += jnp.dot(onehot, x_bf, preferred_element_type=jnp.float32)

        # ---- force branch (per edge tile): scale_rbf already folded into w_f0.
        x_F = _silu(jnp.dot(x_bf, w_f0[...], preferred_element_type=jnp.float32))
        for wa, wb in wf_res:
            r = _silu(jnp.dot(x_F.astype(jnp.bfloat16), wa[...],
                              preferred_element_type=jnp.float32))
            r = _silu(jnp.dot(r.astype(jnp.bfloat16), wb[...],
                              preferred_element_type=jnp.float32))
            x_F = (x_F + r) * inv_sqrt2
        f_out[...] = jnp.dot(x_F.astype(jnp.bfloat16), w_f_out[...],
                             preferred_element_type=jnp.float32)

        # ---- energy epilogue (once): scale_sum already folded into w_e0.
        @pl.when(step == last)
        def _energy():
            x_E = xE_acc[...]
            x_E = _silu(jnp.dot(x_E.astype(jnp.bfloat16), w_e0[...],
                                preferred_element_type=jnp.float32))
            for wa, wb in we_res:
                r = _silu(jnp.dot(x_E.astype(jnp.bfloat16), wa[...],
                                  preferred_element_type=jnp.float32))
                r = _silu(jnp.dot(r.astype(jnp.bfloat16), wb[...],
                                  preferred_element_type=jnp.float32))
                x_E = (x_E + r) * inv_sqrt2
            e_out[...] = jnp.dot(x_E.astype(jnp.bfloat16), w_e_out[...],
                                 preferred_element_type=jnp.float32)

    return kernel


def output_block_forward(h, m_st, rbf, idx_t, params, *, n_residual, n_targets,
                         scale_sum=1.0, scale_rbf=1.0, edge_tile=256):
    """Pallas implementation of OutputBlock.forward. h is only used for N."""
    N = h.shape[0]
    E, De = m_st.shape
    Dr = rbf.shape[1]

    T_pad = max(128, _round_up(n_targets, 128))       # lane-dense outputs
    N_pad = _round_up(max(N, 8), 8)

    # ---- host-side weight prep: fold ScaleFactor scales, pad out-projections
    #      to the lane-dense width, cast everything feeding the MXU to bf16.
    def bf(w):
        return jnp.asarray(w, jnp.float32).astype(jnp.bfloat16)

    weights = [bf(params["w_rbf"]),
               bf(jnp.float32(scale_sum) * params["w_e0"])]
    for wa, wb in params["we_res"]:
        weights += [bf(wa), bf(wb)]
    weights.append(bf(jnp.pad(jnp.asarray(params["w_e_out"], jnp.float32),
                              ((0, 0), (0, T_pad - n_targets)))))
    weights.append(bf(jnp.float32(scale_rbf) * params["w_f0"]))
    for wa, wb in params["wf_res"]:
        weights += [bf(wa), bf(wb)]
    weights.append(bf(jnp.pad(jnp.asarray(params["w_f_out"], jnp.float32),
                              ((0, 0), (0, T_pad - n_targets)))))

    # ---- edge-tile sizing against a v7x-safe VMEM budget (64 MiB physical).
    def vmem_estimate(te):
        w_bytes = sum(int(w.size) * w.dtype.itemsize for w in weights)
        tile_bytes = te * (De + Dr + T_pad) * 4 + te * 4      # m, rbf, f_out, idx
        resident_bytes = N_pad * T_pad * 4 + N_pad * De * 4   # e_out + accumulator
        return 2 * tile_bytes + w_bytes + resident_bytes      # 2x: double buffering

    VMEM_BUDGET = 40 * 1024 * 1024
    TE = max(128, (min(edge_tile, _round_up(E, 128)) // 128) * 128)
    while TE > 128 and vmem_estimate(TE) > VMEM_BUDGET:
        TE = max(128, (TE // 2 // 128) * 128)
    E_pad = _round_up(E, TE)
    n_tiles = E_pad // TE
    vmem_limit = int(min(max(2 * vmem_estimate(TE) + 8 * 2**20, 24 * 2**20),
                         48 * 2**20))

    # ---- pad streamed inputs; padded edges point at a non-existent row N_pad.
    m_p = jnp.pad(jnp.asarray(m_st, jnp.float32), ((0, E_pad - E), (0, 0)))
    rbf_p = jnp.pad(jnp.asarray(rbf, jnp.float32), ((0, E_pad - E), (0, 0)))
    idx_p = jnp.pad(idx_t.astype(jnp.int32), (0, E_pad - E),
                    constant_values=N_pad).reshape(1, E_pad)

    def resident(shape):
        return pl.BlockSpec(shape, lambda e: (0,) * len(shape))

    in_specs = [
        pl.BlockSpec((TE, De), lambda e: (e, 0)),      # m_st tile
        pl.BlockSpec((TE, Dr), lambda e: (e, 0)),      # rbf tile
        pl.BlockSpec((1, TE), lambda e: (0, e)),       # idx tile
    ] + [resident(w.shape) for w in weights]

    out_specs = (
        pl.BlockSpec((N_pad, T_pad), lambda e: (0, 0)),  # energy: resident block
        pl.BlockSpec((TE, T_pad), lambda e: (e, 0)),     # forces: streamed
    )

    kernel = make_output_block_kernel(N_pad, TE, n_residual)
    e_out_p, f_out_p = pl.pallas_call(
        kernel,
        out_shape=(jax.ShapeDtypeStruct((N_pad, T_pad), jnp.float32),
                   jax.ShapeDtypeStruct((E_pad, T_pad), jnp.float32)),
        grid_spec=pltpu.PrefetchScalarGridSpec(
            num_scalar_prefetch=0,
            grid=(n_tiles,),
            in_specs=in_specs,
            out_specs=out_specs,
            scratch_shapes=[pltpu.VMEM((N_pad, De), jnp.float32)],
        ),
        compiler_params=pltpu.CompilerParams(
            # Single edge axis carries the x_E accumulation + resident E output
            # -> must be "arbitrary" (sequential).
            dimension_semantics=("arbitrary",),
            vmem_limit_bytes=vmem_limit,
        ),
    )(m_p, rbf_p, idx_p, *weights)

    return e_out_p[:N, :n_targets], f_out_p[:E, :n_targets]


# ----------------------------- references ----------------------------------

def output_block_reference(h, m_st, rbf, idx_t, params, *, n_residual, n_targets,
                           scale_sum=1.0, scale_rbf=1.0):
    """Pure-JAX f32 reference (module semantics)."""
    N = h.shape[0]
    inv_sqrt2 = 1.0 / math.sqrt(2.0)
    rbf_mlp = rbf @ params["w_rbf"]
    x = m_st * rbf_mlp
    x_E = jax.ops.segment_sum(x, idx_t, num_segments=N) * scale_sum
    x_E = _silu(x_E @ params["w_e0"])
    for wa, wb in params["we_res"]:
        r = _silu(_silu(x_E @ wa) @ wb)
        x_E = (x_E + r) * inv_sqrt2
    E_out = x_E @ params["w_e_out"]

    x_F = x * scale_rbf
    x_F = _silu(x_F @ params["w_f0"])
    for wa, wb in params["wf_res"]:
        r = _silu(_silu(x_F @ wa) @ wb)
        x_F = (x_F + r) * inv_sqrt2
    F_out = x_F @ params["w_f_out"]
    return E_out, F_out


def output_block_emulated(h, m_st, rbf, idx_t, params, *, n_residual, n_targets,
                          scale_sum=1.0, scale_rbf=1.0):
    """Pure-JAX mirror of the kernel's bf16-MXU / f32-accumulate numerics."""
    N = h.shape[0]
    inv_sqrt2 = 1.0 / math.sqrt(2.0)

    def dot(a, b):
        return jnp.dot(a.astype(jnp.bfloat16), b.astype(jnp.bfloat16),
                       preferred_element_type=jnp.float32)

    w_e0 = jnp.float32(scale_sum) * params["w_e0"]
    w_f0 = jnp.float32(scale_rbf) * params["w_f0"]

    rbf_mlp = dot(rbf, params["w_rbf"])
    x = m_st * rbf_mlp
    x_q = x.astype(jnp.bfloat16).astype(jnp.float32)
    x_E = jax.ops.segment_sum(x_q, idx_t, num_segments=N)
    x_E = _silu(dot(x_E, w_e0))
    for wa, wb in params["we_res"]:
        r = _silu(dot(x_E, wa))
        r = _silu(dot(r, wb))
        x_E = (x_E + r) * inv_sqrt2
    E_out = dot(x_E, params["w_e_out"])

    x_F = _silu(dot(x, w_f0))
    for wa, wb in params["wf_res"]:
        r = _silu(dot(x_F, wa))
        r = _silu(dot(r, wb))
        x_F = (x_F + r) * inv_sqrt2
    F_out = dot(x_F, params["w_f_out"])
    return E_out, F_out


def init_params(key, *, emb_size_atom, emb_size_edge, emb_size_rbf,
                n_residual, n_targets):
    """Deterministic synthetic weights, stored already-transposed: (in, out)."""
    def dense(k, din, dout):
        return (jax.random.normal(k, (din, dout), jnp.float32)
                / jnp.sqrt(jnp.float32(din)))

    # 5 standalone dense layers + 2 per residual layer in each of the 2 branches.
    keys = iter(jax.random.split(key, 5 + 4 * n_residual))
    params = {
        "w_rbf": dense(next(keys), emb_size_rbf, emb_size_edge),
        "w_e0": dense(next(keys), emb_size_edge, emb_size_atom),
        "we_res": [(dense(next(keys), emb_size_atom, emb_size_atom),
                    dense(next(keys), emb_size_atom, emb_size_atom))
                   for _ in range(n_residual)],
        "w_e_out": dense(next(keys), emb_size_atom, n_targets),
        "w_f0": dense(next(keys), emb_size_edge, emb_size_edge),
        "wf_res": [(dense(next(keys), emb_size_edge, emb_size_edge),
                    dense(next(keys), emb_size_edge, emb_size_edge))
                   for _ in range(n_residual)],
        "w_f_out": dense(next(keys), emb_size_edge, n_targets),
    }
    return params


if __name__ == "__main__":
    # Small but grid-exercising shapes: 4 edge tiles of 256, padded N and E.
    N = 50               # atoms
    E = 1000             # edges
    emb_size_atom = 64
    emb_size_edge = 64
    emb_size_rbf = 16
    n_residual = 2
    n_targets = 1
    scale_sum = 0.62
    scale_rbf = 1.35

    key = jax.random.PRNGKey(0)
    k_h, k_m, k_r, k_i, k_p = jax.random.split(key, 5)

    h = jax.random.normal(k_h, (N, emb_size_atom), jnp.float32)    # only N is used
    m_st = jax.random.normal(k_m, (E, emb_size_edge), jnp.float32)
    rbf = jax.random.normal(k_r, (E, emb_size_rbf), jnp.float32)
    idx_t = jax.random.randint(k_i, (E,), 0, N, jnp.int32)

    params = init_params(k_p, emb_size_atom=emb_size_atom,
                         emb_size_edge=emb_size_edge,
                         emb_size_rbf=emb_size_rbf,
                         n_residual=n_residual, n_targets=n_targets)

    E_out, F_out = output_block_forward(
        h, m_st, rbf, idx_t, params,
        n_residual=n_residual, n_targets=n_targets,
        scale_sum=scale_sum, scale_rbf=scale_rbf, edge_tile=256)
    jax.block_until_ready((E_out, F_out))

    assert E_out.shape == (N, n_targets) and F_out.shape == (E, n_targets)

    # Tight check vs a pure-JAX mirror of the kernel's bf16/f32 numerics
    # (validates tiling, padding, scatter accumulation, scale folding).
    E_emu, F_emu = output_block_emulated(
        h, m_st, rbf, idx_t, params,
        n_residual=n_residual, n_targets=n_targets,
        scale_sum=scale_sum, scale_rbf=scale_rbf)
    assert jnp.allclose(E_out, E_emu, atol=1e-3, rtol=1e-3), "energy emu mismatch"
    assert jnp.allclose(F_out, F_emu, atol=1e-3, rtol=1e-3), "forces emu mismatch"

    # Loose check vs the full-f32 module semantics (bf16 MXU rounding only).
    E_ref, F_ref = output_block_reference(
        h, m_st, rbf, idx_t, params,
        n_residual=n_residual, n_targets=n_targets,
        scale_sum=scale_sum, scale_rbf=scale_rbf)
    assert jnp.allclose(E_out, E_ref, atol=1e-1, rtol=1e-1), "energy f32 mismatch"
    assert jnp.allclose(F_out, F_ref, atol=1e-1, rtol=1e-1), "forces f32 mismatch"

    print("KERNEL_OK")
</pallas_src>

<mosaic_0001>
module attributes {stable_mosaic.version = 11 : i64} {
  func.func @kernel(%arg0: i32, %arg1: memref<256x64xf32, #tpu.memory_space<vmem>>, %arg2: memref<256x16xf32, #tpu.memory_space<vmem>>, %arg3: memref<1x256xi32, #tpu.memory_space<vmem>>, %arg4: memref<16x64xbf16, #tpu.memory_space<vmem>>, %arg5: memref<64x64xbf16, #tpu.memory_space<vmem>>, %arg6: memref<64x64xbf16, #tpu.memory_space<vmem>>, %arg7: memref<64x64xbf16, #tpu.memory_space<vmem>>, %arg8: memref<64x64xbf16, #tpu.memory_space<vmem>>, %arg9: memref<64x64xbf16, #tpu.memory_space<vmem>>, %arg10: memref<64x128xbf16, #tpu.memory_space<vmem>>, %arg11: memref<64x64xbf16, #tpu.memory_space<vmem>>, %arg12: memref<64x64xbf16, #tpu.memory_space<vmem>>, %arg13: memref<64x64xbf16, #tpu.memory_space<vmem>>, %arg14: memref<64x64xbf16, #tpu.memory_space<vmem>>, %arg15: memref<64x64xbf16, #tpu.memory_space<vmem>>, %arg16: memref<64x128xbf16, #tpu.memory_space<vmem>>, %arg17: memref<56x128xf32, #tpu.memory_space<vmem>>, %arg18: memref<256x128xf32, #tpu.memory_space<vmem>>, %arg19: memref<56x64xf32, #tpu.memory_space<vmem>>) attributes {dimension_semantics = [#tpu.dimension_semantics<arbitrary>], iteration_bounds = array<i64: 4>, scalar_prefetch = 0 : i64, scratch_operands = 1 : i64, tpu.core_type = #tpu.core_type<tc>, window_params = [{transform_indices = @transform_0, window_bounds = array<i64: 256, 64>}, {transform_indices = @transform_1, window_bounds = array<i64: 256, 16>}, {transform_indices = @transform_2, window_bounds = array<i64: 1, 256>}, {pipeline_mode = #tpu.pipeline_mode<synchronous>, transform_indices = @transform_3, window_bounds = array<i64: 16, 64>}, {pipeline_mode = #tpu.pipeline_mode<synchronous>, transform_indices = @transform_4, window_bounds = array<i64: 64, 64>}, {pipeline_mode = #tpu.pipeline_mode<synchronous>, transform_indices = @transform_5, window_bounds = array<i64: 64, 64>}, {pipeline_mode = #tpu.pipeline_mode<synchronous>, transform_indices = @transform_6, window_bounds = array<i64: 64, 64>}, {pipeline_mode = #tpu.pipeline_mode<synchronous>, transform_indices = @transform_7, window_bounds = array<i64: 64, 64>}, {pipeline_mode = #tpu.pipeline_mode<synchronous>, transform_indices = @transform_8, window_bounds = array<i64: 64, 64>}, {pipeline_mode = #tpu.pipeline_mode<synchronous>, transform_indices = @transform_9, window_bounds = array<i64: 64, 128>}, {pipeline_mode = #tpu.pipeline_mode<synchronous>, transform_indices = @transform_10, window_bounds = array<i64: 64, 64>}, {pipeline_mode = #tpu.pipeline_mode<synchronous>, transform_indices = @transform_11, window_bounds = array<i64: 64, 64>}, {pipeline_mode = #tpu.pipeline_mode<synchronous>, transform_indices = @transform_12, window_bounds = array<i64: 64, 64>}, {pipeline_mode = #tpu.pipeline_mode<synchronous>, transform_indices = @transform_13, window_bounds = array<i64: 64, 64>}, {pipeline_mode = #tpu.pipeline_mode<synchronous>, transform_indices = @transform_14, window_bounds = array<i64: 64, 64>}, {pipeline_mode = #tpu.pipeline_mode<synchronous>, transform_indices = @transform_15, window_bounds = array<i64: 64, 128>}, {pipeline_mode = #tpu.pipeline_mode<synchronous>, transform_indices = @transform_16, window_bounds = array<i64: 56, 128>}, {transform_indices = @transform_17, window_bounds = array<i64: 256, 128>}]} {
    %c0_i32 = arith.constant 0 : i32
    %0 = arith.cmpi eq, %arg0, %c0_i32 : i32
    %1 = arith.extui %0 : i1 to i32
    %c0_i32_0 = arith.constant 0 : i32
    %2 = arith.cmpi ne, %1, %c0_i32_0 : i32
    scf.if %2 {
      %cst_53 = arith.constant 0.000000e+00 : f32
      %89 = vector.broadcast %cst_53 : f32 to vector<56x64xf32>
      %c0_54 = arith.constant 0 : index
      %c0_55 = arith.constant 0 : index
      %90 = vector.load %arg19[%c0_54, %c0_55] : memref<56x64xf32, #tpu.memory_space<vmem>>, vector<56x64xf32>
      tpu.vector_store %arg19[%c0_54, %c0_55], %89 {strides = array<i32>} : memref<56x64xf32, #tpu.memory_space<vmem>>, vector<56x64xf32>,
    } else {
    }
    %c0 = arith.constant 0 : index
    %c0_1 = arith.constant 0 : index
    %3 = vector.load %arg2[%c0, %c0_1] : memref<256x16xf32, #tpu.memory_space<vmem>>, vector<256x16xf32>
    %4 = arith.truncf %3 : vector<256x16xf32> to vector<256x16xbf16>
    %c0_2 = arith.constant 0 : index
    %c0_3 = arith.constant 0 : index
    %5 = vector.load %arg4[%c0_2, %c0_3] : memref<16x64xbf16, #tpu.memory_space<vmem>>, vector<16x64xbf16>
    %cst = arith.constant dense<0.000000e+00> : vector<256x64xf32>
    %6 = tpu.matmul %4, %5, %cst {dimension_numbers = #tpu.dot_dimension_numbers<[1], [0], [0], [1], [0, 0, 1, 1], [], []>} : vector<256x16xbf16>, vector<16x64xbf16>, vector<256x64xf32> -> vector<256x64xf32>
    %c0_4 = arith.constant 0 : index
    %c0_5 = arith.constant 0 : index
    %7 = vector.load %arg1[%c0_4, %c0_5] : memref<256x64xf32, #tpu.memory_space<vmem>>, vector<256x64xf32>
    %8 = arith.mulf %7, %6 : vector<256x64xf32>
    %9 = arith.truncf %8 : vector<256x64xf32> to vector<256x64xbf16>
    %c0_6 = arith.constant 0 : index
    %c0_7 = arith.constant 0 : index
    %10 = vector.load %arg3[%c0_6, %c0_7] : memref<1x256xi32, #tpu.memory_space<vmem>>, vector<1x256xi32>
    %11 = tpu.iota {dimensions = array<i32: 0>} : vector<56x256xi32>
    %12 = vector.broadcast %10 : vector<1x256xi32> to vector<56x256xi32>
    %13 = arith.cmpi eq, %11, %12 : vector<56x256xi32>
    %cst_8 = arith.constant 1.000000e+00 : f32
    %cst_9 = arith.constant 0.000000e+00 : f32
    %14 = vector.broadcast %cst_8 : f32 to vector<56x256xf32>
    %15 = vector.broadcast %cst_9 : f32 to vector<56x256xf32>
    %16 = arith.select %13, %14, %15 : vector<56x256xi1>, vector<56x256xf32>
    %17 = arith.truncf %16 : vector<56x256xf32> to vector<56x256xbf16>
    %c0_10 = arith.constant 0 : index
    %c0_11 = arith.constant 0 : index
    %18 = vector.load %arg19[%c0_10, %c0_11] : memref<56x64xf32, #tpu.memory_space<vmem>>, vector<56x64xf32>
    %cst_12 = arith.constant dense<0.000000e+00> : vector<56x64xf32>
    %19 = tpu.matmul %17, %9, %cst_12 {dimension_numbers = #tpu.dot_dimension_numbers<[1], [0], [0], [1], [0, 0, 1, 1], [], []>} : vector<56x256xbf16>, vector<256x64xbf16>, vector<56x64xf32> -> vector<56x64xf32>
    %20 = arith.addf %18, %19 : vector<56x64xf32>
    %c0_13 = arith.constant 0 : index
    %c0_14 = arith.constant 0 : index
    %21 = vector.load %arg19[%c0_13, %c0_14] : memref<56x64xf32, #tpu.memory_space<vmem>>, vector<56x64xf32>
    tpu.vector_store %arg19[%c0_13, %c0_14], %20 {strides = array<i32>} : memref<56x64xf32, #tpu.memory_space<vmem>>, vector<56x64xf32>,
    %c0_15 = arith.constant 0 : index
    %c0_16 = arith.constant 0 : index
    %22 = vector.load %arg11[%c0_15, %c0_16] : memref<64x64xbf16, #tpu.memory_space<vmem>>, vector<64x64xbf16>
    %cst_17 = arith.constant dense<0.000000e+00> : vector<256x64xf32>
    %23 = tpu.matmul %9, %22, %cst_17 {dimension_numbers = #tpu.dot_dimension_numbers<[1], [0], [0], [1], [0, 0, 1, 1], [], []>} : vector<256x64xbf16>, vector<64x64xbf16>, vector<256x64xf32> -> vector<256x64xf32>
    %cst_18 = arith.constant 0.000000e+00 : f32
    %24 = vector.broadcast %cst_18 : f32 to vector<256x64xf32>
    %25 = arith.subf %24, %23 : vector<256x64xf32>
    %26 = math.exp %25 : vector<256x64xf32>
    %cst_19 = arith.constant 1.000000e+00 : f32
    %27 = vector.broadcast %cst_19 : f32 to vector<256x64xf32>
    %28 = arith.addf %27, %26 : vector<256x64xf32>
    %cst_20 = arith.constant 1.000000e+00 : f32
    %29 = vector.broadcast %cst_20 : f32 to vector<256x64xf32>
    %30 = arith.divf %29, %28 : vector<256x64xf32>
    %31 = arith.mulf %23, %30 : vector<256x64xf32>
    %32 = arith.truncf %31 : vector<256x64xf32> to vector<256x64xbf16>
    %c0_21 = arith.constant 0 : index
    %c0_22 = arith.constant 0 : index
    %33 = vector.load %arg12[%c0_21, %c0_22] : memref<64x64xbf16, #tpu.memory_space<vmem>>, vector<64x64xbf16>
    %cst_23 = arith.constant dense<0.000000e+00> : vector<256x64xf32>
    %34 = tpu.matmul %32, %33, %cst_23 {dimension_numbers = #tpu.dot_dimension_numbers<[1], [0], [0], [1], [0, 0, 1, 1], [], []>} : vector<256x64xbf16>, vector<64x64xbf16>, vector<256x64xf32> -> vector<256x64xf32>
    %cst_24 = arith.constant 0.000000e+00 : f32
    %35 = vector.broadcast %cst_24 : f32 to vector<256x64xf32>
    %36 = arith.subf %35, %34 : vector<256x64xf32>
    %37 = math.exp %36 : vector<256x64xf32>
    %cst_25 = arith.constant 1.000000e+00 : f32
    %38 = vector.broadcast %cst_25 : f32 to vector<256x64xf32>
    %39 = arith.addf %38, %37 : vector<256x64xf32>
    %cst_26 = arith.constant 1.000000e+00 : f32
    %40 = vector.broadcast %cst_26 : f32 to vector<256x64xf32>
    %41 = arith.divf %40, %39 : vector<256x64xf32>
    %42 = arith.mulf %34, %41 : vector<256x64xf32>
    %43 = arith.truncf %42 : vector<256x64xf32> to vector<256x64xbf16>
    %c0_27 = arith.constant 0 : index
    %c0_28 = arith.constant 0 : index
    %44 = vector.load %arg13[%c0_27, %c0_28] : memref<64x64xbf16, #tpu.memory_space<vmem>>, vector<64x64xbf16>
    %cst_29 = arith.constant dense<0.000000e+00> : vector<256x64xf32>
    %45 = tpu.matmul %43, %44, %cst_29 {dimension_numbers = #tpu.dot_dimension_numbers<[1], [0], [0], [1], [0, 0, 1, 1], [], []>} : vector<256x64xbf16>, vector<64x64xbf16>, vector<256x64xf32> -> vector<256x64xf32>
    %cst_30 = arith.constant 0.000000e+00 : f32
    %46 = vector.broadcast %cst_30 : f32 to vector<256x64xf32>
    %47 = arith.subf %46, %45 : vector<256x64xf32>
    %48 = math.exp %47 : vector<256x64xf32>
    %cst_31 = arith.constant 1.000000e+00 : f32
    %49 = vector.broadcast %cst_31 : f32 to vector<256x64xf32>
    %50 = arith.addf %49, %48 : vector<256x64xf32>
    %cst_32 = arith.constant 1.000000e+00 : f32
    %51 = vector.broadcast %cst_32 : f32 to vector<256x64xf32>
    %52 = arith.divf %51, %50 : vector<256x64xf32>
    %53 = arith.mulf %45, %52 : vector<256x64xf32>
    %54 = arith.addf %31, %53 : vector<256x64xf32>
    %cst_33 = arith.constant 0.707106769 : f32
    %55 = vector.broadcast %cst_33 : f32 to vector<256x64xf32>
    %56 = arith.mulf %54, %55 : vector<256x64xf32>
    %57 = arith.truncf %56 : vector<256x64xf32> to vector<256x64xbf16>
    %c0_34 = arith.constant 0 : index
    %c0_35 = arith.constant 0 : index
    %58 = vector.load %arg14[%c0_34, %c0_35] : memref<64x64xbf16, #tpu.memory_space<vmem>>, vector<64x64xbf16>
    %cst_36 = arith.constant dense<0.000000e+00> : vector<256x64xf32>
    %59 = tpu.matmul %57, %58, %cst_36 {dimension_numbers = #tpu.dot_dimension_numbers<[1], [0], [0], [1], [0, 0, 1, 1], [], []>} : vector<256x64xbf16>, vector<64x64xbf16>, vector<256x64xf32> -> vector<256x64xf32>
    %cst_37 = arith.constant 0.000000e+00 : f32
    %60 = vector.broadcast %cst_37 : f32 to vector<256x64xf32>
    %61 = arith.subf %60, %59 : vector<256x64xf32>
    %62 = math.exp %61 : vector<256x64xf32>
    %cst_38 = arith.constant 1.000000e+00 : f32
    %63 = vector.broadcast %cst_38 : f32 to vector<256x64xf32>
    %64 = arith.addf %63, %62 : vector<256x64xf32>
    %cst_39 = arith.constant 1.000000e+00 : f32
    %65 = vector.broadcast %cst_39 : f32 to vector<256x64xf32>
    %66 = arith.divf %65, %64 : vector<256x64xf32>
    %67 = arith.mulf %59, %66 : vector<256x64xf32>
    %68 = arith.truncf %67 : vector<256x64xf32> to vector<256x64xbf16>
    %c0_40 = arith.constant 0 : index
    %c0_41 = arith.constant 0 : index
    %69 = vector.load %arg15[%c0_40, %c0_41] : memref<64x64xbf16, #tpu.memory_space<vmem>>, vector<64x64xbf16>
    %cst_42 = arith.constant dense<0.000000e+00> : vector<256x64xf32>
    %70 = tpu.matmul %68, %69, %cst_42 {dimension_numbers = #tpu.dot_dimension_numbers<[1], [0], [0], [1], [0, 0, 1, 1], [], []>} : vector<256x64xbf16>, vector<64x64xbf16>, vector<256x64xf32> -> vector<256x64xf32>
    %cst_43 = arith.constant 0.000000e+00 : f32
    %71 = vector.broadcast %cst_43 : f32 to vector<256x64xf32>
    %72 = arith.subf %71, %70 : vector<256x64xf32>
    %73 = math.exp %72 : vector<256x64xf32>
    %cst_44 = arith.constant 1.000000e+00 : f32
    %74 = vector.broadcast %cst_44 : f32 to vector<256x64xf32>
    %75 = arith.addf %74, %73 : vector<256x64xf32>
    %cst_45 = arith.constant 1.000000e+00 : f32
    %76 = vector.broadcast %cst_45 : f32 to vector<256x64xf32>
    %77 = arith.divf %76, %75 : vector<256x64xf32>
    %78 = arith.mulf %70, %77 : vector<256x64xf32>
    %79 = arith.addf %56, %78 : vector<256x64xf32>
    %cst_46 = arith.constant 0.707106769 : f32
    %80 = vector.broadcast %cst_46 : f32 to vector<256x64xf32>
    %81 = arith.mulf %79, %80 : vector<256x64xf32>
    %82 = arith.truncf %81 : vector<256x64xf32> to vector<256x64xbf16>
    %c0_47 = arith.constant 0 : index
    %c0_48 = arith.constant 0 : index
    %83 = vector.load %arg16[%c0_47, %c0_48] : memref<64x128xbf16, #tpu.memory_space<vmem>>, vector<64x128xbf16>
    %cst_49 = arith.constant dense<0.000000e+00> : vector<256x128xf32>
    %84 = tpu.matmul %82, %83, %cst_49 {dimension_numbers = #tpu.dot_dimension_numbers<[1], [0], [0], [1], [0, 0, 1, 1], [], []>} : vector<256x64xbf16>, vector<64x128xbf16>, vector<256x128xf32> -> vector<256x128xf32>
    %c0_50 = arith.constant 0 : index
    %c0_51 = arith.constant 0 : index
    %85 = vector.load %arg18[%c0_50, %c0_51] : memref<256x128xf32, #tpu.memory_space<vmem>>, vector<256x128xf32>
    tpu.vector_store %arg18[%c0_50, %c0_51], %84 {strides = array<i32>} : memref<256x128xf32, #tpu.memory_space<vmem>>, vector<256x128xf32>,
    %c3_i32 = arith.constant 3 : i32
    %86 = arith.cmpi eq, %arg0, %c3_i32 : i32
    %87 = arith.extui %86 : i1 to i32
    %c0_i32_52 = arith.constant 0 : i32
    %88 = arith.cmpi ne, %87, %c0_i32_52 : i32
    scf.if %88 {
      %c0_53 = arith.constant 0 : index
      %c0_54 = arith.constant 0 : index
      %89 = vector.load %arg19[%c0_53, %c0_54] : memref<56x64xf32, #tpu.memory_space<vmem>>, vector<56x64xf32>
      %90 = arith.truncf %89 : vector<56x64xf32> to vector<56x64xbf16>
      %c0_55 = arith.constant 0 : index
      %c0_56 = arith.constant 0 : index
      %91 = vector.load %arg5[%c0_55, %c0_56] : memref<64x64xbf16, #tpu.memory_space<vmem>>, vector<64x64xbf16>
      %cst_57 = arith.constant dense<0.000000e+00> : vector<56x64xf32>
      %92 = tpu.matmul %90, %91, %cst_57 {dimension_numbers = #tpu.dot_dimension_numbers<[1], [0], [0], [1], [0, 0, 1, 1], [], []>} : vector<56x64xbf16>, vector<64x64xbf16>, vector<56x64xf32> -> vector<56x64xf32>
      %cst_58 = arith.constant 0.000000e+00 : f32
      %93 = vector.broadcast %cst_58 : f32 to vector<56x64xf32>
      %94 = arith.subf %93, %92 : vector<56x64xf32>
      %95 = math.exp %94 : vector<56x64xf32>
      %cst_59 = arith.constant 1.000000e+00 : f32
      %96 = vector.broadcast %cst_59 : f32 to vector<56x64xf32>
      %97 = arith.addf %96, %95 : vector<56x64xf32>
      %cst_60 = arith.constant 1.000000e+00 : f32
      %98 = vector.broadcast %cst_60 : f32 to vector<56x64xf32>
      %99 = arith.divf %98, %97 : vector<56x64xf32>
      %100 = arith.mulf %92, %99 : vector<56x64xf32>
      %101 = arith.truncf %100 : vector<56x64xf32> to vector<56x64xbf16>
      %c0_61 = arith.constant 0 : index
      %c0_62 = arith.constant 0 : index
      %102 = vector.load %arg6[%c0_61, %c0_62] : memref<64x64xbf16, #tpu.memory_space<vmem>>, vector<64x64xbf16>
      %cst_63 = arith.constant dense<0.000000e+00> : vector<56x64xf32>
      %103 = tpu.matmul %101, %102, %cst_63 {dimension_numbers = #tpu.dot_dimension_numbers<[1], [0], [0], [1], [0, 0, 1, 1], [], []>} : vector<56x64xbf16>, vector<64x64xbf16>, vector<56x64xf32> -> vector<56x64xf32>
      %cst_64 = arith.constant 0.000000e+00 : f32
      %104 = vector.broadcast %cst_64 : f32 to vector<56x64xf32>
      %105 = arith.subf %104, %103 : vector<56x64xf32>
      %106 = math.exp %105 : vector<56x64xf32>
      %cst_65 = arith.constant 1.000000e+00 : f32
      %107 = vector.broadcast %cst_65 : f32 to vector<56x64xf32>
      %108 = arith.addf %107, %106 : vector<56x64xf32>
      %cst_66 = arith.constant 1.000000e+00 : f32
      %109 = vector.broadcast %cst_66 : f32 to vector<56x64xf32>
      %110 = arith.divf %109, %108 : vector<56x64xf32>
      %111 = arith.mulf %103, %110 : vector<56x64xf32>
      %112 = arith.truncf %111 : vector<56x64xf32> to vector<56x64xbf16>
      %c0_67 = arith.constant 0 : index
      %c0_68 = arith.constant 0 : index
      %113 = vector.load %arg7[%c0_67, %c0_68] : memref<64x64xbf16, #tpu.memory_space<vmem>>, vector<64x64xbf16>
      %cst_69 = arith.constant dense<0.000000e+00> : vector<56x64xf32>
      %114 = tpu.matmul %112, %113, %cst_69 {dimension_numbers = #tpu.dot_dimension_numbers<[1], [0], [0], [1], [0, 0, 1, 1], [], []>} : vector<56x64xbf16>, vector<64x64xbf16>, vector<56x64xf32> -> vector<56x64xf32>
      %cst_70 = arith.constant 0.000000e+00 : f32
      %115 = vector.broadcast %cst_70 : f32 to vector<56x64xf32>
      %116 = arith.subf %115, %114 : vector<56x64xf32>
      %117 = math.exp %116 : vector<56x64xf32>
      %cst_71 = arith.constant 1.000000e+00 : f32
      %118 = vector.broadcast %cst_71 : f32 to vector<56x64xf32>
      %119 = arith.addf %118, %117 : vector<56x64xf32>
      %cst_72 = arith.constant 1.000000e+00 : f32
      %120 = vector.broadcast %cst_72 : f32 to vector<56x64xf32>
      %121 = arith.divf %120, %119 : vector<56x64xf32>
      %122 = arith.mulf %114, %121 : vector<56x64xf32>
      %123 = arith.addf %100, %122 : vector<56x64xf32>
      %cst_73 = arith.constant 0.707106769 : f32
      %124 = vector.broadcast %cst_73 : f32 to vector<56x64xf32>
      %125 = arith.mulf %123, %124 : vector<56x64xf32>
      %126 = arith.truncf %125 : vector<56x64xf32> to vector<56x64xbf16>
      %c0_74 = arith.constant 0 : index
      %c0_75 = arith.constant 0 : index
      %127 = vector.load %arg8[%c0_74, %c0_75] : memref<64x64xbf16, #tpu.memory_space<vmem>>, vector<64x64xbf16>
      %cst_76 = arith.constant dense<0.000000e+00> : vector<56x64xf32>
      %128 = tpu.matmul %126, %127, %cst_76 {dimension_numbers = #tpu.dot_dimension_numbers<[1], [0], [0], [1], [0, 0, 1, 1], [], []>} : vector<56x64xbf16>, vector<64x64xbf16>, vector<56x64xf32> -> vector<56x64xf32>
      %cst_77 = arith.constant 0.000000e+00 : f32
      %129 = vector.broadcast %cst_77 : f32 to vector<56x64xf32>
      %130 = arith.subf %129, %128 : vector<56x64xf32>
      %131 = math.exp %130 : vector<56x64xf32>
      %cst_78 = arith.constant 1.000000e+00 : f32
      %132 = vector.broadcast %cst_78 : f32 to vector<56x64xf32>
      %133 = arith.addf %132, %131 : vector<56x64xf32>
      %cst_79 = arith.constant 1.000000e+00 : f32
      %134 = vector.broadcast %cst_79 : f32 to vector<56x64xf32>
      %135 = arith.divf %134, %133 : vector<56x64xf32>
      %136 = arith.mulf %128, %135 : vector<56x64xf32>
      %137 = arith.truncf %136 : vector<56x64xf32> to vector<56x64xbf16>
      %c0_80 = arith.constant 0 : index
      %c0_81 = arith.constant 0 : index
      %138 = vector.load %arg9[%c0_80, %c0_81] : memref<64x64xbf16, #tpu.memory_space<vmem>>, vector<64x64xbf16>
      %cst_82 = arith.constant dense<0.000000e+00> : vector<56x64xf32>
      %139 = tpu.matmul %137, %138, %cst_82 {dimension_numbers = #tpu.dot_dimension_numbers<[1], [0], [0], [1], [0, 0, 1, 1], [], []>} : vector<56x64xbf16>, vector<64x64xbf16>, vector<56x64xf32> -> vector<56x64xf32>
      %cst_83 = arith.constant 0.000000e+00 : f32
      %140 = vector.broadcast %cst_83 : f32 to vector<56x64xf32>
      %141 = arith.subf %140, %139 : vector<56x64xf32>
      %142 = math.exp %141 : vector<56x64xf32>
      %cst_84 = arith.constant 1.000000e+00 : f32
      %143 = vector.broadcast %cst_84 : f32 to vector<56x64xf32>
      %144 = arith.addf %143, %142 : vector<56x64xf32>
      %cst_85 = arith.constant 1.000000e+00 : f32
      %145 = vector.broadcast %cst_85 : f32 to vector<56x64xf32>
      %146 = arith.divf %145, %144 : vector<56x64xf32>
      %147 = arith.mulf %139, %146 : vector<56x64xf32>
      %148 = arith.addf %125, %147 : vector<56x64xf32>
      %cst_86 = arith.constant 0.707106769 : f32
      %149 = vector.broadcast %cst_86 : f32 to vector<56x64xf32>
      %150 = arith.mulf %148, %149 : vector<56x64xf32>
      %151 = arith.truncf %150 : vector<56x64xf32> to vector<56x64xbf16>
      %c0_87 = arith.constant 0 : index
      %c0_88 = arith.constant 0 : index
      %152 = vector.load %arg10[%c0_87, %c0_88] : memref<64x128xbf16, #tpu.memory_space<vmem>>, vector<64x128xbf16>
      %cst_89 = arith.constant dense<0.000000e+00> : vector<56x128xf32>
      %153 = tpu.matmul %151, %152, %cst_89 {dimension_numbers = #tpu.dot_dimension_numbers<[1], [0], [0], [1], [0, 0, 1, 1], [], []>} : vector<56x64xbf16>, vector<64x128xbf16>, vector<56x128xf32> -> vector<56x128xf32>
      %c0_90 = arith.constant 0 : index
      %c0_91 = arith.constant 0 : index
      %154 = vector.load %arg17[%c0_90, %c0_91] : memref<56x128xf32, #tpu.memory_space<vmem>>, vector<56x128xf32>
      tpu.vector_store %arg17[%c0_90, %c0_91], %153 {strides = array<i32>} : memref<56x128xf32, #tpu.memory_space<vmem>>, vector<56x128xf32>,
    } else {
    }
    return
  }
  func.func @transform_0(%arg0: i32) -> (i32, i32) {
    %c0_i32 = arith.constant 0 : i32
    %c0_i32_0 = arith.constant 0 : i32
    return %arg0, %c0_i32 : i32, i32
  }
  func.func @transform_1(%arg0: i32) -> (i32, i32) {
    %c0_i32 = arith.constant 0 : i32
    %c0_i32_0 = arith.constant 0 : i32
    return %arg0, %c0_i32 : i32, i32
  }
  func.func @transform_2(%arg0: i32) -> (i32, i32) {
    %c0_i32 = arith.constant 0 : i32
    %c0_i32_0 = arith.constant 0 : i32
    return %c0_i32, %arg0 : i32, i32
  }
  func.func @transform_3(%arg0: i32) -> (i32, i32) {
    %c0_i32 = arith.constant 0 : i32
    %c0_i32_0 = arith.constant 0 : i32
    %c0_i32_1 = arith.constant 0 : i32
    return %c0_i32, %c0_i32_0 : i32, i32
  }
  func.func @transform_4(%arg0: i32) -> (i32, i32) {
    %c0_i32 = arith.constant 0 : i32
    %c0_i32_0 = arith.constant 0 : i32
    %c0_i32_1 = arith.constant 0 : i32
    return %c0_i32, %c0_i32_0 : i32, i32
  }
  func.func @transform_5(%arg0: i32) -> (i32, i32) {
    %c0_i32 = arith.constant 0 : i32
    %c0_i32_0 = arith.constant 0 : i32
    %c0_i32_1 = arith.constant 0 : i32
    return %c0_i32, %c0_i32_0 : i32, i32
  }
  func.func @transform_6(%arg0: i32) -> (i32, i32) {
    %c0_i32 = arith.constant 0 : i32
    %c0_i32_0 = arith.constant 0 : i32
    %c0_i32_1 = arith.constant 0 : i32
    return %c0_i32, %c0_i32_0 : i32, i32
  }
  func.func @transform_7(%arg0: i32) -> (i32, i32) {
    %c0_i32 = arith.constant 0 : i32
    %c0_i32_0 = arith.constant 0 : i32
    %c0_i32_1 = arith.constant 0 : i32
    return %c0_i32, %c0_i32_0 : i32, i32
  }
  func.func @transform_8(%arg0: i32) -> (i32, i32) {
    %c0_i32 = arith.constant 0 : i32
    %c0_i32_0 = arith.constant 0 : i32
    %c0_i32_1 = arith.constant 0 : i32
    return %c0_i32, %c0_i32_0 : i32, i32
  }
  func.func @transform_9(%arg0: i32) -> (i32, i32) {
    %c0_i32 = arith.constant 0 : i32
    %c0_i32_0 = arith.constant 0 : i32
    %c0_i32_1 = arith.constant 0 : i32
    return %c0_i32, %c0_i32_0 : i32, i32
  }
  func.func @transform_10(%arg0: i32) -> (i32, i32) {
    %c0_i32 = arith.constant 0 : i32
    %c0_i32_0 = arith.constant 0 : i32
    %c0_i32_1 = arith.constant 0 : i32
    return %c0_i32, %c0_i32_0 : i32, i32
  }
  func.func @transform_11(%arg0: i32) -> (i32, i32) {
    %c0_i32 = arith.constant 0 : i32
    %c0_i32_0 = arith.constant 0 : i32
    %c0_i32_1 = arith.constant 0 : i32
    return %c0_i32, %c0_i32_0 : i32, i32
  }
  func.func @transform_12(%arg0: i32) -> (i32, i32) {
    %c0_i32 = arith.constant 0 : i32
    %c0_i32_0 = arith.constant 0 : i32
    %c0_i32_1 = arith.constant 0 : i32
    return %c0_i32, %c0_i32_0 : i32, i32
  }
  func.func @transform_13(%arg0: i32) -> (i32, i32) {
    %c0_i32 = arith.constant 0 : i32
    %c0_i32_0 = arith.constant 0 : i32
    %c0_i32_1 = arith.constant 0 : i32
    return %c0_i32, %c0_i32_0 : i32, i32
  }
  func.func @transform_14(%arg0: i32) -> (i32, i32) {
    %c0_i32 = arith.constant 0 : i32
    %c0_i32_0 = arith.constant 0 : i32
    %c0_i32_1 = arith.constant 0 : i32
    return %c0_i32, %c0_i32_0 : i32, i32
  }
  func.func @transform_15(%arg0: i32) -> (i32, i32) {
    %c0_i32 = arith.constant 0 : i32
    %c0_i32_0 = arith.constant 0 : i32
    %c0_i32_1 = arith.constant 0 : i32
    return %c0_i32, %c0_i32_0 : i32, i32
  }
  func.func @transform_16(%arg0: i32) -> (i32, i32) {
    %c0_i32 = arith.constant 0 : i32
    %c0_i32_0 = arith.constant 0 : i32
    %c0_i32_1 = arith.constant 0 : i32
    return %c0_i32, %c0_i32_0 : i32, i32
  }
  func.func @transform_17(%arg0: i32) -> (i32, i32) {
    %c0_i32 = arith.constant 0 : i32
    %c0_i32_0 = arith.constant 0 : i32
    return %arg0, %c0_i32 : i32, i32
  }
}

</mosaic_0001>

<llo_original>
// kernel: tpu_custom_call.1
$region0: #{tpu_custom_call.1}
  #allocation0 [shape = 'u32[]', space=smem, size = 0x4, offset = 0x4, fixed_abs, tag = 'smem constant byte address 0x4 - core index']
  #allocation1 [shape = 'u32[144,128]{1,0:T(1,128)}', space=vmem, size = 0x12000, scoped, tag = 'internal scratch']
  #allocation2 [shape = 'f32[56,64]{1,0:T(8,128)}', space=vmem, size = 0x7000, scoped, tag = 'scratch operand']
  %s0 = inlined_call_operand.vmem [shape: f32[1024,64], index: 0, kind: input, shape index: {}]
  %s1 = inlined_call_operand.vmem [shape: f32[1024,16], index: 1, kind: input, shape index: {}]
  %s2 = inlined_call_operand.vmem [shape: s32[1,1024], index: 2, kind: input, shape index: {}]
  %s3 = inlined_call_operand.vmem [shape: bf16[16,64], index: 3, kind: input, shape index: {}]
  %s4 = inlined_call_operand.vmem [shape: bf16[64,64], index: 4, kind: input, shape index: {}]
  %s5 = inlined_call_operand.vmem [shape: bf16[64,64], index: 5, kind: input, shape index: {}]
  %s6 = inlined_call_operand.vmem [shape: bf16[64,64], index: 6, kind: input, shape index: {}]
  %s7 = inlined_call_operand.vmem [shape: bf16[64,64], index: 7, kind: input, shape index: {}]
  %s8 = inlined_call_operand.vmem [shape: bf16[64,64], index: 8, kind: input, shape index: {}]
  %s9 = inlined_call_operand.vmem [shape: bf16[64,128], index: 9, kind: input, shape index: {}]
  %s10 = inlined_call_operand.vmem [shape: bf16[64,64], index: 10, kind: input, shape index: {}]
  %s11 = inlined_call_operand.vmem [shape: bf16[64,64], index: 11, kind: input, shape index: {}]
  %s12 = inlined_call_operand.vmem [shape: bf16[64,64], index: 12, kind: input, shape index: {}]
  %s13 = inlined_call_operand.vmem [shape: bf16[64,64], index: 13, kind: input, shape index: {}]
  %s14 = inlined_call_operand.vmem [shape: bf16[64,64], index: 14, kind: input, shape index: {}]
  %s15 = inlined_call_operand.vmem [shape: bf16[64,128], index: 15, kind: input, shape index: {}]
  %s16 = inlined_call_operand.hbm [shape: f32[56,128], index: 16, kind: output, shape index: {0}]
  %s17 = inlined_call_operand.hbm [shape: f32[1024,128], index: 17, kind: output, shape index: {1}]
  %18 = xla_tuple %s16, %s17
  %s19 = sld [smem:[#allocation0]]
  $region113: #{tpu_custom_call.1} parent=0
    _
  %s21 = ssub.s32 1, %s19
  %s22 = scalar_select 0, %s21, %s19
  $region1: #{tpu_custom_call.1} parent=0
    #allocation3 [shape = 'u8[28672]{0}', space=vmem, size = 0x7000, scoped, tag = 'output window, operand 0, single buffered']
    #allocation4 [shape = 's32[2]{0}', space=sflag, size = 0x8, scoped, tag = 'scoped memory for tpu_custom_call.1']
    #allocation5 [shape = 'u8[262144]{0}', space=vmem, size = 0x40000, scoped, tag = 'output window, operand 1']
    #allocation6 [shape = 's32[2]{0}', space=sflag, size = 0x8, scoped, tag = 'scoped memory for tpu_custom_call.1']
    %23 = vsyncpa [#allocation4], 0
    %24 = vsyncpa [#allocation6], 0
    %s25 = scalar_lea.sflag [#allocation6], 1
    %26 = vsyncpa %s25, 0
    loop: start=0, step=1, limit=6
    $region2: #{tpu_custom_call.1} parent=1 // loop_pre_header
      _
    $region3: #{tpu_custom_call.1} parent=1 // loop_header
      %s28 = sphi 0, %s32
      %p29 = scmp.ge.s32.totalorder %s28, 6
      %s38 = sphi 0, %s40
      %s41 = sphi 0, %s38
      %s42 = sphi 0, %s41
      %s58 = sphi 0, %s42
      %s64 = sphi 0, %s66
      %s67 = sphi 0, %s64
      %s68 = sphi 0, %s67
      %s84 = sphi 0, %s68
      %s90 = sphi 0, %s92
      %s93 = sphi 0, %s90
      %s94 = sphi 0, %s93
      %s110 = sphi 0, %s94
      %s114 = sphi 0, %s114
      %s116 = sphi 0, %s114
      %s117 = sphi 0, %s116
      %s131 = sphi 0, %s117
      %s135 = sphi 0, %s135
      %s137 = sphi 0, %s135
      %s138 = sphi 0, %s137
      %s152 = sphi 0, %s138
      %s156 = sphi 0, %s156
      %s158 = sphi 0, %s156
      %s159 = sphi 0, %s158
      %s173 = sphi 0, %s159
      %s177 = sphi 0, %s177
      %s179 = sphi 0, %s177
      %s180 = sphi 0, %s179
      %s194 = sphi 0, %s180
      %s198 = sphi 0, %s198
      %s200 = sphi 0, %s198
      %s201 = sphi 0, %s200
      %s215 = sphi 0, %s201
      %s219 = sphi 0, %s219
      %s221 = sphi 0, %s219
      %s222 = sphi 0, %s221
      %s236 = sphi 0, %s222
      %s240 = sphi 0, %s240
      %s242 = sphi 0, %s240
      %s243 = sphi 0, %s242
      %s257 = sphi 0, %s243
      %s261 = sphi 0, %s261
      %s263 = sphi 0, %s261
      %s264 = sphi 0, %s263
      %s278 = sphi 0, %s264
      %s282 = sphi 0, %s282
      %s284 = sphi 0, %s282
      %s285 = sphi 0, %s284
      %s299 = sphi 0, %s285
      %s303 = sphi 0, %s303
      %s305 = sphi 0, %s303
      %s306 = sphi 0, %s305
      %s320 = sphi 0, %s306
      %s324 = sphi 0, %s324
      %s326 = sphi 0, %s324
      %s327 = sphi 0, %s326
      %s341 = sphi 0, %s327
      %s345 = sphi 0, %s345
      %s347 = sphi 0, %s345
      %s348 = sphi 0, %s347
      %s362 = sphi 0, %s348
      %s366 = sphi 0, %s366
      %s368 = sphi 0, %s366
      %s369 = sphi 0, %s368
      %s383 = sphi 0, %s369
      %s387 = sphi 0, %s387
      %s389 = sphi 0, %s387
      %s390 = sphi 0, %s389
      %s404 = sphi 0, %s390
      %s410 = sphi 0, %s412
      %s413 = sphi 0, %s410
      %s414 = sphi 0, %s413
      %s430 = sphi 0, %s414
    $region4: #{tpu_custom_call.1} parent=1 // loop_header_branch
      %31 = sbr.rel (%p29) target = $region8
    $region5: #{tpu_custom_call.1} parent=1 // loop_body
      %s33 = ssub.s32 %s28, 1
      %s34 = ssub.s32 %s28, 2
      %s35 = sadd.s32 %s28, 1
      %s36 = ssub.s32 %s28, %s35
      %p37 = scmp.eq.s32.totalorder %s36, 0
      %s39 = sadd.s32 %s38, 1
      %s40 = scalar_select %p37, %s38, %s39
      %p43 = pneg %p37
      %p44 = scmp.eq.s32.totalorder %s28, 3
      %p45 = por %p43, %p44
      %p46 = scmp.ne.s32.totalorder %s38, %s41
      %p47 = scmp.eq.s32.totalorder %s28, 0
      %p48 = por %p46, %p47
      %p49 = scmp.ne.s32.totalorder %s38, %s41
      %p50 = scmp.eq.s32.totalorder %s33, 3
      %p51 = por %p49, %p50
      %p52 = scmp.ne.s32.totalorder %s41, %s42
      %p53 = scmp.eq.s32.totalorder %s33, 0
      %p54 = por %p52, %p53
      %p55 = scmp.ne.s32.totalorder %s41, %s42
      %p56 = scmp.eq.s32.totalorder %s34, 3
      %p57 = por %p55, %p56
      %p59 = scmp.ne.s32.totalorder %s42, %s58
      %p60 = scmp.eq.s32.totalorder %s34, 0
      %p61 = por %p59, %p60
      %s62 = ssub.s32 %s28, %s35
      %p63 = scmp.eq.s32.totalorder %s62, 0
      %s65 = sadd.s32 %s64, 1
      %s66 = scalar_select %p63, %s64, %s65
      %p69 = pneg %p63
      %p70 = scmp.eq.s32.totalorder %s28, 3
      %p71 = por %p69, %p70
      %p72 = scmp.ne.s32.totalorder %s64, %s67
      %p73 = scmp.eq.s32.totalorder %s28, 0
      %p74 = por %p72, %p73
      %p75 = scmp.ne.s32.totalorder %s64, %s67
      %p76 = scmp.eq.s32.totalorder %s33, 3
      %p77 = por %p75, %p76
      %p78 = scmp.ne.s32.totalorder %s67, %s68
      %p79 = scmp.eq.s32.totalorder %s33, 0
      %p80 = por %p78, %p79
      %p81 = scmp.ne.s32.totalorder %s67, %s68
      %p82 = scmp.eq.s32.totalorder %s34, 3
      %p83 = por %p81, %p82
      %p85 = scmp.ne.s32.totalorder %s68, %s84
      %p86 = scmp.eq.s32.totalorder %s34, 0
      %p87 = por %p85, %p86
      %s88 = ssub.s32 %s28, %s35
      %p89 = scmp.eq.s32.totalorder %s88, 0
      %s91 = sadd.s32 %s90, 1
      %s92 = scalar_select %p89, %s90, %s91
      %p95 = pneg %p89
      %p96 = scmp.eq.s32.totalorder %s28, 3
      %p97 = por %p95, %p96
      %p98 = scmp.ne.s32.totalorder %s90, %s93
      %p99 = scmp.eq.s32.totalorder %s28, 0
      %p100 = por %p98, %p99
      %p101 = scmp.ne.s32.totalorder %s90, %s93
      %p102 = scmp.eq.s32.totalorder %s33, 3
      %p103 = por %p101, %p102
      %p104 = scmp.ne.s32.totalorder %s93, %s94
      %p105 = scmp.eq.s32.totalorder %s33, 0
      %p106 = por %p104, %p105
      %p107 = scmp.ne.s32.totalorder %s93, %s94
      %p108 = scmp.eq.s32.totalorder %s34, 3
      %p109 = por %p107, %p108
      %p111 = scmp.ne.s32.totalorder %s94, %s110
      %p112 = scmp.eq.s32.totalorder %s34, 0
      %p113 = por %p111, %p112
      %s115 = sadd.s32 %s114, 1
      %p118 = scmp.eq.s32.totalorder %s28, 3
      %p119 = scmp.ne.s32.totalorder %s114, %s116
      %p120 = scmp.eq.s32.totalorder %s28, 0
      %p121 = por %p119, %p120
      %p122 = scmp.ne.s32.totalorder %s114, %s116
      %p123 = scmp.eq.s32.totalorder %s33, 3
      %p124 = por %p122, %p123
      %p125 = scmp.ne.s32.totalorder %s116, %s117
      %p126 = scmp.eq.s32.totalorder %s33, 0
      %p127 = por %p125, %p126
      %p128 = scmp.ne.s32.totalorder %s116, %s117
      %p129 = scmp.eq.s32.totalorder %s34, 3
      %p130 = por %p128, %p129
      %p132 = scmp.ne.s32.totalorder %s117, %s131
      %p133 = scmp.eq.s32.totalorder %s34, 0
      %p134 = por %p132, %p133
      %s136 = sadd.s32 %s135, 1
      %p139 = scmp.eq.s32.totalorder %s28, 3
      %p140 = scmp.ne.s32.totalorder %s135, %s137
      %p141 = scmp.eq.s32.totalorder %s28, 0
      %p142 = por %p140, %p141
      %p143 = scmp.ne.s32.totalorder %s135, %s137
      %p144 = scmp.eq.s32.totalorder %s33, 3
      %p145 = por %p143, %p144
      %p146 = scmp.ne.s32.totalorder %s137, %s138
      %p147 = scmp.eq.s32.totalorder %s33, 0
      %p148 = por %p146, %p147
      %p149 = scmp.ne.s32.totalorder %s137, %s138
      %p150 = scmp.eq.s32.totalorder %s34, 3
      %p151 = por %p149, %p150
      %p153 = scmp.ne.s32.totalorder %s138, %s152
      %p154 = scmp.eq.s32.totalorder %s34, 0
      %p155 = por %p153, %p154
      %s157 = sadd.s32 %s156, 1
      %p160 = scmp.eq.s32.totalorder %s28, 3
      %p161 = scmp.ne.s32.totalorder %s156, %s158
      %p162 = scmp.eq.s32.totalorder %s28, 0
      %p163 = por %p161, %p162
      %p164 = scmp.ne.s32.totalorder %s156, %s158
      %p165 = scmp.eq.s32.totalorder %s33, 3
      %p166 = por %p164, %p165
      %p167 = scmp.ne.s32.totalorder %s158, %s159
      %p168 = scmp.eq.s32.totalorder %s33, 0
      %p169 = por %p167, %p168
      %p170 = scmp.ne.s32.totalorder %s158, %s159
      %p171 = scmp.eq.s32.totalorder %s34, 3
      %p172 = por %p170, %p171
      %p174 = scmp.ne.s32.totalorder %s159, %s173
      %p175 = scmp.eq.s32.totalorder %s34, 0
      %p176 = por %p174, %p175
      %s178 = sadd.s32 %s177, 1
      %p181 = scmp.eq.s32.totalorder %s28, 3
      %p182 = scmp.ne.s32.totalorder %s177, %s179
      %p183 = scmp.eq.s32.totalorder %s28, 0
      %p184 = por %p182, %p183
      %p185 = scmp.ne.s32.totalorder %s177, %s179
      %p186 = scmp.eq.s32.totalorder %s33, 3
      %p187 = por %p185, %p186
      %p188 = scmp.ne.s32.totalorder %s179, %s180
      %p189 = scmp.eq.s32.totalorder %s33, 0
      %p190 = por %p188, %p189
      %p191 = scmp.ne.s32.totalorder %s179, %s180
      %p192 = scmp.eq.s32.totalorder %s34, 3
      %p193 = por %p191, %p192
      %p195 = scmp.ne.s32.totalorder %s180, %s194
      %p196 = scmp.eq.s32.totalorder %s34, 0
      %p197 = por %p195, %p196
      %s199 = sadd.s32 %s198, 1
      %p202 = scmp.eq.s32.totalorder %s28, 3
      %p203 = scmp.ne.s32.totalorder %s198, %s200
      %p204 = scmp.eq.s32.totalorder %s28, 0
      %p205 = por %p203, %p204
      %p206 = scmp.ne.s32.totalorder %s198, %s200
      %p207 = scmp.eq.s32.totalorder %s33, 3
      %p208 = por %p206, %p207
      %p209 = scmp.ne.s32.totalorder %s200, %s201
      %p210 = scmp.eq.s32.totalorder %s33, 0
      %p211 = por %p209, %p210
      %p212 = scmp.ne.s32.totalorder %s200, %s201
      %p213 = scmp.eq.s32.totalorder %s34, 3
      %p214 = por %p212, %p213
      %p216 = scmp.ne.s32.totalorder %s201, %s215
      %p217 = scmp.eq.s32.totalorder %s34, 0
      %p218 = por %p216, %p217
      %s220 = sadd.s32 %s219, 1
      %p223 = scmp.eq.s32.totalorder %s28, 3
      %p224 = scmp.ne.s32.totalorder %s219, %s221
      %p225 = scmp.eq.s32.totalorder %s28, 0
      %p226 = por %p224, %p225
      %p227 = scmp.ne.s32.totalorder %s219, %s221
      %p228 = scmp.eq.s32.totalorder %s33, 3
      %p229 = por %p227, %p228
      %p230 = scmp.ne.s32.totalorder %s221, %s222
      %p231 = scmp.eq.s32.totalorder %s33, 0
      %p232 = por %p230, %p231
      %p233 = scmp.ne.s32.totalorder %s221, %s222
      %p234 = scmp.eq.s32.totalorder %s34, 3
      %p235 = por %p233, %p234
      %p237 = scmp.ne.s32.totalorder %s222, %s236
      %p238 = scmp.eq.s32.totalorder %s34, 0
      %p239 = por %p237, %p238
      %s241 = sadd.s32 %s240, 1
      %p244 = scmp.eq.s32.totalorder %s28, 3
      %p245 = scmp.ne.s32.totalorder %s240, %s242
      %p246 = scmp.eq.s32.totalorder %s28, 0
      %p247 = por %p245, %p246
      %p248 = scmp.ne.s32.totalorder %s240, %s242
      %p249 = scmp.eq.s32.totalorder %s33, 3
      %p250 = por %p248, %p249
      %p251 = scmp.ne.s32.totalorder %s242, %s243
      %p252 = scmp.eq.s32.totalorder %s33, 0
      %p253 = por %p251, %p252
      %p254 = scmp.ne.s32.totalorder %s242, %s243
      %p255 = scmp.eq.s32.totalorder %s34, 3
      %p256 = por %p254, %p255
      %p258 = scmp.ne.s32.totalorder %s243, %s257
      %p259 = scmp.eq.s32.totalorder %s34, 0
      %p260 = por %p258, %p259
      %s262 = sadd.s32 %s261, 1
      %p265 = scmp.eq.s32.totalorder %s28, 3
      %p266 = scmp.ne.s32.totalorder %s261, %s263
      %p267 = scmp.eq.s32.totalorder %s28, 0
      %p268 = por %p266, %p267
      %p269 = scmp.ne.s32.totalorder %s261, %s263
      %p270 = scmp.eq.s32.totalorder %s33, 3
      %p271 = por %p269, %p270
      %p272 = scmp.ne.s32.totalorder %s263, %s264
      %p273 = scmp.eq.s32.totalorder %s33, 0
      %p274 = por %p272, %p273
      %p275 = scmp.ne.s32.totalorder %s263, %s264
      %p276 = scmp.eq.s32.totalorder %s34, 3
      %p277 = por %p275, %p276
      %p279 = scmp.ne.s32.totalorder %s264, %s278
      %p280 = scmp.eq.s32.totalorder %s34, 0
      %p281 = por %p279, %p280
      %s283 = sadd.s32 %s282, 1
      %p286 = scmp.eq.s32.totalorder %s28, 3
      %p287 = scmp.ne.s32.totalorder %s282, %s284
      %p288 = scmp.eq.s32.totalorder %s28, 0
      %p289 = por %p287, %p288
      %p290 = scmp.ne.s32.totalorder %s282, %s284
      %p291 = scmp.eq.s32.totalorder %s33, 3
      %p292 = por %p290, %p291
      %p293 = scmp.ne.s32.totalorder %s284, %s285
      %p294 = scmp.eq.s32.totalorder %s33, 0
      %p295 = por %p293, %p294
      %p296 = scmp.ne.s32.totalorder %s284, %s285
      %p297 = scmp.eq.s32.totalorder %s34, 3
      %p298 = por %p296, %p297
      %p300 = scmp.ne.s32.totalorder %s285, %s299
      %p301 = scmp.eq.s32.totalorder %s34, 0
      %p302 = por %p300, %p301
      %s304 = sadd.s32 %s303, 1
      %p307 = scmp.eq.s32.totalorder %s28, 3
      %p308 = scmp.ne.s32.totalorder %s303, %s305
      %p309 = scmp.eq.s32.totalorder %s28, 0
      %p310 = por %p308, %p309
      %p311 = scmp.ne.s32.totalorder %s303, %s305
      %p312 = scmp.eq.s32.totalorder %s33, 3
      %p313 = por %p311, %p312
      %p314 = scmp.ne.s32.totalorder %s305, %s306
      %p315 = scmp.eq.s32.totalorder %s33, 0
      %p316 = por %p314, %p315
      %p317 = scmp.ne.s32.totalorder %s305, %s306
      %p318 = scmp.eq.s32.totalorder %s34, 3
      %p319 = por %p317, %p318
      %p321 = scmp.ne.s32.totalorder %s306, %s320
      %p322 = scmp.eq.s32.totalorder %s34, 0
      %p323 = por %p321, %p322
      %s325 = sadd.s32 %s324, 1
      %p328 = scmp.eq.s32.totalorder %s28, 3
      %p329 = scmp.ne.s32.totalorder %s324, %s326
      %p330 = scmp.eq.s32.totalorder %s28, 0
      %p331 = por %p329, %p330
      %p332 = scmp.ne.s32.totalorder %s324, %s326
      %p333 = scmp.eq.s32.totalorder %s33, 3
      %p334 = por %p332, %p333
      %p335 = scmp.ne.s32.totalorder %s326, %s327
      %p336 = scmp.eq.s32.totalorder %s33, 0
      %p337 = por %p335, %p336
      %p338 = scmp.ne.s32.totalorder %s326, %s327
      %p339 = scmp.eq.s32.totalorder %s34, 3
      %p340 = por %p338, %p339
      %p342 = scmp.ne.s32.totalorder %s327, %s341
      %p343 = scmp.eq.s32.totalorder %s34, 0
      %p344 = por %p342, %p343
      %s346 = sadd.s32 %s345, 1
      %p349 = scmp.eq.s32.totalorder %s28, 3
      %p350 = scmp.ne.s32.totalorder %s345, %s347
      %p351 = scmp.eq.s32.totalorder %s28, 0
      %p352 = por %p350, %p351
      %p353 = scmp.ne.s32.totalorder %s345, %s347
      %p354 = scmp.eq.s32.totalorder %s33, 3
      %p355 = por %p353, %p354
      %p356 = scmp.ne.s32.totalorder %s347, %s348
      %p357 = scmp.eq.s32.totalorder %s33, 0
      %p358 = por %p356, %p357
      %p359 = scmp.ne.s32.totalorder %s347, %s348
      %p360 = scmp.eq.s32.totalorder %s34, 3
      %p361 = por %p359, %p360
      %p363 = scmp.ne.s32.totalorder %s348, %s362
      %p364 = scmp.eq.s32.totalorder %s34, 0
      %p365 = por %p363, %p364
      %s367 = sadd.s32 %s366, 1
      %p370 = scmp.eq.s32.totalorder %s28, 3
      %p371 = scmp.ne.s32.totalorder %s366, %s368
      %p372 = scmp.eq.s32.totalorder %s28, 0
      %p373 = por %p371, %p372
      %p374 = scmp.ne.s32.totalorder %s366, %s368
      %p375 = scmp.eq.s32.totalorder %s33, 3
      %p376 = por %p374, %p375
      %p377 = scmp.ne.s32.totalorder %s368, %s369
      %p378 = scmp.eq.s32.totalorder %s33, 0
      %p379 = por %p377, %p378
      %p380 = scmp.ne.s32.totalorder %s368, %s369
      %p381 = scmp.eq.s32.totalorder %s34, 3
      %p382 = por %p380, %p381
      %p384 = scmp.ne.s32.totalorder %s369, %s383
      %p385 = scmp.eq.s32.totalorder %s34, 0
      %p386 = por %p384, %p385
      %s388 = sadd.s32 %s387, 1
      %p391 = scmp.eq.s32.totalorder %s28, 3
      %p392 = scmp.ne.s32.totalorder %s387, %s389
      %p393 = scmp.eq.s32.totalorder %s28, 0
      %p394 = por %p392, %p393
      %p395 = scmp.ne.s32.totalorder %s387, %s389
      %p396 = scmp.eq.s32.totalorder %s33, 3
      %p397 = por %p395, %p396
      %p398 = scmp.ne.s32.totalorder %s389, %s390
      %p399 = scmp.eq.s32.totalorder %s33, 0
      %p400 = por %p398, %p399
      %p401 = scmp.ne.s32.totalorder %s389, %s390
      %p402 = scmp.eq.s32.totalorder %s34, 3
      %p403 = por %p401, %p402
      %p405 = scmp.ne.s32.totalorder %s390, %s404
      %p406 = scmp.eq.s32.totalorder %s34, 0
      %p407 = por %p405, %p406
      %s408 = ssub.s32 %s28, %s35
      %p409 = scmp.eq.s32.totalorder %s408, 0
      %s411 = sadd.s32 %s410, 1
      %s412 = scalar_select %p409, %s410, %s411
      %p415 = pneg %p409
      %p416 = scmp.eq.s32.totalorder %s28, 3
      %p417 = por %p415, %p416
      %p418 = scmp.ne.s32.totalorder %s410, %s413
      %p419 = scmp.eq.s32.totalorder %s28, 0
      %p420 = por %p418, %p419
      %p421 = scmp.ne.s32.totalorder %s410, %s413
      %p422 = scmp.eq.s32.totalorder %s33, 3
      %p423 = por %p421, %p422
      %p424 = scmp.ne.s32.totalorder %s413, %s414
      %p425 = scmp.eq.s32.totalorder %s33, 0
      %p426 = por %p424, %p425
      %p427 = scmp.ne.s32.totalorder %s413, %s414
      %p428 = scmp.eq.s32.totalorder %s34, 3
      %p429 = por %p427, %p428
      %p431 = scmp.ne.s32.totalorder %s414, %s430
      %p432 = scmp.eq.s32.totalorder %s34, 0
      %p433 = por %p431, %p432
      %p434 = scmp.le.s32.totalorder 1, %s28
      %p435 = scmp.lt.s32.totalorder %s28, 5
      %p436 = pnand %p434, %p435
      %p437 = pneg %p436
      // Predicated region
      $region9: #{tpu_custom_call.1} parent=5 // pred_check
        _
      $region10: #{tpu_custom_call.1} parent=5 // pred_check_branch
        %439 = sbr.rel (%p436) target = $region12
      $region11: #{tpu_custom_call.1} parent=5 // pred_region
        %s440 = ssub.s32 %s28, 1
        // Predicated region
        $region13: #{tpu_custom_call.1} parent=11 // pred_check
          %p441 = pneg %p127
        $region14: #{tpu_custom_call.1} parent=11 // pred_check_branch
          %443 = sbr.rel (%p441) target = $region16
        $region15: #{tpu_custom_call.1} parent=11 // pred_region
          _
        $region16: #{tpu_custom_call.1} parent=11 // pred_fallthru
          _
        // Predicated region
        $region17: #{tpu_custom_call.1} parent=11 // pred_check
          %p444 = pneg %p148
        $region18: #{tpu_custom_call.1} parent=11 // pred_check_branch
          %446 = sbr.rel (%p444) target = $region20
        $region19: #{tpu_custom_call.1} parent=11 // pred_region
          _
        $region20: #{tpu_custom_call.1} parent=11 // pred_fallthru
          _
        // Predicated region
        $region21: #{tpu_custom_call.1} parent=11 // pred_check
          %p447 = pneg %p169
        $region22: #{tpu_custom_call.1} parent=11 // pred_check_branch
          %449 = sbr.rel (%p447) target = $region24
        $region23: #{tpu_custom_call.1} parent=11 // pred_region
          _
        $region24: #{tpu_custom_call.1} parent=11 // pred_fallthru
          _
        // Predicated region
        $region25: #{tpu_custom_call.1} parent=11 // pred_check
          %p450 = pneg %p190
        $region26: #{tpu_custom_call.1} parent=11 // pred_check_branch
          %452 = sbr.rel (%p450) target = $region28
        $region27: #{tpu_custom_call.1} parent=11 // pred_region
          _
        $region28: #{tpu_custom_call.1} parent=11 // pred_fallthru
          _
        // Predicated region
        $region29: #{tpu_custom_call.1} parent=11 // pred_check
          %p453 = pneg %p211
        $region30: #{tpu_custom_call.1} parent=11 // pred_check_branch
          %455 = sbr.rel (%p453) target = $region32
        $region31: #{tpu_custom_call.1} parent=11 // pred_region
          _
        $region32: #{tpu_custom_call.1} parent=11 // pred_fallthru
          _
        // Predicated region
        $region33: #{tpu_custom_call.1} parent=11 // pred_check
          %p456 = pneg %p232
        $region34: #{tpu_custom_call.1} parent=11 // pred_check_branch
          %458 = sbr.rel (%p456) target = $region36
        $region35: #{tpu_custom_call.1} parent=11 // pred_region
          _
        $region36: #{tpu_custom_call.1} parent=11 // pred_fallthru
          _
        // Predicated region
        $region37: #{tpu_custom_call.1} parent=11 // pred_check
          %p459 = pneg %p253
        $region38: #{tpu_custom_call.1} parent=11 // pred_check_branch
          %461 = sbr.rel (%p459) target = $region40
        $region39: #{tpu_custom_call.1} parent=11 // pred_region
          _
        $region40: #{tpu_custom_call.1} parent=11 // pred_fallthru
          _
        // Predicated region
        $region41: #{tpu_custom_call.1} parent=11 // pred_check
          %p462 = pneg %p274
        $region42: #{tpu_custom_call.1} parent=11 // pred_check_branch
          %464 = sbr.rel (%p462) target = $region44
        $region43: #{tpu_custom_call.1} parent=11 // pred_region
          _
        $region44: #{tpu_custom_call.1} parent=11 // pred_fallthru
          _
        // Predicated region
        $region45: #{tpu_custom_call.1} parent=11 // pred_check
          %p465 = pneg %p295
        $region46: #{tpu_custom_call.1} parent=11 // pred_check_branch
          %467 = sbr.rel (%p465) target = $region48
        $region47: #{tpu_custom_call.1} parent=11 // pred_region
          _
        $region48: #{tpu_custom_call.1} parent=11 // pred_fallthru
          _
        // Predicated region
        $region49: #{tpu_custom_call.1} parent=11 // pred_check
          %p468 = pneg %p316
        $region50: #{tpu_custom_call.1} parent=11 // pred_check_branch
          %470 = sbr.rel (%p468) target = $region52
        $region51: #{tpu_custom_call.1} parent=11 // pred_region
          _
        $region52: #{tpu_custom_call.1} parent=11 // pred_fallthru
          _
        // Predicated region
        $region53: #{tpu_custom_call.1} parent=11 // pred_check
          %p471 = pneg %p337
        $region54: #{tpu_custom_call.1} parent=11 // pred_check_branch
          %473 = sbr.rel (%p471) target = $region56
        $region55: #{tpu_custom_call.1} parent=11 // pred_region
          _
        $region56: #{tpu_custom_call.1} parent=11 // pred_fallthru
          _
        // Predicated region
        $region57: #{tpu_custom_call.1} parent=11 // pred_check
          %p474 = pneg %p358
        $region58: #{tpu_custom_call.1} parent=11 // pred_check_branch
          %476 = sbr.rel (%p474) target = $region60
        $region59: #{tpu_custom_call.1} parent=11 // pred_region
          _
        $region60: #{tpu_custom_call.1} parent=11 // pred_fallthru
          _
        // Predicated region
        $region61: #{tpu_custom_call.1} parent=11 // pred_check
          %p477 = pneg %p379
        $region62: #{tpu_custom_call.1} parent=11 // pred_check_branch
          %479 = sbr.rel (%p477) target = $region64
        $region63: #{tpu_custom_call.1} parent=11 // pred_region
          _
        $region64: #{tpu_custom_call.1} parent=11 // pred_fallthru
          _
      $region12: #{tpu_custom_call.1} parent=5 // pred_fallthru
        _
      %p480 = scmp.lt.s32.totalorder %s28, 4
      // Predicated region
      $region65: #{tpu_custom_call.1} parent=5 // pred_check
        %p481 = pneg %p480
      $region66: #{tpu_custom_call.1} parent=5 // pred_check_branch
        %483 = sbr.rel (%p481) target = $region68
      $region67: #{tpu_custom_call.1} parent=5 // pred_region
        // Predicated region
        $region69: #{tpu_custom_call.1} parent=67 // pred_check
          %p484 = pneg %p48
        $region70: #{tpu_custom_call.1} parent=67 // pred_check_branch
          %486 = sbr.rel (%p484) target = $region72
        $region71: #{tpu_custom_call.1} parent=67 // pred_region
          %s487 = smul.u32 32, %s28
          %p488 = scmp.lt.s32.totalorder %s487, 127
          %s489 = scalar_select %p488, %s487, 127
          %s490 = smul.addr %s489, 8
          %s491 = scalar_lea.vmem %s0, %s490
          %s492 = smul.u32 32, %s28
        $region72: #{tpu_custom_call.1} parent=67 // pred_fallthru
          _
        // Predicated region
        $region73: #{tpu_custom_call.1} parent=67 // pred_check
          %p493 = pneg %p74
        $region74: #{tpu_custom_call.1} parent=67 // pred_check_branch
          %495 = sbr.rel (%p493) target = $region76
        $region75: #{tpu_custom_call.1} parent=67 // pred_region
          %s496 = smul.u32 32, %s28
          %p497 = scmp.lt.s32.totalorder %s496, 127
          %s498 = scalar_select %p497, %s496, 127
          %s499 = smul.addr %s498, 8
          %s500 = scalar_lea.vmem %s1, %s499
          %s501 = smul.u32 32, %s28
        $region76: #{tpu_custom_call.1} parent=67 // pred_fallthru
          _
        // Predicated region
        $region77: #{tpu_custom_call.1} parent=67 // pred_check
          %p502 = pneg %p100
        $region78: #{tpu_custom_call.1} parent=67 // pred_check_branch
          %504 = sbr.rel (%p502) target = $region80
        $region79: #{tpu_custom_call.1} parent=67 // pred_region
          %s505 = smul.u32 2, %s28
          %p506 = scmp.lt.s32.totalorder %s505, 7
          %s507 = scalar_select %p506, %s505, 7
          %s508 = scalar_lea.vmem %s2, %s507
          %s509 = smul.u32 2, %s28
        $region80: #{tpu_custom_call.1} parent=67 // pred_fallthru
          _
      $region68: #{tpu_custom_call.1} parent=5 // pred_fallthru
        _
      %p510 = scmp.le.s32.totalorder 1, %s28
      %p511 = scmp.lt.s32.totalorder %s28, 5
      %p512 = pnand %p510, %p511
      %p513 = pneg %p512
      // Predicated region
      $region81: #{tpu_custom_call.1} parent=5 // pred_check
        _
      $region82: #{tpu_custom_call.1} parent=5 // pred_check_branch
        %515 = sbr.rel (%p512) target = $region84
      $region83: #{tpu_custom_call.1} parent=5 // pred_region
        %s516 = ssub.s32 %s28, 1
        %s517 = smul.u32 32, %s33
        %p518 = scmp.lt.s32.totalorder %s517, 127
        %s519 = scalar_select %p518, %s517, 127
        %s520 = smul.addr %s519, 8
        %s521 = scalar_lea.vmem %s0, %s520
        %p522 = pneg %p54
        %p523 = pneg %p51
        %s524 = smul.u32 32, %s33
        %p525 = scmp.lt.s32.totalorder %s524, 127
        %s526 = scalar_select %p525, %s524, 127
        %s527 = smul.addr %s526, 8
        %s528 = scalar_lea.vmem %s1, %s527
        %p529 = pneg %p80
        %p530 = pneg %p77
        %s531 = smul.u32 2, %s33
        %p532 = scmp.lt.s32.totalorder %s531, 7
        %s533 = scalar_select %p532, %s531, 7
        %s534 = scalar_lea.vmem %s2, %s533
        %p535 = pneg %p106
        %p536 = pneg %p103
        %p537 = pneg %p127
        %p538 = pneg %p124
        %p539 = pneg %p148
        %p540 = pneg %p145
        %p541 = pneg %p169
        %p542 = pneg %p166
        %p543 = pneg %p190
        %p544 = pneg %p187
        %p545 = pneg %p211
        %p546 = pneg %p208
        %p547 = pneg %p232
        %p548 = pneg %p229
        %p549 = pneg %p253
        %p550 = pneg %p250
        %p551 = pneg %p274
        %p552 = pneg %p271
        %p553 = pneg %p295
        %p554 = pneg %p292
        %p555 = pneg %p316
        %p556 = pneg %p313
        %p557 = pneg %p337
        %p558 = pneg %p334
        %p559 = pneg %p358
        %p560 = pneg %p355
        %p561 = pneg %p379
        %p562 = pneg %p376
        %p563 = pneg %p400
        %p564 = pneg %p397
        %p565 = pneg %p426
        %p566 = pneg %p423
        %s567 = sand.u32 %s413, 1
        %s568 = scalar_lea.sflag [#allocation6], %s567
        %s569 = sand.u32 %s413, 1
        %s570 = smul.addr %s569, 256
        %s571 = scalar_lea.vmem [#allocation5], %s570
        %s572 = smul.u32 32, %s33
        %p573 = scmp.lt.s32.totalorder %s572, 127
        %s574 = scalar_select %p573, %s572, 127
        %s575 = smul.addr %s574, 8
        %s576 = scalar_lea.vmem %s0, %s575
        %s577 = smul.u32 32, %s33
        %s578 = smul.u32 32, %s33
        %p579 = scmp.lt.s32.totalorder %s578, 127
        %s580 = scalar_select %p579, %s578, 127
        %s581 = smul.addr %s580, 8
        %s582 = scalar_lea.vmem %s1, %s581
        %s583 = smul.u32 32, %s33
        %s584 = smul.u32 2, %s33
        %p585 = scmp.lt.s32.totalorder %s584, 7
        %s586 = scalar_select %p585, %s584, 7
        %s587 = scalar_lea.vmem %s2, %s586
        %s588 = smul.u32 2, %s33
        %s589 = smul.u32 32, %s33
        %p591 = scmp.eq.s32.totalorder %s33, 0
        // Predicated region
        $region85: #{tpu_custom_call.1} parent=83 // pred_check
          %p592 = pneg %p591
        $region86: #{tpu_custom_call.1} parent=83 // pred_check_branch
          %594 = sbr.rel (%p592) target = $region88
        $region87: #{tpu_custom_call.1} parent=83 // pred_region
          %vm595 = vcmask 523264
          %596 = vst.msk [vmem:[#allocation2] sm:$0xff] %vm595, 0.0
          %597 = vst.msk [vmem:[#allocation2 + $0x8] sm:$0xff] %vm595, 0.0
          %598 = vst.msk [vmem:[#allocation2 + $0x10] sm:$0xff] %vm595, 0.0
          %599 = vst.msk [vmem:[#allocation2 + $0x18] sm:$0xff] %vm595, 0.0
          %600 = vst.msk [vmem:[#allocation2 + $0x20] sm:$0xff] %vm595, 0.0
          %601 = vst.msk [vmem:[#allocation2 + $0x28] sm:$0xff] %vm595, 0.0
          %602 = vst.msk [vmem:[#allocation2 + $0x30] sm:$0xff] %vm595, 0.0
        $region88: #{tpu_custom_call.1} parent=83 // pred_fallthru
          _
        %v603 = vld [vmem:[%s582] sm:$0xff]
        %v604 = vld [vmem:[%s582 + $0x8] sm:$0xff]
        %v605 = vld [vmem:[%s582 + $0x10] sm:$0xff]
        %v606 = vld [vmem:[%s582 + $0x18] sm:$0xff]
        %v607 = vld [vmem:[%s582 + $0x20] sm:$0xff]
        %v608 = vld [vmem:[%s582 + $0x28] sm:$0xff]
        %v609 = vld [vmem:[%s582 + $0x30] sm:$0xff]
        %v610 = vld [vmem:[%s582 + $0x38] sm:$0xff]
        %v611 = vld [vmem:[%s582 + $0x40] sm:$0xff]
        %v612 = vld [vmem:[%s582 + $0x48] sm:$0xff]
        %v613 = vld [vmem:[%s582 + $0x50] sm:$0xff]
        %v614 = vld [vmem:[%s582 + $0x58] sm:$0xff]
        %v615 = vld [vmem:[%s582 + $0x60] sm:$0xff]
        %v616 = vld [vmem:[%s582 + $0x68] sm:$0xff]
        %v617 = vld [vmem:[%s582 + $0x70] sm:$0xff]
        %v618 = vld [vmem:[%s582 + $0x78] sm:$0xff]
        %v619 = vld [vmem:[%s582 + $0x80] sm:$0xff]
        %v620 = vld [vmem:[%s582 + $0x88] sm:$0xff]
        %v621 = vld [vmem:[%s582 + $0x90] sm:$0xff]
        %v622 = vld [vmem:[%s582 + $0x98] sm:$0xff]
        %v623 = vld [vmem:[%s582 + $0xa0] sm:$0xff]
        %v624 = vld [vmem:[%s582 + $0xa8] sm:$0xff]
        %v625 = vld [vmem:[%s582 + $0xb0] sm:$0xff]
        %v626 = vld [vmem:[%s582 + $0xb8] sm:$0xff]
        %v627 = vld [vmem:[%s582 + $0xc0] sm:$0xff]
        %v628 = vld [vmem:[%s582 + $0xc8] sm:$0xff]
        %v629 = vld [vmem:[%s582 + $0xd0] sm:$0xff]
        %v630 = vld [vmem:[%s582 + $0xd8] sm:$0xff]
        %v631 = vld [vmem:[%s582 + $0xe0] sm:$0xff]
        %v632 = vld [vmem:[%s582 + $0xe8] sm:$0xff]
        %v633 = vld [vmem:[%s582 + $0xf0] sm:$0xff]
        %v634 = vld [vmem:[%s582 + $0xf8] sm:$0xff]
        %v635 = vpack.c.bf16 %v604, %v603
        %v636 = vpack.c.bf16 %v606, %v605
        %v637 = vpack.c.bf16 %v608, %v607
        %v638 = vpack.c.bf16 %v610, %v609
        %v639 = vpack.c.bf16 %v612, %v611
        %v640 = vpack.c.bf16 %v614, %v613
        %v641 = vpack.c.bf16 %v616, %v615
        %v642 = vpack.c.bf16 %v618, %v617
        %v643 = vpack.c.bf16 %v620, %v619
        %v644 = vpack.c.bf16 %v622, %v621
        %v645 = vpack.c.bf16 %v624, %v623
        %v646 = vpack.c.bf16 %v626, %v625
        %v647 = vpack.c.bf16 %v628, %v627
        %v648 = vpack.c.bf16 %v630, %v629
        %v649 = vpack.c.bf16 %v632, %v631
        %v650 = vpack.c.bf16 %v634, %v633
        %v651 = vld [vmem:[%s3] sm:$0xf]
        %v652 = vld [vmem:[%s3 + $0x4] sm:$0xf]
        %v655 = vunpack.c.l.b16 %v651
        %v656 = vunpack.c.l.b16 %v652
        %v657 = vpack.c.b16 %v656, %v655
        %vm659 = vcmask 130048
        %v661 = vsel %vm659, %v635, 0
        %v664 = vsel %vm659, %v636, 0
        %v667 = vsel %vm659, %v637, 0
        %v670 = vsel %vm659, %v638, 0
        %v673 = vsel %vm659, %v639, 0
        %v676 = vsel %vm659, %v640, 0
        %v679 = vsel %vm659, %v641, 0
        %v682 = vsel %vm659, %v642, 0
        %v685 = vsel %vm659, %v643, 0
        %v688 = vsel %vm659, %v644, 0
        %v691 = vsel %vm659, %v645, 0
        %v694 = vsel %vm659, %v646, 0
        %v697 = vsel %vm659, %v647, 0
        %v700 = vsel %vm659, %v648, 0
        %v703 = vsel %vm659, %v649, 0
        %v706 = vsel %vm659, %v650, 0
        %708 = vmatprep.subr.bf16.mxu0 0
        %709 = vmatpush1.bf16.msra.mxu0 %v657
        %710 = vmatprep.subr.bf16.mxu0 0
        %711 = vmatpush1.bf16.msra.mxu0 0
        %712 = vmatprep.subr.bf16.mxu0 0
        %713 = vmatpush1.bf16.msra.mxu0 0
        %714 = vmatprep.subr.bf16.mxu0 0
        %715 = vmatpush1.bf16.msra.mxu0 0
        %716 = vmatprep.subr.bf16.mxu0 0
        %717 = vmatpush1.bf16.msra.mxu0 0
        %718 = vmatprep.subr.bf16.mxu0 0
        %719 = vmatpush1.bf16.msra.mxu0 0
        %720 = vmatprep.subr.bf16.mxu0 0
        %721 = vmatpush1.bf16.msra.mxu0 0
        %722 = vmatprep.subr.bf16.mxu0 0
        %723 = vmatpush1.bf16.msra.mxu0 0
        %724 = vmatprep.subr.bf16.mxu0 0
        %725 = vmatpush1.bf16.msra.mxu0 0
        %726 = vmatprep.subr.bf16.mxu0 0
        %727 = vmatpush1.bf16.msra.mxu0 0
        %728 = vmatprep.subr.bf16.mxu0 0
        %729 = vmatpush1.bf16.msra.mxu0 0
        %730 = vmatprep.subr.bf16.mxu0 0
        %731 = vmatpush1.bf16.msra.mxu0 0
        %732 = vmatprep.subr.bf16.mxu0 0
        %733 = vmatpush1.bf16.msra.mxu0 0
        %734 = vmatprep.subr.bf16.mxu0 0
        %735 = vmatpush1.bf16.msra.mxu0 0
        %736 = vmatprep.subr.bf16.mxu0 0
        %737 = vmatpush1.bf16.msra.mxu0 0
        %738 = vmatprep.subr.bf16.mxu0 0
        %739 = vmatpush1.bf16.msra.mxu0 0
        %740 = vmatprep.mubr.bf16.mxu0 0
        %741 = vmatmul.mubr.bf16.gmra.mrb[0].mxu0 %v661
        %v742 = vpop.f32.mrb[0].mxu0
        %v743 = vadd.f32 0.0, %v742
        %v744 = vpop.f32.mrb[0].mxu0
        %v745 = vpop.f32.mrb[0].mxu0
        %v746 = vadd.f32 0.0, %v745
        %v747 = vpop.f32.mrb[0].mxu0
        %748 = vmatprep.mubr.bf16.mxu0 0
        %749 = vmatmul.mubr.bf16.gmra.mrb[0].mxu0 %v664
        %v750 = vpop.f32.mrb[0].mxu0
        %v751 = vadd.f32 0.0, %v750
        %v752 = vpop.f32.mrb[0].mxu0
        %v753 = vpop.f32.mrb[0].mxu0
        %v754 = vadd.f32 0.0, %v753
        %v755 = vpop.f32.mrb[0].mxu0
        %756 = vmatprep.mubr.bf16.mxu0 0
        %757 = vmatmul.mubr.bf16.gmra.mrb[0].mxu0 %v667
        %v758 = vpop.f32.mrb[0].mxu0
        %v759 = vadd.f32 0.0, %v758
        %v760 = vpop.f32.mrb[0].mxu0
        %v761 = vpop.f32.mrb[0].mxu0
        %v762 = vadd.f32 0.0, %v761
        %v763 = vpop.f32.mrb[0].mxu0
        %764 = vmatprep.mubr.bf16.mxu0 0
        %765 = vmatmul.mubr.bf16.gmra.mrb[0].mxu0 %v670
        %v766 = vpop.f32.mrb[0].mxu0
        %v767 = vadd.f32 0.0, %v766
        %v768 = vpop.f32.mrb[0].mxu0
        %v769 = vpop.f32.mrb[0].mxu0
        %v770 = vadd.f32 0.0, %v769
        %v771 = vpop.f32.mrb[0].mxu0
        %772 = vmatprep.mubr.bf16.mxu0 0
        %773 = vmatmul.mubr.bf16.gmra.mrb[0].mxu0 %v673
        %v774 = vpop.f32.mrb[0].mxu0
        %v775 = vadd.f32 0.0, %v774
        %v776 = vpop.f32.mrb[0].mxu0
        %v777 = vpop.f32.mrb[0].mxu0
        %v778 = vadd.f32 0.0, %v777
        %v779 = vpop.f32.mrb[0].mxu0
        %780 = vmatprep.mubr.bf16.mxu0 0
        %781 = vmatmul.mubr.bf16.gmra.mrb[0].mxu0 %v676
        %v782 = vpop.f32.mrb[0].mxu0
        %v783 = vadd.f32 0.0, %v782
        %v784 = vpop.f32.mrb[0].mxu0
        %v785 = vpop.f32.mrb[0].mxu0
        %v786 = vadd.f32 0.0, %v785
        %v787 = vpop.f32.mrb[0].mxu0
        %788 = vmatprep.mubr.bf16.mxu0 0
        %789 = vmatmul.mubr.bf16.gmra.mrb[0].mxu0 %v679
        %v790 = vpop.f32.mrb[0].mxu0
        %v791 = vadd.f32 0.0, %v790
        %v792 = vpop.f32.mrb[0].mxu0
        %v793 = vpop.f32.mrb[0].mxu0
        %v794 = vadd.f32 0.0, %v793
        %v795 = vpop.f32.mrb[0].mxu0
        %796 = vmatprep.mubr.bf16.mxu0 0
        %797 = vmatmul.mubr.bf16.gmra.mrb[0].mxu0 %v682
        %v798 = vpop.f32.mrb[0].mxu0
        %v799 = vadd.f32 0.0, %v798
        %v800 = vpop.f32.mrb[0].mxu0
        %v801 = vpop.f32.mrb[0].mxu0
        %v802 = vadd.f32 0.0, %v801
        %v803 = vpop.f32.mrb[0].mxu0
        %804 = vmatprep.mubr.bf16.mxu0 0
        %805 = vmatmul.mubr.bf16.gmra.mrb[0].mxu0 %v685
        %v806 = vpop.f32.mrb[0].mxu0
        %v807 = vadd.f32 0.0, %v806
        %v808 = vpop.f32.mrb[0].mxu0
        %v809 = vpop.f32.mrb[0].mxu0
        %v810 = vadd.f32 0.0, %v809
        %v811 = vpop.f32.mrb[0].mxu0
        %812 = vmatprep.mubr.bf16.mxu0 0
        %813 = vmatmul.mubr.bf16.gmra.mrb[0].mxu0 %v688
        %v814 = vpop.f32.mrb[0].mxu0
        %v815 = vadd.f32 0.0, %v814
        %v816 = vpop.f32.mrb[0].mxu0
        %v817 = vpop.f32.mrb[0].mxu0
        %v818 = vadd.f32 0.0, %v817
        %v819 = vpop.f32.mrb[0].mxu0
        %820 = vmatprep.mubr.bf16.mxu0 0
        %821 = vmatmul.mubr.bf16.gmra.mrb[0].mxu0 %v691
        %v822 = vpop.f32.mrb[0].mxu0
        %v823 = vadd.f32 0.0, %v822
        %v824 = vpop.f32.mrb[0].mxu0
        %v825 = vpop.f32.mrb[0].mxu0
        %v826 = vadd.f32 0.0, %v825
        %v827 = vpop.f32.mrb[0].mxu0
        %828 = vmatprep.mubr.bf16.mxu0 0
        %829 = vmatmul.mubr.bf16.gmra.mrb[0].mxu0 %v694
        %v830 = vpop.f32.mrb[0].mxu0
        %v831 = vadd.f32 0.0, %v830
        %v832 = vpop.f32.mrb[0].mxu0
        %v833 = vpop.f32.mrb[0].mxu0
        %v834 = vadd.f32 0.0, %v833
        %v835 = vpop.f32.mrb[0].mxu0
        %836 = vmatprep.mubr.bf16.mxu0 0
        %837 = vmatmul.mubr.bf16.gmra.mrb[0].mxu0 %v697
        %v838 = vpop.f32.mrb[0].mxu0
        %v839 = vadd.f32 0.0, %v838
        %v840 = vpop.f32.mrb[0].mxu0
        %v841 = vpop.f32.mrb[0].mxu0
        %v842 = vadd.f32 0.0, %v841
        %v843 = vpop.f32.mrb[0].mxu0
        %844 = vmatprep.mubr.bf16.mxu0 0
        %845 = vmatmul.mubr.bf16.gmra.mrb[0].mxu0 %v700
        %v846 = vpop.f32.mrb[0].mxu0
        %v847 = vadd.f32 0.0, %v846
        %v848 = vpop.f32.mrb[0].mxu0
        %v849 = vpop.f32.mrb[0].mxu0
        %v850 = vadd.f32 0.0, %v849
        %v851 = vpop.f32.mrb[0].mxu0
        %852 = vmatprep.mubr.bf16.mxu0 0
        %853 = vmatmul.mubr.bf16.gmra.mrb[0].mxu0 %v703
        %v854 = vpop.f32.mrb[0].mxu0
        %v855 = vadd.f32 0.0, %v854
        %v856 = vpop.f32.mrb[0].mxu0
        %v857 = vpop.f32.mrb[0].mxu0
        %v858 = vadd.f32 0.0, %v857
        %v859 = vpop.f32.mrb[0].mxu0
        %860 = vmatprep.mubr.bf16.mxu0 0
        %861 = vmatmul.mubr.bf16.gmra.mrb[0].mxu0 %v706
        %v862 = vpop.f32.mrb[0].mxu0
        %v863 = vadd.f32 0.0, %v862
        %v864 = vpop.f32.mrb[0].mxu0
        %v865 = vpop.f32.mrb[0].mxu0
        %v866 = vadd.f32 0.0, %v865
        %v867 = vpop.f32.mrb[0].mxu0
        %868 = vdwg.mxu0
        %v869 = vld [vmem:[%s576] sm:$0xff]
        %v870 = vld [vmem:[%s576 + $0x8] sm:$0xff]
        %v871 = vld [vmem:[%s576 + $0x10] sm:$0xff]
        %v872 = vld [vmem:[%s576 + $0x18] sm:$0xff]
        %v873 = vld [vmem:[%s576 + $0x20] sm:$0xff]
        %v874 = vld [vmem:[%s576 + $0x28] sm:$0xff]
        %v875 = vld [vmem:[%s576 + $0x30] sm:$0xff]
        %v876 = vld [vmem:[%s576 + $0x38] sm:$0xff]
        %v877 = vld [vmem:[%s576 + $0x40] sm:$0xff]
        %v878 = vld [vmem:[%s576 + $0x48] sm:$0xff]
        %v879 = vld [vmem:[%s576 + $0x50] sm:$0xff]
        %v880 = vld [vmem:[%s576 + $0x58] sm:$0xff]
        %v881 = vld [vmem:[%s576 + $0x60] sm:$0xff]
        %v882 = vld [vmem:[%s576 + $0x68] sm:$0xff]
        %v883 = vld [vmem:[%s576 + $0x70] sm:$0xff]
        %v884 = vld [vmem:[%s576 + $0x78] sm:$0xff]
        %v885 = vld [vmem:[%s576 + $0x80] sm:$0xff]
        %v886 = vld [vmem:[%s576 + $0x88] sm:$0xff]
        %v887 = vld [vmem:[%s576 + $0x90] sm:$0xff]
        %v888 = vld [vmem:[%s576 + $0x98] sm:$0xff]
        %v889 = vld [vmem:[%s576 + $0xa0] sm:$0xff]
        %v890 = vld [vmem:[%s576 + $0xa8] sm:$0xff]
        %v891 = vld [vmem:[%s576 + $0xb0] sm:$0xff]
        %v892 = vld [vmem:[%s576 + $0xb8] sm:$0xff]
        %v893 = vld [vmem:[%s576 + $0xc0] sm:$0xff]
        %v894 = vld [vmem:[%s576 + $0xc8] sm:$0xff]
        %v895 = vld [vmem:[%s576 + $0xd0] sm:$0xff]
        %v896 = vld [vmem:[%s576 + $0xd8] sm:$0xff]
        %v897 = vld [vmem:[%s576 + $0xe0] sm:$0xff]
        %v898 = vld [vmem:[%s576 + $0xe8] sm:$0xff]
        %v899 = vld [vmem:[%s576 + $0xf0] sm:$0xff]
        %v900 = vld [vmem:[%s576 + $0xf8] sm:$0xff]
        %v901 = vmul.f32 %v869, %v743
        %v902 = vmul.f32 %v870, %v746
        %v903 = vmul.f32 %v871, %v751
        %v904 = vmul.f32 %v872, %v754
        %v905 = vmul.f32 %v873, %v759
        %v906 = vmul.f32 %v874, %v762
        %v907 = vmul.f32 %v875, %v767
        %v908 = vmul.f32 %v876, %v770
        %v909 = vmul.f32 %v877, %v775
        %v910 = vmul.f32 %v878, %v778
        %v911 = vmul.f32 %v879, %v783
        %v912 = vmul.f32 %v880, %v786
        %v913 = vmul.f32 %v881, %v791
        %v914 = vmul.f32 %v882, %v794
        %v915 = vmul.f32 %v883, %v799
        %v916 = vmul.f32 %v884, %v802
        %v917 = vmul.f32 %v885, %v807
        %v918 = vmul.f32 %v886, %v810
        %v919 = vmul.f32 %v887, %v815
        %v920 = vmul.f32 %v888, %v818
        %v921 = vmul.f32 %v889, %v823
        %v922 = vmul.f32 %v890, %v826
        %v923 = vmul.f32 %v891, %v831
        %v924 = vmul.f32 %v892, %v834
        %v925 = vmul.f32 %v893, %v839
        %v926 = vmul.f32 %v894, %v842
        %v927 = vmul.f32 %v895, %v847
        %v928 = vmul.f32 %v896, %v850
        %v929 = vmul.f32 %v897, %v855
        %v930 = vmul.f32 %v898, %v858
        %v931 = vmul.f32 %v899, %v863
        %v932 = vmul.f32 %v900, %v866
        %v933 = vpack.c.bf16 %v902, %v901
        %v934 = vpack.c.bf16 %v904, %v903
        %v935 = vpack.c.bf16 %v906, %v905
        %v936 = vpack.c.bf16 %v908, %v907
        %v937 = vpack.c.bf16 %v910, %v909
        %v938 = vpack.c.bf16 %v912, %v911
        %v939 = vpack.c.bf16 %v914, %v913
        %v940 = vpack.c.bf16 %v916, %v915
        %v941 = vpack.c.bf16 %v918, %v917
        %v942 = vpack.c.bf16 %v920, %v919
        %v943 = vpack.c.bf16 %v922, %v921
        %v944 = vpack.c.bf16 %v924, %v923
        %v945 = vpack.c.bf16 %v926, %v925
        %v946 = vpack.c.bf16 %v928, %v927
        %v947 = vpack.c.bf16 %v930, %v929
        %v948 = vpack.c.bf16 %v932, %v931
        %v949 = vld [vmem:[%s587] sm:$0x3]
        %v950 = vlaneseq
        %v951 = vshrl.u32 %v950, 7
        %v952 = vadd.s32 %v951, 8
        %v953 = vadd.s32 %v951, 16
        %v954 = vadd.s32 %v951, 24
        %v955 = vadd.s32 %v951, 32
        %v956 = vadd.s32 %v951, 40
        %v957 = vadd.s32 %v951, 48
        %v958 = vlaneseq
        %v959 = vshrl.u32 %v958, 7
        %v960 = vsub.s32 0, %v959
        %v961 = vrot.slane %v949, %v960
        %v962 = vlaneseq
        %v963 = vshrl.u32 %v962, 7
        %v964 = vsub.s32 1, %v963
        %v965 = vrot.slane %v949, %v964
        %vm966 = vcmp.eq.s32.totalorder %v951, %v961
        %vm967 = vcmp.eq.s32.totalorder %v951, %v965
        %vm968 = vcmp.eq.s32.totalorder %v952, %v961
        %vm969 = vcmp.eq.s32.totalorder %v952, %v965
        %vm970 = vcmp.eq.s32.totalorder %v953, %v961
        %vm971 = vcmp.eq.s32.totalorder %v953, %v965
        %vm972 = vcmp.eq.s32.totalorder %v954, %v961
        %vm973 = vcmp.eq.s32.totalorder %v954, %v965
        %vm974 = vcmp.eq.s32.totalorder %v955, %v961
        %vm975 = vcmp.eq.s32.totalorder %v955, %v965
        %vm976 = vcmp.eq.s32.totalorder %v956, %v961
        %vm977 = vcmp.eq.s32.totalorder %v956, %v965
        %vm978 = vcmp.eq.s32.totalorder %v957, %v961
        %vm979 = vcmp.eq.s32.totalorder %v957, %v965
        %v980 = vsel %vm966, 1.0, 0.0
        %v981 = vsel %vm967, 1.0, 0.0
        %v982 = vsel %vm968, 1.0, 0.0
        %v983 = vsel %vm969, 1.0, 0.0
        %v984 = vsel %vm970, 1.0, 0.0
        %v985 = vsel %vm971, 1.0, 0.0
        %v986 = vsel %vm972, 1.0, 0.0
        %v987 = vsel %vm973, 1.0, 0.0
        %v988 = vsel %vm974, 1.0, 0.0
        %v989 = vsel %vm975, 1.0, 0.0
        %v990 = vsel %vm976, 1.0, 0.0
        %v991 = vsel %vm977, 1.0, 0.0
        %v992 = vsel %vm978, 1.0, 0.0
        %v993 = vsel %vm979, 1.0, 0.0
        %v994 = vpack.c.bf16 %v982, %v980
        %v995 = vpack.c.bf16 %v983, %v981
        %v996 = vpack.c.bf16 %v986, %v984
        %v997 = vpack.c.bf16 %v987, %v985
        %v998 = vpack.c.bf16 %v990, %v988
        %v999 = vpack.c.bf16 %v991, %v989
        %v1000 = vpack.c.bf16 %v992, %v992
        %v1001 = vpack.c.bf16 %v993, %v993
        %v1002 = vld [vmem:[#allocation2] sm:$0xff]
        %v1003 = vld [vmem:[#allocation2 + $0x8] sm:$0xff]
        %v1004 = vld [vmem:[#allocation2 + $0x10] sm:$0xff]
        %v1005 = vld [vmem:[#allocation2 + $0x18] sm:$0xff]
        %v1006 = vld [vmem:[#allocation2 + $0x20] sm:$0xff]
        %v1007 = vld [vmem:[#allocation2 + $0x28] sm:$0xff]
        %v1008 = vld [vmem:[#allocation2 + $0x30] sm:$0xff]
        %1009 = vmatprep.subr.bf16.mxu0 0
        %1010 = vmatpush1.bf16.msra.mxu0 %v933
        %1011 = vmatprep.subr.bf16.mxu0 0
        %1012 = vmatpush1.bf16.msra.mxu0 %v934
        %1013 = vmatprep.subr.bf16.mxu0 0
        %1014 = vmatpush1.bf16.msra.mxu0 %v935
        %1015 = vmatprep.subr.bf16.mxu0 0
        %1016 = vmatpush1.bf16.msra.mxu0 %v936
        %1017 = vmatprep.subr.bf16.mxu0 0
        %1018 = vmatpush1.bf16.msra.mxu0 %v937
        %1019 = vmatprep.subr.bf16.mxu0 0
        %1020 = vmatpush1.bf16.msra.mxu0 %v938
        %1021 = vmatprep.subr.bf16.mxu0 0
        %1022 = vmatpush1.bf16.msra.mxu0 %v939
        %1023 = vmatprep.subr.bf16.mxu0 0
        %1024 = vmatpush1.bf16.msra.mxu0 %v940
        %1025 = vmatprep.subr.bf16.mxu0 0
        %1026 = vmatpush1.bf16.msra.mxu0 %v941
        %1027 = vmatprep.subr.bf16.mxu0 0
        %1028 = vmatpush1.bf16.msra.mxu0 %v942
        %1029 = vmatprep.subr.bf16.mxu0 0
        %1030 = vmatpush1.bf16.msra.mxu0 %v943
        %1031 = vmatprep.subr.bf16.mxu0 0
        %1032 = vmatpush1.bf16.msra.mxu0 %v944
        %1033 = vmatprep.subr.bf16.mxu0 0
        %1034 = vmatpush1.bf16.msra.mxu0 %v945
        %1035 = vmatprep.subr.bf16.mxu0 0
        %1036 = vmatpush1.bf16.msra.mxu0 %v946
        %1037 = vmatprep.subr.bf16.mxu0 0
        %1038 = vmatpush1.bf16.msra.mxu0 %v947
        %1039 = vmatprep.subr.bf16.mxu0 0
        %1040 = vmatpush1.bf16.msra.mxu0 %v948
        %1041 = vmatprep.mubr.bf16.mxu0 %v995
        %1042 = vmatmul.mubr.bf16.gmra.mrb[0].mxu0 %v994
        %v1043 = vpop.f32.mrb[0].mxu0
        %v1044 = vadd.f32 0.0, %v1043
        %v1045 = vpop.f32.mrb[0].mxu0
        %v1046 = vpop.f32.mrb[0].mxu0
        %v1047 = vadd.f32 0.0, %v1046
        %v1048 = vpop.f32.mrb[0].mxu0
        %1049 = vmatprep.mubr.bf16.mxu0 %v997
        %1050 = vmatmul.mubr.bf16.gmra.mrb[0].mxu0 %v996
        %v1051 = vpop.f32.mrb[0].mxu0
        %v1052 = vadd.f32 0.0, %v1051
        %v1053 = vpop.f32.mrb[0].mxu0
        %v1054 = vpop.f32.mrb[0].mxu0
        %v1055 = vadd.f32 0.0, %v1054
        %v1056 = vpop.f32.mrb[0].mxu0
        %1057 = vmatprep.mubr.bf16.mxu0 %v999
        %1058 = vmatmul.mubr.bf16.gmra.mrb[0].mxu0 %v998
        %v1059 = vpop.f32.mrb[0].mxu0
        %v1060 = vadd.f32 0.0, %v1059
        %v1061 = vpop.f32.mrb[0].mxu0
        %v1062 = vpop.f32.mrb[0].mxu0
        %v1063 = vadd.f32 0.0, %v1062
        %v1064 = vpop.f32.mrb[0].mxu0
        %1065 = vmatprep.mubr.bf16.mxu0 %v1001
        %1066 = vmatmul.mubr.bf16.gmra.mrb[0].mxu0 %v1000
        %v1067 = vpop.f32.mrb[0].mxu0
        %v1068 = vadd.f32 0.0, %v1067
        %v1069 = vpop.f32.mrb[0].mxu0
        %v1070 = vpop.f32.mrb[0].mxu0
        %v1071 = vpop.f32.mrb[0].mxu0
        %1072 = vdwg.mxu0
        %v1073 = vadd.f32 %v1002, %v1044
        %v1074 = vadd.f32 %v1003, %v1047
        %v1075 = vadd.f32 %v1004, %v1052
        %v1076 = vadd.f32 %v1005, %v1055
        %v1077 = vadd.f32 %v1006, %v1060
        %v1078 = vadd.f32 %v1007, %v1063
        %v1079 = vadd.f32 %v1008, %v1068
        %vm1080 = vcmask 523264
        %1081 = vst.msk [vmem:[#allocation2] sm:$0xff] %vm1080, %v1073
        %1082 = vst.msk [vmem:[#allocation2 + $0x8] sm:$0xff] %vm1080, %v1074
        %1083 = vst.msk [vmem:[#allocation2 + $0x10] sm:$0xff] %vm1080, %v1075
        %1084 = vst.msk [vmem:[#allocation2 + $0x18] sm:$0xff] %vm1080, %v1076
        %1085 = vst.msk [vmem:[#allocation2 + $0x20] sm:$0xff] %vm1080, %v1077
        %1086 = vst.msk [vmem:[#allocation2 + $0x28] sm:$0xff] %vm1080, %v1078
        %1087 = vst.msk [vmem:[#allocation2 + $0x30] sm:$0xff] %vm1080, %v1079
        %v1088 = vld [vmem:[%s10] sm:$0xf]
        %v1089 = vld [vmem:[%s10 + $0x4] sm:$0xf]
        %v1090 = vld [vmem:[%s10 + $0x8] sm:$0xf]
        %v1091 = vld [vmem:[%s10 + $0xc] sm:$0xf]
        %v1092 = vld [vmem:[%s10 + $0x10] sm:$0xf]
        %v1093 = vld [vmem:[%s10 + $0x14] sm:$0xf]
        %v1094 = vld [vmem:[%s10 + $0x18] sm:$0xf]
        %v1095 = vld [vmem:[%s10 + $0x1c] sm:$0xf]
        %v1104 = vunpack.c.l.b16 %v1088
        %v1105 = vunpack.c.l.b16 %v1089
        %v1106 = vunpack.c.l.b16 %v1090
        %v1107 = vunpack.c.l.b16 %v1091
        %v1108 = vunpack.c.l.b16 %v1092
        %v1109 = vunpack.c.l.b16 %v1093
        %v1110 = vunpack.c.l.b16 %v1094
        %v1111 = vunpack.c.l.b16 %v1095
        %v1112 = vpack.c.b16 %v1105, %v1104
        %v1113 = vpack.c.b16 %v1107, %v1106
        %v1114 = vpack.c.b16 %v1109, %v1108
        %v1115 = vpack.c.b16 %v1111, %v1110
        %v1121 = vsel %vm1080, %v933, 0
        %v1124 = vsel %vm1080, %v934, 0
        %v1127 = vsel %vm1080, %v935, 0
        %v1130 = vsel %vm1080, %v936, 0
        %v1133 = vsel %vm1080, %v937, 0
        %v1136 = vsel %vm1080, %v938, 0
        %v1139 = vsel %vm1080, %v939, 0
        %v1142 = vsel %vm1080, %v940, 0
        %v1145 = vsel %vm1080, %v941, 0
        %v1148 = vsel %vm1080, %v942, 0
        %v1151 = vsel %vm1080, %v943, 0
        %v1154 = vsel %vm1080, %v944, 0
        %v1157 = vsel %vm1080, %v945, 0
        %v1160 = vsel %vm1080, %v946, 0
        %v1163 = vsel %vm1080, %v947, 0
        %v1166 = vsel %vm1080, %v948, 0
        %1168 = vmatprep.subr.bf16.mxu0 0
        %1169 = vmatpush1.bf16.msra.mxu0 %v1112
        %1170 = vmatprep.subr.bf16.mxu0 0
        %1171 = vmatpush1.bf16.msra.mxu0 %v1113
        %1172 = vmatprep.subr.bf16.mxu0 0
        %1173 = vmatpush1.bf16.msra.mxu0 %v1114
        %1174 = vmatprep.subr.bf16.mxu0 0
        %1175 = vmatpush1.bf16.msra.mxu0 %v1115
        %1176 = vmatprep.subr.bf16.mxu0 0
        %1177 = vmatpush1.bf16.msra.mxu0 0
        %1178 = vmatprep.subr.bf16.mxu0 0
        %1179 = vmatpush1.bf16.msra.mxu0 0
        %1180 = vmatprep.subr.bf16.mxu0 0
        %1181 = vmatpush1.bf16.msra.mxu0 0
        %1182 = vmatprep.subr.bf16.mxu0 0
        %1183 = vmatpush1.bf16.msra.mxu0 0
        %1184 = vmatprep.subr.bf16.mxu0 0
        %1185 = vmatpush1.bf16.msra.mxu0 0
        %1186 = vmatprep.subr.bf16.mxu0 0
        %1187 = vmatpush1.bf16.msra.mxu0 0
        %1188 = vmatprep.subr.bf16.mxu0 0
        %1189 = vmatpush1.bf16.msra.mxu0 0
        %1190 = vmatprep.subr.bf16.mxu0 0
        %1191 = vmatpush1.bf16.msra.mxu0 0
        %1192 = vmatprep.subr.bf16.mxu0 0
        %1193 = vmatpush1.bf16.msra.mxu0 0
        %1194 = vmatprep.subr.bf16.mxu0 0
        %1195 = vmatpush1.bf16.msra.mxu0 0
        %1196 = vmatprep.subr.bf16.mxu0 0
        %1197 = vmatpush1.bf16.msra.mxu0 0
        %1198 = vmatprep.subr.bf16.mxu0 0
        %1199 = vmatpush1.bf16.msra.mxu0 0
        %1200 = vmatprep.mubr.bf16.mxu0 0
        %1201 = vmatmul.mubr.bf16.gmra.mrb[0].mxu0 %v1121
        %v1202 = vpop.f32.mrb[0].mxu0
        %v1203 = vadd.f32 0.0, %v1202
        %v1204 = vpop.f32.mrb[0].mxu0
        %v1205 = vpop.f32.mrb[0].mxu0
        %v1206 = vadd.f32 0.0, %v1205
        %v1207 = vpop.f32.mrb[0].mxu0
        %1208 = vmatprep.mubr.bf16.mxu0 0
        %1209 = vmatmul.mubr.bf16.gmra.mrb[0].mxu0 %v1124
        %v1210 = vpop.f32.mrb[0].mxu0
        %v1211 = vadd.f32 0.0, %v1210
        %v1212 = vpop.f32.mrb[0].mxu0
        %v1213 = vpop.f32.mrb[0].mxu0
        %v1214 = vadd.f32 0.0, %v1213
        %v1215 = vpop.f32.mrb[0].mxu0
        %1216 = vmatprep.mubr.bf16.mxu0 0
        %1217 = vmatmul.mubr.bf16.gmra.mrb[0].mxu0 %v1127
        %v1218 = vpop.f32.mrb[0].mxu0
        %v1219 = vadd.f32 0.0, %v1218
        %v1220 = vpop.f32.mrb[0].mxu0
        %v1221 = vpop.f32.mrb[0].mxu0
        %v1222 = vadd.f32 0.0, %v1221
        %v1223 = vpop.f32.mrb[0].mxu0
        %1224 = vmatprep.mubr.bf16.mxu0 0
        %1225 = vmatmul.mubr.bf16.gmra.mrb[0].mxu0 %v1130
        %v1226 = vpop.f32.mrb[0].mxu0
        %v1227 = vadd.f32 0.0, %v1226
        %v1228 = vpop.f32.mrb[0].mxu0
        %v1229 = vpop.f32.mrb[0].mxu0
        %v1230 = vadd.f32 0.0, %v1229
        %v1231 = vpop.f32.mrb[0].mxu0
        %1232 = vmatprep.mubr.bf16.mxu0 0
        %1233 = vmatmul.mubr.bf16.gmra.mrb[0].mxu0 %v1133
        %v1234 = vpop.f32.mrb[0].mxu0
        %v1235 = vadd.f32 0.0, %v1234
        %v1236 = vpop.f32.mrb[0].mxu0
        %v1237 = vpop.f32.mrb[0].mxu0
        %v1238 = vadd.f32 0.0, %v1237
        %v1239 = vpop.f32.mrb[0].mxu0
        %1240 = vmatprep.mubr.bf16.mxu0 0
        %1241 = vmatmul.mubr.bf16.gmra.mrb[0].mxu0 %v1136
        %v1242 = vpop.f32.mrb[0].mxu0
        %v1243 = vadd.f32 0.0, %v1242
        %v1244 = vpop.f32.mrb[0].mxu0
        %v1245 = vpop.f32.mrb[0].mxu0
        %v1246 = vadd.f32 0.0, %v1245
        %v1247 = vpop.f32.mrb[0].mxu0
        %1248 = vmatprep.mubr.bf16.mxu0 0
        %1249 = vmatmul.mubr.bf16.gmra.mrb[0].mxu0 %v1139
        %v1250 = vpop.f32.mrb[0].mxu0
        %v1251 = vadd.f32 0.0, %v1250
        %v1252 = vpop.f32.mrb[0].mxu0
        %v1253 = vpop.f32.mrb[0].mxu0
        %v1254 = vadd.f32 0.0, %v1253
        %v1255 = vpop.f32.mrb[0].mxu0
        %1256 = vmatprep.mubr.bf16.mxu0 0
        %1257 = vmatmul.mubr.bf16.gmra.mrb[0].mxu0 %v1142
        %v1258 = vpop.f32.mrb[0].mxu0
        %v1259 = vadd.f32 0.0, %v1258
        %v1260 = vpop.f32.mrb[0].mxu0
        %v1261 = vpop.f32.mrb[0].mxu0
        %v1262 = vadd.f32 0.0, %v1261
        %v1263 = vpop.f32.mrb[0].mxu0
        %1264 = vmatprep.mubr.bf16.mxu0 0
        %1265 = vmatmul.mubr.bf16.gmra.mrb[0].mxu0 %v1145
        %v1266 = vpop.f32.mrb[0].mxu0
        %v1267 = vadd.f32 0.0, %v1266
        %v1268 = vpop.f32.mrb[0].mxu0
        %v1269 = vpop.f32.mrb[0].mxu0
        %v1270 = vadd.f32 0.0, %v1269
        %v1271 = vpop.f32.mrb[0].mxu0
        %1272 = vmatprep.mubr.bf16.mxu0 0
        %1273 = vmatmul.mubr.bf16.gmra.mrb[0].mxu0 %v1148
        %v1274 = vpop.f32.mrb[0].mxu0
        %v1275 = vadd.f32 0.0, %v1274
        %v1276 = vpop.f32.mrb[0].mxu0
        %v1277 = vpop.f32.mrb[0].mxu0
        %v1278 = vadd.f32 0.0, %v1277
        %v1279 = vpop.f32.mrb[0].mxu0
        %1280 = vmatprep.mubr.bf16.mxu0 0
        %1281 = vmatmul.mubr.bf16.gmra.mrb[0].mxu0 %v1151
        %v1282 = vpop.f32.mrb[0].mxu0
        %v1283 = vadd.f32 0.0, %v1282
        %v1284 = vpop.f32.mrb[0].mxu0
        %v1285 = vpop.f32.mrb[0].mxu0
        %v1286 = vadd.f32 0.0, %v1285
        %v1287 = vpop.f32.mrb[0].mxu0
        %1288 = vmatprep.mubr.bf16.mxu0 0
        %1289 = vmatmul.mubr.bf16.gmra.mrb[0].mxu0 %v1154
        %v1290 = vpop.f32.mrb[0].mxu0
        %v1291 = vadd.f32 0.0, %v1290
        %v1292 = vpop.f32.mrb[0].mxu0
        %v1293 = vpop.f32.mrb[0].mxu0
        %v1294 = vadd.f32 0.0, %v1293
        %v1295 = vpop.f32.mrb[0].mxu0
        %1296 = vmatprep.mubr.bf16.mxu0 0
        %1297 = vmatmul.mubr.bf16.gmra.mrb[0].mxu0 %v1157
        %v1298 = vpop.f32.mrb[0].mxu0
        %v1299 = vadd.f32 0.0, %v1298
        %v1300 = vpop.f32.mrb[0].mxu0
        %v1301 = vpop.f32.mrb[0].mxu0
        %v1302 = vadd.f32 0.0, %v1301
        %v1303 = vpop.f32.mrb[0].mxu0
        %1304 = vmatprep.mubr.bf16.mxu0 0
        %1305 = vmatmul.mubr.bf16.gmra.mrb[0].mxu0 %v1160
        %v1306 = vpop.f32.mrb[0].mxu0
        %v1307 = vadd.f32 0.0, %v1306
        %v1308 = vpop.f32.mrb[0].mxu0
        %v1309 = vpop.f32.mrb[0].mxu0
        %v1310 = vadd.f32 0.0, %v1309
        %v1311 = vpop.f32.mrb[0].mxu0
        %1312 = vmatprep.mubr.bf16.mxu0 0
        %1313 = vmatmul.mubr.bf16.gmra.mrb[0].mxu0 %v1163
        %v1314 = vpop.f32.mrb[0].mxu0
        %v1315 = vadd.f32 0.0, %v1314
        %v1316 = vpop.f32.mrb[0].mxu0
        %v1317 = vpop.f32.mrb[0].mxu0
        %v1318 = vadd.f32 0.0, %v1317
        %v1319 = vpop.f32.mrb[0].mxu0
        %1320 = vmatprep.mubr.bf16.mxu0 0
        %1321 = vmatmul.mubr.bf16.gmra.mrb[0].mxu0 %v1166
        %v1322 = vpop.f32.mrb[0].mxu0
        %v1323 = vadd.f32 0.0, %v1322
        %v1324 = vpop.f32.mrb[0].mxu0
        %v1325 = vpop.f32.mrb[0].mxu0
        %v1326 = vadd.f32 0.0, %v1325
        %v1327 = vpop.f32.mrb[0].mxu0
        %1328 = vdwg.mxu0
        %v1329 = vsub.f32 0.0, %v1203
        %v1330 = vsub.f32 0.0, %v1206
        %v1331 = vsub.f32 0.0, %v1211
        %v1332 = vsub.f32 0.0, %v1214
        %v1333 = vsub.f32 0.0, %v1219
        %v1334 = vsub.f32 0.0, %v1222
        %v1335 = vsub.f32 0.0, %v1227
        %v1336 = vsub.f32 0.0, %v1230
        %v1337 = vsub.f32 0.0, %v1235
        %v1338 = vsub.f32 0.0, %v1238
        %v1339 = vsub.f32 0.0, %v1243
        %v1340 = vsub.f32 0.0, %v1246
        %v1341 = vsub.f32 0.0, %v1251
        %v1342 = vsub.f32 0.0, %v1254
        %v1343 = vsub.f32 0.0, %v1259
        %v1344 = vsub.f32 0.0, %v1262
        %v1345 = vsub.f32 0.0, %v1267
        %v1346 = vsub.f32 0.0, %v1270
        %v1347 = vsub.f32 0.0, %v1275
        %v1348 = vsub.f32 0.0, %v1278
        %v1349 = vsub.f32 0.0, %v1283
        %v1350 = vsub.f32 0.0, %v1286
        %v1351 = vsub.f32 0.0, %v1291
        %v1352 = vsub.f32 0.0, %v1294
        %v1353 = vsub.f32 0.0, %v1299
        %v1354 = vsub.f32 0.0, %v1302
        %v1355 = vsub.f32 0.0, %v1307
        %v1356 = vsub.f32 0.0, %v1310
        %v1357 = vsub.f32 0.0, %v1315
        %v1358 = vsub.f32 0.0, %v1318
        %v1359 = vsub.f32 0.0, %v1323
        %v1360 = vsub.f32 0.0, %v1326
        %v1361 = vmul.f32 %v1329, 1.442695
        %v1362 = vpow.pop %v1361
        %v1363 = vmul.f32 %v1330, 1.442695
        %v1364 = vpow.pop %v1363
        %v1365 = vmul.f32 %v1331, 1.442695
        %v1366 = vpow.pop %v1365
        %v1367 = vmul.f32 %v1332, 1.442695
        %v1368 = vpow.pop %v1367
        %v1369 = vmul.f32 %v1333, 1.442695
        %v1370 = vpow.pop %v1369
        %v1371 = vmul.f32 %v1334, 1.442695
        %v1372 = vpow.pop %v1371
        %v1373 = vmul.f32 %v1335, 1.442695
        %v1374 = vpow.pop %v1373
        %v1375 = vmul.f32 %v1336, 1.442695
        %v1376 = vpow.pop %v1375
        %v1377 = vmul.f32 %v1337, 1.442695
        %v1378 = vpow.pop %v1377
        %v1379 = vmul.f32 %v1338, 1.442695
        %v1380 = vpow.pop %v1379
        %v1381 = vmul.f32 %v1339, 1.442695
        %v1382 = vpow.pop %v1381
        %v1383 = vmul.f32 %v1340, 1.442695
        %v1384 = vpow.pop %v1383
        %v1385 = vmul.f32 %v1341, 1.442695
        %v1386 = vpow.pop %v1385
        %v1387 = vmul.f32 %v1342, 1.442695
        %v1388 = vpow.pop %v1387
        %v1389 = vmul.f32 %v1343, 1.442695
        %v1390 = vpow.pop %v1389
        %v1391 = vmul.f32 %v1344, 1.442695
        %v1392 = vpow.pop %v1391
        %v1393 = vmul.f32 %v1345, 1.442695
        %v1394 = vpow.pop %v1393
        %v1395 = vmul.f32 %v1346, 1.442695
        %v1396 = vpow.pop %v1395
        %v1397 = vmul.f32 %v1347, 1.442695
        %v1398 = vpow.pop %v1397
        %v1399 = vmul.f32 %v1348, 1.442695
        %v1400 = vpow.pop %v1399
        %v1401 = vmul.f32 %v1349, 1.442695
        %v1402 = vpow.pop %v1401
        %v1403 = vmul.f32 %v1350, 1.442695
        %v1404 = vpow.pop %v1403
        %v1405 = vmul.f32 %v1351, 1.442695
        %v1406 = vpow.pop %v1405
        %v1407 = vmul.f32 %v1352, 1.442695
        %v1408 = vpow.pop %v1407
        %v1409 = vmul.f32 %v1353, 1.442695
        %v1410 = vpow.pop %v1409
        %v1411 = vmul.f32 %v1354, 1.442695
        %v1412 = vpow.pop %v1411
        %v1413 = vmul.f32 %v1355, 1.442695
        %v1414 = vpow.pop %v1413
        %v1415 = vmul.f32 %v1356, 1.442695
        %v1416 = vpow.pop %v1415
        %v1417 = vmul.f32 %v1357, 1.442695
        %v1418 = vpow.pop %v1417
        %v1419 = vmul.f32 %v1358, 1.442695
        %v1420 = vpow.pop %v1419
        %v1421 = vmul.f32 %v1359, 1.442695
        %v1422 = vpow.pop %v1421
        %v1423 = vmul.f32 %v1360, 1.442695
        %v1424 = vpow.pop %v1423
        %v1425 = vadd.f32 %v1362, 1.0
        %v1426 = vadd.f32 %v1364, 1.0
        %v1427 = vadd.f32 %v1366, 1.0
        %v1428 = vadd.f32 %v1368, 1.0
        %v1429 = vadd.f32 %v1370, 1.0
        %v1430 = vadd.f32 %v1372, 1.0
        %v1431 = vadd.f32 %v1374, 1.0
        %v1432 = vadd.f32 %v1376, 1.0
        %v1433 = vadd.f32 %v1378, 1.0
        %v1434 = vadd.f32 %v1380, 1.0
        %v1435 = vadd.f32 %v1382, 1.0
        %v1436 = vadd.f32 %v1384, 1.0
        %v1437 = vadd.f32 %v1386, 1.0
        %v1438 = vadd.f32 %v1388, 1.0
        %v1439 = vadd.f32 %v1390, 1.0
        %v1440 = vadd.f32 %v1392, 1.0
        %v1441 = vadd.f32 %v1394, 1.0
        %v1442 = vadd.f32 %v1396, 1.0
        %v1443 = vadd.f32 %v1398, 1.0
        %v1444 = vadd.f32 %v1400, 1.0
        %v1445 = vadd.f32 %v1402, 1.0
        %v1446 = vadd.f32 %v1404, 1.0
        %v1447 = vadd.f32 %v1406, 1.0
        %v1448 = vadd.f32 %v1408, 1.0
        %v1449 = vadd.f32 %v1410, 1.0
        %v1450 = vadd.f32 %v1412, 1.0
        %v1451 = vadd.f32 %v1414, 1.0
        %v1452 = vadd.f32 %v1416, 1.0
        %v1453 = vadd.f32 %v1418, 1.0
        %v1454 = vadd.f32 %v1420, 1.0
        %v1455 = vadd.f32 %v1422, 1.0
        %v1456 = vadd.f32 %v1424, 1.0
        %v1457 = vrcp.pop %v1425
        %v1458 = vmul.f32 1.0, %v1457
        %v1459 = vrcp.pop %v1426
        %v1460 = vmul.f32 1.0, %v1459
        %v1461 = vrcp.pop %v1427
        %v1462 = vmul.f32 1.0, %v1461
        %v1463 = vrcp.pop %v1428
        %v1464 = vmul.f32 1.0, %v1463
        %v1465 = vrcp.pop %v1429
        %v1466 = vmul.f32 1.0, %v1465
        %v1467 = vrcp.pop %v1430
        %v1468 = vmul.f32 1.0, %v1467
        %v1469 = vrcp.pop %v1431
        %v1470 = vmul.f32 1.0, %v1469
        %v1471 = vrcp.pop %v1432
        %v1472 = vmul.f32 1.0, %v1471
        %v1473 = vrcp.pop %v1433
        %v1474 = vmul.f32 1.0, %v1473
        %v1475 = vrcp.pop %v1434
        %v1476 = vmul.f32 1.0, %v1475
        %v1477 = vrcp.pop %v1435
        %v1478 = vmul.f32 1.0, %v1477
        %v1479 = vrcp.pop %v1436
        %v1480 = vmul.f32 1.0, %v1479
        %v1481 = vrcp.pop %v1437
        %v1482 = vmul.f32 1.0, %v1481
        %v1483 = vrcp.pop %v1438
        %v1484 = vmul.f32 1.0, %v1483
        %v1485 = vrcp.pop %v1439
        %v1486 = vmul.f32 1.0, %v1485
        %v1487 = vrcp.pop %v1440
        %v1488 = vmul.f32 1.0, %v1487
        %v1489 = vrcp.pop %v1441
        %v1490 = vmul.f32 1.0, %v1489
        %v1491 = vrcp.pop %v1442
        %v1492 = vmul.f32 1.0, %v1491
        %v1493 = vrcp.pop %v1443
        %v1494 = vmul.f32 1.0, %v1493
        %v1495 = vrcp.pop %v1444
        %v1496 = vmul.f32 1.0, %v1495
        %v1497 = vrcp.pop %v1445
        %v1498 = vmul.f32 1.0, %v1497
        %v1499 = vrcp.pop %v1446
        %v1500 = vmul.f32 1.0, %v1499
        %v1501 = vrcp.pop %v1447
        %v1502 = vmul.f32 1.0, %v1501
        %v1503 = vrcp.pop %v1448
        %v1504 = vmul.f32 1.0, %v1503
        %v1505 = vrcp.pop %v1449
        %v1506 = vmul.f32 1.0, %v1505
        %v1507 = vrcp.pop %v1450
        %v1508 = vmul.f32 1.0, %v1507
        %v1509 = vrcp.pop %v1451
        %v1510 = vmul.f32 1.0, %v1509
        %v1511 = vrcp.pop %v1452
        %v1512 = vmul.f32 1.0, %v1511
        %v1513 = vrcp.pop %v1453
        %v1514 = vmul.f32 1.0, %v1513
        %v1515 = vrcp.pop %v1454
        %v1516 = vmul.f32 1.0, %v1515
        %v1517 = vrcp.pop %v1455
        %v1518 = vmul.f32 1.0, %v1517
        %v1519 = vrcp.pop %v1456
        %v1520 = vmul.f32 1.0, %v1519
        %v1521 = vmul.f32 %v1203, %v1458
        %v1522 = vmul.f32 %v1206, %v1460
        %v1523 = vmul.f32 %v1211, %v1462
        %v1524 = vmul.f32 %v1214, %v1464
        %v1525 = vmul.f32 %v1219, %v1466
        %v1526 = vmul.f32 %v1222, %v1468
        %v1527 = vmul.f32 %v1227, %v1470
        %v1528 = vmul.f32 %v1230, %v1472
        %v1529 = vmul.f32 %v1235, %v1474
        %v1530 = vmul.f32 %v1238, %v1476
        %v1531 = vmul.f32 %v1243, %v1478
        %v1532 = vmul.f32 %v1246, %v1480
        %v1533 = vmul.f32 %v1251, %v1482
        %v1534 = vmul.f32 %v1254, %v1484
        %v1535 = vmul.f32 %v1259, %v1486
        %v1536 = vmul.f32 %v1262, %v1488
        %v1537 = vmul.f32 %v1267, %v1490
        %v1538 = vmul.f32 %v1270, %v1492
        %v1539 = vmul.f32 %v1275, %v1494
        %v1540 = vmul.f32 %v1278, %v1496
        %v1541 = vmul.f32 %v1283, %v1498
        %v1542 = vmul.f32 %v1286, %v1500
        %v1543 = vmul.f32 %v1291, %v1502
        %v1544 = vmul.f32 %v1294, %v1504
        %v1545 = vmul.f32 %v1299, %v1506
        %v1546 = vmul.f32 %v1302, %v1508
        %v1547 = vmul.f32 %v1307, %v1510
        %v1548 = vmul.f32 %v1310, %v1512
        %v1549 = vmul.f32 %v1315, %v1514
        %v1550 = vmul.f32 %v1318, %v1516
        %v1551 = vmul.f32 %v1323, %v1518
        %v1552 = vmul.f32 %v1326, %v1520
        %v1553 = vpack.c.bf16 %v1522, %v1521
        %v1554 = vpack.c.bf16 %v1524, %v1523
        %v1555 = vpack.c.bf16 %v1526, %v1525
        %v1556 = vpack.c.bf16 %v1528, %v1527
        %v1557 = vpack.c.bf16 %v1530, %v1529
        %v1558 = vpack.c.bf16 %v1532, %v1531
        %v1559 = vpack.c.bf16 %v1534, %v1533
        %v1560 = vpack.c.bf16 %v1536, %v1535
        %v1561 = vpack.c.bf16 %v1538, %v1537
        %v1562 = vpack.c.bf16 %v1540, %v1539
        %v1563 = vpack.c.bf16 %v1542, %v1541
        %v1564 = vpack.c.bf16 %v1544, %v1543
        %v1565 = vpack.c.bf16 %v1546, %v1545
        %v1566 = vpack.c.bf16 %v1548, %v1547
        %v1567 = vpack.c.bf16 %v1550, %v1549
        %v1568 = vpack.c.bf16 %v1552, %v1551
        %v1569 = vld [vmem:[%s11] sm:$0xf]
        %v1570 = vld [vmem:[%s11 + $0x4] sm:$0xf]
        %v1571 = vld [vmem:[%s11 + $0x8] sm:$0xf]
        %v1572 = vld [vmem:[%s11 + $0xc] sm:$0xf]
        %v1573 = vld [vmem:[%s11 + $0x10] sm:$0xf]
        %v1574 = vld [vmem:[%s11 + $0x14] sm:$0xf]
        %v1575 = vld [vmem:[%s11 + $0x18] sm:$0xf]
        %v1576 = vld [vmem:[%s11 + $0x1c] sm:$0xf]
        %v1585 = vunpack.c.l.b16 %v1569
        %v1586 = vunpack.c.l.b16 %v1570
        %v1587 = vunpack.c.l.b16 %v1571
        %v1588 = vunpack.c.l.b16 %v1572
        %v1589 = vunpack.c.l.b16 %v1573
        %v1590 = vunpack.c.l.b16 %v1574
        %v1591 = vunpack.c.l.b16 %v1575
        %v1592 = vunpack.c.l.b16 %v1576
        %v1593 = vpack.c.b16 %v1586, %v1585
        %v1594 = vpack.c.b16 %v1588, %v1587
        %v1595 = vpack.c.b16 %v1590, %v1589
        %v1596 = vpack.c.b16 %v1592, %v1591
        %v1602 = vsel %vm1080, %v1553, 0
        %v1605 = vsel %vm1080, %v1554, 0
        %v1608 = vsel %vm1080, %v1555, 0
        %v1611 = vsel %vm1080, %v1556, 0
        %v1614 = vsel %vm1080, %v1557, 0
        %v1617 = vsel %vm1080, %v1558, 0
        %v1620 = vsel %vm1080, %v1559, 0
        %v1623 = vsel %vm1080, %v1560, 0
        %v1626 = vsel %vm1080, %v1561, 0
        %v1629 = vsel %vm1080, %v1562, 0
        %v1632 = vsel %vm1080, %v1563, 0
        %v1635 = vsel %vm1080, %v1564, 0
        %v1638 = vsel %vm1080, %v1565, 0
        %v1641 = vsel %vm1080, %v1566, 0
        %v1644 = vsel %vm1080, %v1567, 0
        %v1647 = vsel %vm1080, %v1568, 0
        %1649 = vmatprep.subr.bf16.mxu0 0
        %1650 = vmatpush1.bf16.msra.mxu0 %v1593
        %1651 = vmatprep.subr.bf16.mxu0 0
        %1652 = vmatpush1.bf16.msra.mxu0 %v1594
        %1653 = vmatprep.subr.bf16.mxu0 0
        %1654 = vmatpush1.bf16.msra.mxu0 %v1595
        %1655 = vmatprep.subr.bf16.mxu0 0
        %1656 = vmatpush1.bf16.msra.mxu0 %v1596
        %1657 = vmatprep.subr.bf16.mxu0 0
        %1658 = vmatpush1.bf16.msra.mxu0 0
        %1659 = vmatprep.subr.bf16.mxu0 0
        %1660 = vmatpush1.bf16.msra.mxu0 0
        %1661 = vmatprep.subr.bf16.mxu0 0
        %1662 = vmatpush1.bf16.msra.mxu0 0
        %1663 = vmatprep.subr.bf16.mxu0 0
        %1664 = vmatpush1.bf16.msra.mxu0 0
        %1665 = vmatprep.subr.bf16.mxu0 0
        %1666 = vmatpush1.bf16.msra.mxu0 0
        %1667 = vmatprep.subr.bf16.mxu0 0
        %1668 = vmatpush1.bf16.msra.mxu0 0
        %1669 = vmatprep.subr.bf16.mxu0 0
        %1670 = vmatpush1.bf16.msra.mxu0 0
        %1671 = vmatprep.subr.bf16.mxu0 0
        %1672 = vmatpush1.bf16.msra.mxu0 0
        %1673 = vmatprep.subr.bf16.mxu0 0
        %1674 = vmatpush1.bf16.msra.mxu0 0
        %1675 = vmatprep.subr.bf16.mxu0 0
        %1676 = vmatpush1.bf16.msra.mxu0 0
        %1677 = vmatprep.subr.bf16.mxu0 0
        %1678 = vmatpush1.bf16.msra.mxu0 0
        %1679 = vmatprep.subr.bf16.mxu0 0
        %1680 = vmatpush1.bf16.msra.mxu0 0
        %1681 = vmatprep.mubr.bf16.mxu0 0
        %1682 = vmatmul.mubr.bf16.gmra.mrb[0].mxu0 %v1602
        %v1683 = vpop.f32.mrb[0].mxu0
        %v1684 = vadd.f32 0.0, %v1683
        %v1685 = vpop.f32.mrb[0].mxu0
        %v1686 = vpop.f32.mrb[0].mxu0
        %v1687 = vadd.f32 0.0, %v1686
        %v1688 = vpop.f32.mrb[0].mxu0
        %1689 = vmatprep.mubr.bf16.mxu0 0
        %1690 = vmatmul.mubr.bf16.gmra.mrb[0].mxu0 %v1605
        %v1691 = vpop.f32.mrb[0].mxu0
        %v1692 = vadd.f32 0.0, %v1691
        %v1693 = vpop.f32.mrb[0].mxu0
        %v1694 = vpop.f32.mrb[0].mxu0
        %v1695 = vadd.f32 0.0, %v1694
        %v1696 = vpop.f32.mrb[0].mxu0
        %1697 = vmatprep.mubr.bf16.mxu0 0
        %1698 = vmatmul.mubr.bf16.gmra.mrb[0].mxu0 %v1608
        %v1699 = vpop.f32.mrb[0].mxu0
        %v1700 = vadd.f32 0.0, %v1699
        %v1701 = vpop.f32.mrb[0].mxu0
        %v1702 = vpop.f32.mrb[0].mxu0
        %v1703 = vadd.f32 0.0, %v1702
        %v1704 = vpop.f32.mrb[0].mxu0
        %1705 = vmatprep.mubr.bf16.mxu0 0
        %1706 = vmatmul.mubr.bf16.gmra.mrb[0].mxu0 %v1611
        %v1707 = vpop.f32.mrb[0].mxu0
        %v1708 = vadd.f32 0.0, %v1707
        %v1709 = vpop.f32.mrb[0].mxu0
        %v1710 = vpop.f32.mrb[0].mxu0
        %v1711 = vadd.f32 0.0, %v1710
        %v1712 = vpop.f32.mrb[0].mxu0
        %1713 = vmatprep.mubr.bf16.mxu0 0
        %1714 = vmatmul.mubr.bf16.gmra.mrb[0].mxu0 %v1614
        %v1715 = vpop.f32.mrb[0].mxu0
        %v1716 = vadd.f32 0.0, %v1715
        %v1717 = vpop.f32.mrb[0].mxu0
        %v1718 = vpop.f32.mrb[0].mxu0
        %v1719 = vadd.f32 0.0, %v1718
        %v1720 = vpop.f32.mrb[0].mxu0
        %1721 = vmatprep.mubr.bf16.mxu0 0
        %1722 = vmatmul.mubr.bf16.gmra.mrb[0].mxu0 %v1617
        %v1723 = vpop.f32.mrb[0].mxu0
        %v1724 = vadd.f32 0.0, %v1723
        %v1725 = vpop.f32.mrb[0].mxu0
        %v1726 = vpop.f32.mrb[0].mxu0
        %v1727 = vadd.f32 0.0, %v1726
        %v1728 = vpop.f32.mrb[0].mxu0
        %1729 = vmatprep.mubr.bf16.mxu0 0
        %1730 = vmatmul.mubr.bf16.gmra.mrb[0].mxu0 %v1620
        %v1731 = vpop.f32.mrb[0].mxu0
        %v1732 = vadd.f32 0.0, %v1731
        %v1733 = vpop.f32.mrb[0].mxu0
        %v1734 = vpop.f32.mrb[0].mxu0
        %v1735 = vadd.f32 0.0, %v1734
        %v1736 = vpop.f32.mrb[0].mxu0
        %1737 = vmatprep.mubr.bf16.mxu0 0
        %1738 = vmatmul.mubr.bf16.gmra.mrb[0].mxu0 %v1623
        %v1739 = vpop.f32.mrb[0].mxu0
        %v1740 = vadd.f32 0.0, %v1739
        %v1741 = vpop.f32.mrb[0].mxu0
        %v1742 = vpop.f32.mrb[0].mxu0
        %v1743 = vadd.f32 0.0, %v1742
        %v1744 = vpop.f32.mrb[0].mxu0
        %1745 = vmatprep.mubr.bf16.mxu0 0
        %1746 = vmatmul.mubr.bf16.gmra.mrb[0].mxu0 %v1626
        %v1747 = vpop.f32.mrb[0].mxu0
        %v1748 = vadd.f32 0.0, %v1747
        %v1749 = vpop.f32.mrb[0].mxu0
        %v1750 = vpop.f32.mrb[0].mxu0
        %v1751 = vadd.f32 0.0, %v1750
        %v1752 = vpop.f32.mrb[0].mxu0
        %1753 = vmatprep.mubr.bf16.mxu0 0
        %1754 = vmatmul.mubr.bf16.gmra.mrb[0].mxu0 %v1629
        %v1755 = vpop.f32.mrb[0].mxu0
        %v1756 = vadd.f32 0.0, %v1755
        %v1757 = vpop.f32.mrb[0].mxu0
        %v1758 = vpop.f32.mrb[0].mxu0
        %v1759 = vadd.f32 0.0, %v1758
        %v1760 = vpop.f32.mrb[0].mxu0
        %1761 = vmatprep.mubr.bf16.mxu0 0
        %1762 = vmatmul.mubr.bf16.gmra.mrb[0].mxu0 %v1632
        %v1763 = vpop.f32.mrb[0].mxu0
        %v1764 = vadd.f32 0.0, %v1763
        %v1765 = vpop.f32.mrb[0].mxu0
        %v1766 = vpop.f32.mrb[0].mxu0
        %v1767 = vadd.f32 0.0, %v1766
        %v1768 = vpop.f32.mrb[0].mxu0
        %1769 = vmatprep.mubr.bf16.mxu0 0
        %1770 = vmatmul.mubr.bf16.gmra.mrb[0].mxu0 %v1635
        %v1771 = vpop.f32.mrb[0].mxu0
        %v1772 = vadd.f32 0.0, %v1771
        %v1773 = vpop.f32.mrb[0].mxu0
        %v1774 = vpop.f32.mrb[0].mxu0
        %v1775 = vadd.f32 0.0, %v1774
        %v1776 = vpop.f32.mrb[0].mxu0
        %1777 = vmatprep.mubr.bf16.mxu0 0
        %1778 = vmatmul.mubr.bf16.gmra.mrb[0].mxu0 %v1638
        %v1779 = vpop.f32.mrb[0].mxu0
        %v1780 = vadd.f32 0.0, %v1779
        %v1781 = vpop.f32.mrb[0].mxu0
        %v1782 = vpop.f32.mrb[0].mxu0
        %v1783 = vadd.f32 0.0, %v1782
        %v1784 = vpop.f32.mrb[0].mxu0
        %1785 = vmatprep.mubr.bf16.mxu0 0
        %1786 = vmatmul.mubr.bf16.gmra.mrb[0].mxu0 %v1641
        %v1787 = vpop.f32.mrb[0].mxu0
        %v1788 = vadd.f32 0.0, %v1787
        %v1789 = vpop.f32.mrb[0].mxu0
        %v1790 = vpop.f32.mrb[0].mxu0
        %v1791 = vadd.f32 0.0, %v1790
        %v1792 = vpop.f32.mrb[0].mxu0
        %1793 = vmatprep.mubr.bf16.mxu0 0
        %1794 = vmatmul.mubr.bf16.gmra.mrb[0].mxu0 %v1644
        %v1795 = vpop.f32.mrb[0].mxu0
        %v1796 = vadd.f32 0.0, %v1795
        %v1797 = vpop.f32.mrb[0].mxu0
        %v1798 = vpop.f32.mrb[0].mxu0
        %v1799 = vadd.f32 0.0, %v1798
        %v1800 = vpop.f32.mrb[0].mxu0
        %1801 = vmatprep.mubr.bf16.mxu0 0
        %1802 = vmatmul.mubr.bf16.gmra.mrb[0].mxu0 %v1647
        %v1803 = vpop.f32.mrb[0].mxu0
        %v1804 = vadd.f32 0.0, %v1803
        %v1805 = vpop.f32.mrb[0].mxu0
        %v1806 = vpop.f32.mrb[0].mxu0
        %v1807 = vadd.f32 0.0, %v1806
        %v1808 = vpop.f32.mrb[0].mxu0
        %1809 = vdwg.mxu0
        %v1810 = vsub.f32 0.0, %v1684
        %v1811 = vsub.f32 0.0, %v1687
        %v1812 = vsub.f32 0.0, %v1692
        %v1813 = vsub.f32 0.0, %v1695
        %v1814 = vsub.f32 0.0, %v1700
        %v1815 = vsub.f32 0.0, %v1703
        %v1816 = vsub.f32 0.0, %v1708
        %v1817 = vsub.f32 0.0, %v1711
        %v1818 = vsub.f32 0.0, %v1716
        %v1819 = vsub.f32 0.0, %v1719
        %v1820 = vsub.f32 0.0, %v1724
        %v1821 = vsub.f32 0.0, %v1727
        %v1822 = vsub.f32 0.0, %v1732
        %v1823 = vsub.f32 0.0, %v1735
        %v1824 = vsub.f32 0.0, %v1740
        %v1825 = vsub.f32 0.0, %v1743
        %v1826 = vsub.f32 0.0, %v1748
        %v1827 = vsub.f32 0.0, %v1751
        %v1828 = vsub.f32 0.0, %v1756
        %v1829 = vsub.f32 0.0, %v1759
        %v1830 = vsub.f32 0.0, %v1764
        %v1831 = vsub.f32 0.0, %v1767
        %v1832 = vsub.f32 0.0, %v1772
        %v1833 = vsub.f32 0.0, %v1775
        %v1834 = vsub.f32 0.0, %v1780
        %v1835 = vsub.f32 0.0, %v1783
        %v1836 = vsub.f32 0.0, %v1788
        %v1837 = vsub.f32 0.0, %v1791
        %v1838 = vsub.f32 0.0, %v1796
        %v1839 = vsub.f32 0.0, %v1799
        %v1840 = vsub.f32 0.0, %v1804
        %v1841 = vsub.f32 0.0, %v1807
        %v1842 = vmul.f32 %v1810, 1.442695
        %v1843 = vpow.pop %v1842
        %v1844 = vmul.f32 %v1811, 1.442695
        %v1845 = vpow.pop %v1844
        %v1846 = vmul.f32 %v1812, 1.442695
        %v1847 = vpow.pop %v1846
        %v1848 = vmul.f32 %v1813, 1.442695
        %v1849 = vpow.pop %v1848
        %v1850 = vmul.f32 %v1814, 1.442695
        %v1851 = vpow.pop %v1850
        %v1852 = vmul.f32 %v1815, 1.442695
        %v1853 = vpow.pop %v1852
        %v1854 = vmul.f32 %v1816, 1.442695
        %v1855 = vpow.pop %v1854
        %v1856 = vmul.f32 %v1817, 1.442695
        %v1857 = vpow.pop %v1856
        %v1858 = vmul.f32 %v1818, 1.442695
        %v1859 = vpow.pop %v1858
        %v1860 = vmul.f32 %v1819, 1.442695
        %v1861 = vpow.pop %v1860
        %v1862 = vmul.f32 %v1820, 1.442695
        %v1863 = vpow.pop %v1862
        %v1864 = vmul.f32 %v1821, 1.442695
        %v1865 = vpow.pop %v1864
        %v1866 = vmul.f32 %v1822, 1.442695
        %v1867 = vpow.pop %v1866
        %v1868 = vmul.f32 %v1823, 1.442695
        %v1869 = vpow.pop %v1868
        %v1870 = vmul.f32 %v1824, 1.442695
        %v1871 = vpow.pop %v1870
        %v1872 = vmul.f32 %v1825, 1.442695
        %v1873 = vpow.pop %v1872
        %v1874 = vmul.f32 %v1826, 1.442695
        %v1875 = vpow.pop %v1874
        %v1876 = vmul.f32 %v1827, 1.442695
        %v1877 = vpow.pop %v1876
        %v1878 = vmul.f32 %v1828, 1.442695
        %v1879 = vpow.pop %v1878
        %v1880 = vmul.f32 %v1829, 1.442695
        %v1881 = vpow.pop %v1880
        %v1882 = vmul.f32 %v1830, 1.442695
        %v1883 = vpow.pop %v1882
        %v1884 = vmul.f32 %v1831, 1.442695
        %v1885 = vpow.pop %v1884
        %v1886 = vmul.f32 %v1832, 1.442695
        %v1887 = vpow.pop %v1886
        %v1888 = vmul.f32 %v1833, 1.442695
        %v1889 = vpow.pop %v1888
        %v1890 = vmul.f32 %v1834, 1.442695
        %v1891 = vpow.pop %v1890
        %v1892 = vmul.f32 %v1835, 1.442695
        %v1893 = vpow.pop %v1892
        %v1894 = vmul.f32 %v1836, 1.442695
        %v1895 = vpow.pop %v1894
        %v1896 = vmul.f32 %v1837, 1.442695
        %v1897 = vpow.pop %v1896
        %v1898 = vmul.f32 %v1838, 1.442695
        %v1899 = vpow.pop %v1898
        %v1900 = vmul.f32 %v1839, 1.442695
        %v1901 = vpow.pop %v1900
        %v1902 = vmul.f32 %v1840, 1.442695
        %v1903 = vpow.pop %v1902
        %v1904 = vmul.f32 %v1841, 1.442695
        %v1905 = vpow.pop %v1904
        %v1906 = vadd.f32 %v1843, 1.0
        %v1907 = vadd.f32 %v1845, 1.0
        %v1908 = vadd.f32 %v1847, 1.0
        %v1909 = vadd.f32 %v1849, 1.0
        %v1910 = vadd.f32 %v1851, 1.0
        %v1911 = vadd.f32 %v1853, 1.0
        %v1912 = vadd.f32 %v1855, 1.0
        %v1913 = vadd.f32 %v1857, 1.0
        %v1914 = vadd.f32 %v1859, 1.0
        %v1915 = vadd.f32 %v1861, 1.0
        %v1916 = vadd.f32 %v1863, 1.0
        %v1917 = vadd.f32 %v1865, 1.0
        %v1918 = vadd.f32 %v1867, 1.0
        %v1919 = vadd.f32 %v1869, 1.0
        %v1920 = vadd.f32 %v1871, 1.0
        %v1921 = vadd.f32 %v1873, 1.0
        %v1922 = vadd.f32 %v1875, 1.0
        %v1923 = vadd.f32 %v1877, 1.0
        %v1924 = vadd.f32 %v1879, 1.0
        %v1925 = vadd.f32 %v1881, 1.0
        %v1926 = vadd.f32 %v1883, 1.0
        %v1927 = vadd.f32 %v1885, 1.0
        %v1928 = vadd.f32 %v1887, 1.0
        %v1929 = vadd.f32 %v1889, 1.0
        %v1930 = vadd.f32 %v1891, 1.0
        %v1931 = vadd.f32 %v1893, 1.0
        %v1932 = vadd.f32 %v1895, 1.0
        %v1933 = vadd.f32 %v1897, 1.0
        %v1934 = vadd.f32 %v1899, 1.0
        %v1935 = vadd.f32 %v1901, 1.0
        %v1936 = vadd.f32 %v1903, 1.0
        %v1937 = vadd.f32 %v1905, 1.0
        %v1938 = vrcp.pop %v1906
        %v1939 = vmul.f32 1.0, %v1938
        %v1940 = vrcp.pop %v1907
        %v1941 = vmul.f32 1.0, %v1940
        %v1942 = vrcp.pop %v1908
        %v1943 = vmul.f32 1.0, %v1942
        %v1944 = vrcp.pop %v1909
        %v1945 = vmul.f32 1.0, %v1944
        %v1946 = vrcp.pop %v1910
        %v1947 = vmul.f32 1.0, %v1946
        %v1948 = vrcp.pop %v1911
        %v1949 = vmul.f32 1.0, %v1948
        %v1950 = vrcp.pop %v1912
        %v1951 = vmul.f32 1.0, %v1950
        %v1952 = vrcp.pop %v1913
        %v1953 = vmul.f32 1.0, %v1952
        %v1954 = vrcp.pop %v1914
        %v1955 = vmul.f32 1.0, %v1954
        %v1956 = vrcp.pop %v1915
        %v1957 = vmul.f32 1.0, %v1956
        %v1958 = vrcp.pop %v1916
        %v1959 = vmul.f32 1.0, %v1958
        %v1960 = vrcp.pop %v1917
        %v1961 = vmul.f32 1.0, %v1960
        %v1962 = vrcp.pop %v1918
        %v1963 = vmul.f32 1.0, %v1962
        %v1964 = vrcp.pop %v1919
        %v1965 = vmul.f32 1.0, %v1964
        %v1966 = vrcp.pop %v1920
        %v1967 = vmul.f32 1.0, %v1966
        %v1968 = vrcp.pop %v1921
        %v1969 = vmul.f32 1.0, %v1968
        %v1970 = vrcp.pop %v1922
        %v1971 = vmul.f32 1.0, %v1970
        %v1972 = vrcp.pop %v1923
        %v1973 = vmul.f32 1.0, %v1972
        %v1974 = vrcp.pop %v1924
        %v1975 = vmul.f32 1.0, %v1974
        %v1976 = vrcp.pop %v1925
        %v1977 = vmul.f32 1.0, %v1976
        %v1978 = vrcp.pop %v1926
        %v1979 = vmul.f32 1.0, %v1978
        %v1980 = vrcp.pop %v1927
        %v1981 = vmul.f32 1.0, %v1980
        %v1982 = vrcp.pop %v1928
        %v1983 = vmul.f32 1.0, %v1982
        %v1984 = vrcp.pop %v1929
        %v1985 = vmul.f32 1.0, %v1984
        %v1986 = vrcp.pop %v1930
        %v1987 = vmul.f32 1.0, %v1986
        %v1988 = vrcp.pop %v1931
        %v1989 = vmul.f32 1.0, %v1988
        %v1990 = vrcp.pop %v1932
        %v1991 = vmul.f32 1.0, %v1990
        %v1992 = vrcp.pop %v1933
        %v1993 = vmul.f32 1.0, %v1992
        %v1994 = vrcp.pop %v1934
        %v1995 = vmul.f32 1.0, %v1994
        %v1996 = vrcp.pop %v1935
        %v1997 = vmul.f32 1.0, %v1996
        %v1998 = vrcp.pop %v1936
        %v1999 = vmul.f32 1.0, %v1998
        %v2000 = vrcp.pop %v1937
        %v2001 = vmul.f32 1.0, %v2000
        %v2002 = vmul.f32 %v1684, %v1939
        %v2003 = vmul.f32 %v1687, %v1941
        %v2004 = vmul.f32 %v1692, %v1943
        %v2005 = vmul.f32 %v1695, %v1945
        %v2006 = vmul.f32 %v1700, %v1947
        %v2007 = vmul.f32 %v1703, %v1949
        %v2008 = vmul.f32 %v1708, %v1951
        %v2009 = vmul.f32 %v1711, %v1953
        %v2010 = vmul.f32 %v1716, %v1955
        %v2011 = vmul.f32 %v1719, %v1957
        %v2012 = vmul.f32 %v1724, %v1959
        %v2013 = vmul.f32 %v1727, %v1961
        %v2014 = vmul.f32 %v1732, %v1963
        %v2015 = vmul.f32 %v1735, %v1965
        %v2016 = vmul.f32 %v1740, %v1967
        %v2017 = vmul.f32 %v1743, %v1969
        %v2018 = vmul.f32 %v1748, %v1971
        %v2019 = vmul.f32 %v1751, %v1973
        %v2020 = vmul.f32 %v1756, %v1975
        %v2021 = vmul.f32 %v1759, %v1977
        %v2022 = vmul.f32 %v1764, %v1979
        %v2023 = vmul.f32 %v1767, %v1981
        %v2024 = vmul.f32 %v1772, %v1983
        %v2025 = vmul.f32 %v1775, %v1985
        %v2026 = vmul.f32 %v1780, %v1987
        %v2027 = vmul.f32 %v1783, %v1989
        %v2028 = vmul.f32 %v1788, %v1991
        %v2029 = vmul.f32 %v1791, %v1993
        %v2030 = vmul.f32 %v1796, %v1995
        %v2031 = vmul.f32 %v1799, %v1997
        %v2032 = vmul.f32 %v1804, %v1999
        %v2033 = vmul.f32 %v1807, %v2001
        %v2034 = vpack.c.bf16 %v2003, %v2002
        %v2035 = vpack.c.bf16 %v2005, %v2004
        %v2036 = vpack.c.bf16 %v2007, %v2006
        %v2037 = vpack.c.bf16 %v2009, %v2008
        %v2038 = vpack.c.bf16 %v2011, %v2010
        %v2039 = vpack.c.bf16 %v2013, %v2012
        %v2040 = vpack.c.bf16 %v2015, %v2014
        %v2041 = vpack.c.bf16 %v2017, %v2016
        %v2042 = vpack.c.bf16 %v2019, %v2018
        %v2043 = vpack.c.bf16 %v2021, %v2020
        %v2044 = vpack.c.bf16 %v2023, %v2022
        %v2045 = vpack.c.bf16 %v2025, %v2024
        %v2046 = vpack.c.bf16 %v2027, %v2026
        %v2047 = vpack.c.bf16 %v2029, %v2028
        %v2048 = vpack.c.bf16 %v2031, %v2030
        %v2049 = vpack.c.bf16 %v2033, %v2032
        %v2050 = vld [vmem:[%s12] sm:$0xf]
        %v2051 = vld [vmem:[%s12 + $0x4] sm:$0xf]
        %v2052 = vld [vmem:[%s12 + $0x8] sm:$0xf]
        %v2053 = vld [vmem:[%s12 + $0xc] sm:$0xf]
        %v2054 = vld [vmem:[%s12 + $0x10] sm:$0xf]
        %v2055 = vld [vmem:[%s12 + $0x14] sm:$0xf]
        %v2056 = vld [vmem:[%s12 + $0x18] sm:$0xf]
        %v2057 = vld [vmem:[%s12 + $0x1c] sm:$0xf]
        %v2066 = vunpack.c.l.b16 %v2050
        %v2067 = vunpack.c.l.b16 %v2051
        %v2068 = vunpack.c.l.b16 %v2052
        %v2069 = vunpack.c.l.b16 %v2053
        %v2070 = vunpack.c.l.b16 %v2054
        %v2071 = vunpack.c.l.b16 %v2055
        %v2072 = vunpack.c.l.b16 %v2056
        %v2073 = vunpack.c.l.b16 %v2057
        %v2074 = vpack.c.b16 %v2067, %v2066
        %v2075 = vpack.c.b16 %v2069, %v2068
        %v2076 = vpack.c.b16 %v2071, %v2070
        %v2077 = vpack.c.b16 %v2073, %v2072
        %v2083 = vsel %vm1080, %v2034, 0
        %v2086 = vsel %vm1080, %v2035, 0
        %v2089 = vsel %vm1080, %v2036, 0
        %v2092 = vsel %vm1080, %v2037, 0
        %v2095 = vsel %vm1080, %v2038, 0
        %v2098 = vsel %vm1080, %v2039, 0
        %v2101 = vsel %vm1080, %v2040, 0
        %v2104 = vsel %vm1080, %v2041, 0
        %v2107 = vsel %vm1080, %v2042, 0
        %v2110 = vsel %vm1080, %v2043, 0
        %v2113 = vsel %vm1080, %v2044, 0
        %v2116 = vsel %vm1080, %v2045, 0
        %v2119 = vsel %vm1080, %v2046, 0
        %v2122 = vsel %vm1080, %v2047, 0
        %v2125 = vsel %vm1080, %v2048, 0
        %v2128 = vsel %vm1080, %v2049, 0
        %2130 = vmatprep.subr.bf16.mxu0 0
        %2131 = vmatpush1.bf16.msra.mxu0 %v2074
        %2132 = vmatprep.subr.bf16.mxu0 0
        %2133 = vmatpush1.bf16.msra.mxu0 %v2075
        %2134 = vmatprep.subr.bf16.mxu0 0
        %2135 = vmatpush1.bf16.msra.mxu0 %v2076
        %2136 = vmatprep.subr.bf16.mxu0 0
        %2137 = vmatpush1.bf16.msra.mxu0 %v2077
        %2138 = vmatprep.subr.bf16.mxu0 0
        %2139 = vmatpush1.bf16.msra.mxu0 0
        %2140 = vmatprep.subr.bf16.mxu0 0
        %2141 = vmatpush1.bf16.msra.mxu0 0
        %2142 = vmatprep.subr.bf16.mxu0 0
        %2143 = vmatpush1.bf16.msra.mxu0 0
        %2144 = vmatprep.subr.bf16.mxu0 0
        %2145 = vmatpush1.bf16.msra.mxu0 0
        %2146 = vmatprep.subr.bf16.mxu0 0
        %2147 = vmatpush1.bf16.msra.mxu0 0
        %2148 = vmatprep.subr.bf16.mxu0 0
        %2149 = vmatpush1.bf16.msra.mxu0 0
        %2150 = vmatprep.subr.bf16.mxu0 0
        %2151 = vmatpush1.bf16.msra.mxu0 0
        %2152 = vmatprep.subr.bf16.mxu0 0
        %2153 = vmatpush1.bf16.msra.mxu0 0
        %2154 = vmatprep.subr.bf16.mxu0 0
        %2155 = vmatpush1.bf16.msra.mxu0 0
        %2156 = vmatprep.subr.bf16.mxu0 0
        %2157 = vmatpush1.bf16.msra.mxu0 0
        %2158 = vmatprep.subr.bf16.mxu0 0
        %2159 = vmatpush1.bf16.msra.mxu0 0
        %2160 = vmatprep.subr.bf16.mxu0 0
        %2161 = vmatpush1.bf16.msra.mxu0 0
        %2162 = vmatprep.mubr.bf16.mxu0 0
        %2163 = vmatmul.mubr.bf16.gmra.mrb[0].mxu0 %v2083
        %v2164 = vpop.f32.mrb[0].mxu0
        %v2165 = vadd.f32 0.0, %v2164
        %v2166 = vpop.f32.mrb[0].mxu0
        %v2167 = vpop.f32.mrb[0].mxu0
        %v2168 = vadd.f32 0.0, %v2167
        %v2169 = vpop.f32.mrb[0].mxu0
        %2170 = vmatprep.mubr.bf16.mxu0 0
        %2171 = vmatmul.mubr.bf16.gmra.mrb[0].mxu0 %v2086
        %v2172 = vpop.f32.mrb[0].mxu0
        %v2173 = vadd.f32 0.0, %v2172
        %v2174 = vpop.f32.mrb[0].mxu0
        %v2175 = vpop.f32.mrb[0].mxu0
        %v2176 = vadd.f32 0.0, %v2175
        %v2177 = vpop.f32.mrb[0].mxu0
        %2178 = vmatprep.mubr.bf16.mxu0 0
        %2179 = vmatmul.mubr.bf16.gmra.mrb[0].mxu0 %v2089
        %v2180 = vpop.f32.mrb[0].mxu0
        %v2181 = vadd.f32 0.0, %v2180
        %v2182 = vpop.f32.mrb[0].mxu0
        %v2183 = vpop.f32.mrb[0].mxu0
        %v2184 = vadd.f32 0.0, %v2183
        %v2185 = vpop.f32.mrb[0].mxu0
        %2186 = vmatprep.mubr.bf16.mxu0 0
        %2187 = vmatmul.mubr.bf16.gmra.mrb[0].mxu0 %v2092
        %v2188 = vpop.f32.mrb[0].mxu0
        %v2189 = vadd.f32 0.0, %v2188
        %v2190 = vpop.f32.mrb[0].mxu0
        %v2191 = vpop.f32.mrb[0].mxu0
        %v2192 = vadd.f32 0.0, %v2191
        %v2193 = vpop.f32.mrb[0].mxu0
        %2194 = vmatprep.mubr.bf16.mxu0 0
        %2195 = vmatmul.mubr.bf16.gmra.mrb[0].mxu0 %v2095
        %v2196 = vpop.f32.mrb[0].mxu0
        %v2197 = vadd.f32 0.0, %v2196
        %v2198 = vpop.f32.mrb[0].mxu0
        %v2199 = vpop.f32.mrb[0].mxu0
        %v2200 = vadd.f32 0.0, %v2199
        %v2201 = vpop.f32.mrb[0].mxu0
        %2202 = vmatprep.mubr.bf16.mxu0 0
        %2203 = vmatmul.mubr.bf16.gmra.mrb[0].mxu0 %v2098
        %v2204 = vpop.f32.mrb[0].mxu0
        %v2205 = vadd.f32 0.0, %v2204
        %v2206 = vpop.f32.mrb[0].mxu0
        %v2207 = vpop.f32.mrb[0].mxu0
        %v2208 = vadd.f32 0.0, %v2207
        %v2209 = vpop.f32.mrb[0].mxu0
        %2210 = vmatprep.mubr.bf16.mxu0 0
        %2211 = vmatmul.mubr.bf16.gmra.mrb[0].mxu0 %v2101
        %v2212 = vpop.f32.mrb[0].mxu0
        %v2213 = vadd.f32 0.0, %v2212
        %v2214 = vpop.f32.mrb[0].mxu0
        %v2215 = vpop.f32.mrb[0].mxu0
        %v2216 = vadd.f32 0.0, %v2215
        %v2217 = vpop.f32.mrb[0].mxu0
        %2218 = vmatprep.mubr.bf16.mxu0 0
        %2219 = vmatmul.mubr.bf16.gmra.mrb[0].mxu0 %v2104
        %v2220 = vpop.f32.mrb[0].mxu0
        %v2221 = vadd.f32 0.0, %v2220
        %v2222 = vpop.f32.mrb[0].mxu0
        %v2223 = vpop.f32.mrb[0].mxu0
        %v2224 = vadd.f32 0.0, %v2223
        %v2225 = vpop.f32.mrb[0].mxu0
        %2226 = vmatprep.mubr.bf16.mxu0 0
        %2227 = vmatmul.mubr.bf16.gmra.mrb[0].mxu0 %v2107
        %v2228 = vpop.f32.mrb[0].mxu0
        %v2229 = vadd.f32 0.0, %v2228
        %v2230 = vpop.f32.mrb[0].mxu0
        %v2231 = vpop.f32.mrb[0].mxu0
        %v2232 = vadd.f32 0.0, %v2231
        %v2233 = vpop.f32.mrb[0].mxu0
        %2234 = vmatprep.mubr.bf16.mxu0 0
        %2235 = vmatmul.mubr.bf16.gmra.mrb[0].mxu0 %v2110
        %v2236 = vpop.f32.mrb[0].mxu0
        %v2237 = vadd.f32 0.0, %v2236
        %v2238 = vpop.f32.mrb[0].mxu0
        %v2239 = vpop.f32.mrb[0].mxu0
        %v2240 = vadd.f32 0.0, %v2239
        %v2241 = vpop.f32.mrb[0].mxu0
        %2242 = vmatprep.mubr.bf16.mxu0 0
        %2243 = vmatmul.mubr.bf16.gmra.mrb[0].mxu0 %v2113
        %v2244 = vpop.f32.mrb[0].mxu0
        %v2245 = vadd.f32 0.0, %v2244
        %v2246 = vpop.f32.mrb[0].mxu0
        %v2247 = vpop.f32.mrb[0].mxu0
        %v2248 = vadd.f32 0.0, %v2247
        %v2249 = vpop.f32.mrb[0].mxu0
        %2250 = vmatprep.mubr.bf16.mxu0 0
        %2251 = vmatmul.mubr.bf16.gmra.mrb[0].mxu0 %v2116
        %v2252 = vpop.f32.mrb[0].mxu0
        %v2253 = vadd.f32 0.0, %v2252
        %v2254 = vpop.f32.mrb[0].mxu0
        %v2255 = vpop.f32.mrb[0].mxu0
        %v2256 = vadd.f32 0.0, %v2255
        %v2257 = vpop.f32.mrb[0].mxu0
        %2258 = vmatprep.mubr.bf16.mxu0 0
        %2259 = vmatmul.mubr.bf16.gmra.mrb[0].mxu0 %v2119
        %v2260 = vpop.f32.mrb[0].mxu0
        %v2261 = vadd.f32 0.0, %v2260
        %v2262 = vpop.f32.mrb[0].mxu0
        %v2263 = vpop.f32.mrb[0].mxu0
        %v2264 = vadd.f32 0.0, %v2263
        %v2265 = vpop.f32.mrb[0].mxu0
        %2266 = vmatprep.mubr.bf16.mxu0 0
        %2267 = vmatmul.mubr.bf16.gmra.mrb[0].mxu0 %v2122
        %v2268 = vpop.f32.mrb[0].mxu0
        %v2269 = vadd.f32 0.0, %v2268
        %v2270 = vpop.f32.mrb[0].mxu0
        %v2271 = vpop.f32.mrb[0].mxu0
        %v2272 = vadd.f32 0.0, %v2271
        %v2273 = vpop.f32.mrb[0].mxu0
        %2274 = vmatprep.mubr.bf16.mxu0 0
        %2275 = vmatmul.mubr.bf16.gmra.mrb[0].mxu0 %v2125
        %v2276 = vpop.f32.mrb[0].mxu0
        %v2277 = vadd.f32 0.0, %v2276
        %v2278 = vpop.f32.mrb[0].mxu0
        %v2279 = vpop.f32.mrb[0].mxu0
        %v2280 = vadd.f32 0.0, %v2279
        %v2281 = vpop.f32.mrb[0].mxu0
        %2282 = vmatprep.mubr.bf16.mxu0 0
        %2283 = vmatmul.mubr.bf16.gmra.mrb[0].mxu0 %v2128
        %v2284 = vpop.f32.mrb[0].mxu0
        %v2285 = vadd.f32 0.0, %v2284
        %v2286 = vpop.f32.mrb[0].mxu0
        %v2287 = vpop.f32.mrb[0].mxu0
        %v2288 = vadd.f32 0.0, %v2287
        %v2289 = vpop.f32.mrb[0].mxu0
        %2290 = vdwg.mxu0
        %v2291 = vsub.f32 0.0, %v2165
        %v2292 = vsub.f32 0.0, %v2168
        %v2293 = vsub.f32 0.0, %v2173
        %v2294 = vsub.f32 0.0, %v2176
        %v2295 = vsub.f32 0.0, %v2181
        %v2296 = vsub.f32 0.0, %v2184
        %v2297 = vsub.f32 0.0, %v2189
        %v2298 = vsub.f32 0.0, %v2192
        %v2299 = vsub.f32 0.0, %v2197
        %v2300 = vsub.f32 0.0, %v2200
        %v2301 = vsub.f32 0.0, %v2205
        %v2302 = vsub.f32 0.0, %v2208
        %v2303 = vsub.f32 0.0, %v2213
        %v2304 = vsub.f32 0.0, %v2216
        %v2305 = vsub.f32 0.0, %v2221
        %v2306 = vsub.f32 0.0, %v2224
        %v2307 = vsub.f32 0.0, %v2229
        %v2308 = vsub.f32 0.0, %v2232
        %v2309 = vsub.f32 0.0, %v2237
        %v2310 = vsub.f32 0.0, %v2240
        %v2311 = vsub.f32 0.0, %v2245
        %v2312 = vsub.f32 0.0, %v2248
        %v2313 = vsub.f32 0.0, %v2253
        %v2314 = vsub.f32 0.0, %v2256
        %v2315 = vsub.f32 0.0, %v2261
        %v2316 = vsub.f32 0.0, %v2264
        %v2317 = vsub.f32 0.0, %v2269
        %v2318 = vsub.f32 0.0, %v2272
        %v2319 = vsub.f32 0.0, %v2277
        %v2320 = vsub.f32 0.0, %v2280
        %v2321 = vsub.f32 0.0, %v2285
        %v2322 = vsub.f32 0.0, %v2288
        %v2323 = vmul.f32 %v2291, 1.442695
        %v2324 = vpow.pop %v2323
        %v2325 = vmul.f32 %v2292, 1.442695
        %v2326 = vpow.pop %v2325
        %v2327 = vmul.f32 %v2293, 1.442695
        %v2328 = vpow.pop %v2327
        %v2329 = vmul.f32 %v2294, 1.442695
        %v2330 = vpow.pop %v2329
        %v2331 = vmul.f32 %v2295, 1.442695
        %v2332 = vpow.pop %v2331
        %v2333 = vmul.f32 %v2296, 1.442695
        %v2334 = vpow.pop %v2333
        %v2335 = vmul.f32 %v2297, 1.442695
        %v2336 = vpow.pop %v2335
        %v2337 = vmul.f32 %v2298, 1.442695
        %v2338 = vpow.pop %v2337
        %v2339 = vmul.f32 %v2299, 1.442695
        %v2340 = vpow.pop %v2339
        %v2341 = vmul.f32 %v2300, 1.442695
        %v2342 = vpow.pop %v2341
        %v2343 = vmul.f32 %v2301, 1.442695
        %v2344 = vpow.pop %v2343
        %v2345 = vmul.f32 %v2302, 1.442695
        %v2346 = vpow.pop %v2345
        %v2347 = vmul.f32 %v2303, 1.442695
        %v2348 = vpow.pop %v2347
        %v2349 = vmul.f32 %v2304, 1.442695
        %v2350 = vpow.pop %v2349
        %v2351 = vmul.f32 %v2305, 1.442695
        %v2352 = vpow.pop %v2351
        %v2353 = vmul.f32 %v2306, 1.442695
        %v2354 = vpow.pop %v2353
        %v2355 = vmul.f32 %v2307, 1.442695
        %v2356 = vpow.pop %v2355
        %v2357 = vmul.f32 %v2308, 1.442695
        %v2358 = vpow.pop %v2357
        %v2359 = vmul.f32 %v2309, 1.442695
        %v2360 = vpow.pop %v2359
        %v2361 = vmul.f32 %v2310, 1.442695
        %v2362 = vpow.pop %v2361
        %v2363 = vmul.f32 %v2311, 1.442695
        %v2364 = vpow.pop %v2363
        %v2365 = vmul.f32 %v2312, 1.442695
        %v2366 = vpow.pop %v2365
        %v2367 = vmul.f32 %v2313, 1.442695
        %v2368 = vpow.pop %v2367
        %v2369 = vmul.f32 %v2314, 1.442695
        %v2370 = vpow.pop %v2369
        %v2371 = vmul.f32 %v2315, 1.442695
        %v2372 = vpow.pop %v2371
        %v2373 = vmul.f32 %v2316, 1.442695
        %v2374 = vpow.pop %v2373
        %v2375 = vmul.f32 %v2317, 1.442695
        %v2376 = vpow.pop %v2375
        %v2377 = vmul.f32 %v2318, 1.442695
        %v2378 = vpow.pop %v2377
        %v2379 = vmul.f32 %v2319, 1.442695
        %v2380 = vpow.pop %v2379
        %v2381 = vmul.f32 %v2320, 1.442695
        %v2382 = vpow.pop %v2381
        %v2383 = vmul.f32 %v2321, 1.442695
        %v2384 = vpow.pop %v2383
        %v2385 = vmul.f32 %v2322, 1.442695
        %v2386 = vpow.pop %v2385
        %v2387 = vadd.f32 %v2324, 1.0
        %v2388 = vadd.f32 %v2326, 1.0
        %v2389 = vadd.f32 %v2328, 1.0
        %v2390 = vadd.f32 %v2330, 1.0
        %v2391 = vadd.f32 %v2332, 1.0
        %v2392 = vadd.f32 %v2334, 1.0
        %v2393 = vadd.f32 %v2336, 1.0
        %v2394 = vadd.f32 %v2338, 1.0
        %v2395 = vadd.f32 %v2340, 1.0
        %v2396 = vadd.f32 %v2342, 1.0
        %v2397 = vadd.f32 %v2344, 1.0
        %v2398 = vadd.f32 %v2346, 1.0
        %v2399 = vadd.f32 %v2348, 1.0
        %v2400 = vadd.f32 %v2350, 1.0
        %v2401 = vadd.f32 %v2352, 1.0
        %v2402 = vadd.f32 %v2354, 1.0
        %v2403 = vadd.f32 %v2356, 1.0
        %v2404 = vadd.f32 %v2358, 1.0
        %v2405 = vadd.f32 %v2360, 1.0
        %v2406 = vadd.f32 %v2362, 1.0
        %v2407 = vadd.f32 %v2364, 1.0
        %v2408 = vadd.f32 %v2366, 1.0
        %v2409 = vadd.f32 %v2368, 1.0
        %v2410 = vadd.f32 %v2370, 1.0
        %v2411 = vadd.f32 %v2372, 1.0
        %v2412 = vadd.f32 %v2374, 1.0
        %v2413 = vadd.f32 %v2376, 1.0
        %v2414 = vadd.f32 %v2378, 1.0
        %v2415 = vadd.f32 %v2380, 1.0
        %v2416 = vadd.f32 %v2382, 1.0
        %v2417 = vadd.f32 %v2384, 1.0
        %v2418 = vadd.f32 %v2386, 1.0
        %v2419 = vrcp.pop %v2387
        %v2420 = vmul.f32 1.0, %v2419
        %v2421 = vrcp.pop %v2388
        %v2422 = vmul.f32 1.0, %v2421
        %v2423 = vrcp.pop %v2389
        %v2424 = vmul.f32 1.0, %v2423
        %v2425 = vrcp.pop %v2390
        %v2426 = vmul.f32 1.0, %v2425
        %v2427 = vrcp.pop %v2391
        %v2428 = vmul.f32 1.0, %v2427
        %v2429 = vrcp.pop %v2392
        %v2430 = vmul.f32 1.0, %v2429
        %v2431 = vrcp.pop %v2393
        %v2432 = vmul.f32 1.0, %v2431
        %v2433 = vrcp.pop %v2394
        %v2434 = vmul.f32 1.0, %v2433
        %v2435 = vrcp.pop %v2395
        %v2436 = vmul.f32 1.0, %v2435
        %v2437 = vrcp.pop %v2396
        %v2438 = vmul.f32 1.0, %v2437
        %v2439 = vrcp.pop %v2397
        %v2440 = vmul.f32 1.0, %v2439
        %v2441 = vrcp.pop %v2398
        %v2442 = vmul.f32 1.0, %v2441
        %v2443 = vrcp.pop %v2399
        %v2444 = vmul.f32 1.0, %v2443
        %v2445 = vrcp.pop %v2400
        %v2446 = vmul.f32 1.0, %v2445
        %v2447 = vrcp.pop %v2401
        %v2448 = vmul.f32 1.0, %v2447
        %v2449 = vrcp.pop %v2402
        %v2450 = vmul.f32 1.0, %v2449
        %v2451 = vrcp.pop %v2403
        %v2452 = vmul.f32 1.0, %v2451
        %v2453 = vrcp.pop %v2404
        %v2454 = vmul.f32 1.0, %v2453
        %v2455 = vrcp.pop %v2405
        %v2456 = vmul.f32 1.0, %v2455
        %v2457 = vrcp.pop %v2406
        %v2458 = vmul.f32 1.0, %v2457
        %v2459 = vrcp.pop %v2407
        %v2460 = vmul.f32 1.0, %v2459
        %v2461 = vrcp.pop %v2408
        %v2462 = vmul.f32 1.0, %v2461
        %v2463 = vrcp.pop %v2409
        %v2464 = vmul.f32 1.0, %v2463
        %v2465 = vrcp.pop %v2410
        %v2466 = vmul.f32 1.0, %v2465
        %v2467 = vrcp.pop %v2411
        %v2468 = vmul.f32 1.0, %v2467
        %v2469 = vrcp.pop %v2412
        %v2470 = vmul.f32 1.0, %v2469
        %v2471 = vrcp.pop %v2413
        %v2472 = vmul.f32 1.0, %v2471
        %v2473 = vrcp.pop %v2414
        %v2474 = vmul.f32 1.0, %v2473
        %v2475 = vrcp.pop %v2415
        %v2476 = vmul.f32 1.0, %v2475
        %v2477 = vrcp.pop %v2416
        %v2478 = vmul.f32 1.0, %v2477
        %v2479 = vrcp.pop %v2417
        %v2480 = vmul.f32 1.0, %v2479
        %v2481 = vrcp.pop %v2418
        %v2482 = vmul.f32 1.0, %v2481
        %v2483 = vmul.f32 %v2165, %v2420
        %v2484 = vmul.f32 %v2168, %v2422
        %v2485 = vmul.f32 %v2173, %v2424
        %v2486 = vmul.f32 %v2176, %v2426
        %v2487 = vmul.f32 %v2181, %v2428
        %v2488 = vmul.f32 %v2184, %v2430
        %v2489 = vmul.f32 %v2189, %v2432
        %v2490 = vmul.f32 %v2192, %v2434
        %v2491 = vmul.f32 %v2197, %v2436
        %v2492 = vmul.f32 %v2200, %v2438
        %v2493 = vmul.f32 %v2205, %v2440
        %v2494 = vmul.f32 %v2208, %v2442
        %v2495 = vmul.f32 %v2213, %v2444
        %v2496 = vmul.f32 %v2216, %v2446
        %v2497 = vmul.f32 %v2221, %v2448
        %v2498 = vmul.f32 %v2224, %v2450
        %v2499 = vmul.f32 %v2229, %v2452
        %v2500 = vmul.f32 %v2232, %v2454
        %v2501 = vmul.f32 %v2237, %v2456
        %v2502 = vmul.f32 %v2240, %v2458
        %v2503 = vmul.f32 %v2245, %v2460
        %v2504 = vmul.f32 %v2248, %v2462
        %v2505 = vmul.f32 %v2253, %v2464
        %v2506 = vmul.f32 %v2256, %v2466
        %v2507 = vmul.f32 %v2261, %v2468
        %v2508 = vmul.f32 %v2264, %v2470
        %v2509 = vmul.f32 %v2269, %v2472
        %v2510 = vmul.f32 %v2272, %v2474
        %v2511 = vmul.f32 %v2277, %v2476
        %v2512 = vmul.f32 %v2280, %v2478
        %v2513 = vmul.f32 %v2285, %v2480
        %v2514 = vmul.f32 %v2288, %v2482
        %v2515 = vadd.f32 %v1521, %v2483
        %v2516 = vadd.f32 %v1522, %v2484
        %v2517 = vadd.f32 %v1523, %v2485
        %v2518 = vadd.f32 %v1524, %v2486
        %v2519 = vadd.f32 %v1525, %v2487
        %v2520 = vadd.f32 %v1526, %v2488
        %v2521 = vadd.f32 %v1527, %v2489
        %v2522 = vadd.f32 %v1528, %v2490
        %v2523 = vadd.f32 %v1529, %v2491
        %v2524 = vadd.f32 %v1530, %v2492
        %v2525 = vadd.f32 %v1531, %v2493
        %v2526 = vadd.f32 %v1532, %v2494
        %v2527 = vadd.f32 %v1533, %v2495
        %v2528 = vadd.f32 %v1534, %v2496
        %v2529 = vadd.f32 %v1535, %v2497
        %v2530 = vadd.f32 %v1536, %v2498
        %v2531 = vadd.f32 %v1537, %v2499
        %v2532 = vadd.f32 %v1538, %v2500
        %v2533 = vadd.f32 %v1539, %v2501
        %v2534 = vadd.f32 %v1540, %v2502
        %v2535 = vadd.f32 %v1541, %v2503
        %v2536 = vadd.f32 %v1542, %v2504
        %v2537 = vadd.f32 %v1543, %v2505
        %v2538 = vadd.f32 %v1544, %v2506
        %v2539 = vadd.f32 %v1545, %v2507
        %v2540 = vadd.f32 %v1546, %v2508
        %v2541 = vadd.f32 %v1547, %v2509
        %v2542 = vadd.f32 %v1548, %v2510
        %v2543 = vadd.f32 %v1549, %v2511
        %v2544 = vadd.f32 %v1550, %v2512
        %v2545 = vadd.f32 %v1551, %v2513
        %v2546 = vadd.f32 %v1552, %v2514
        %v2547 = vmul.f32 %v2515, 0.70710677
        %v2548 = vmul.f32 %v2516, 0.70710677
        %v2549 = vmul.f32 %v2517, 0.70710677
        %v2550 = vmul.f32 %v2518, 0.70710677
        %v2551 = vmul.f32 %v2519, 0.70710677
        %v2552 = vmul.f32 %v2520, 0.70710677
        %v2553 = vmul.f32 %v2521, 0.70710677
        %v2554 = vmul.f32 %v2522, 0.70710677
        %v2555 = vmul.f32 %v2523, 0.70710677
        %v2556 = vmul.f32 %v2524, 0.70710677
        %v2557 = vmul.f32 %v2525, 0.70710677
        %v2558 = vmul.f32 %v2526, 0.70710677
        %v2559 = vmul.f32 %v2527, 0.70710677
        %v2560 = vmul.f32 %v2528, 0.70710677
        %v2561 = vmul.f32 %v2529, 0.70710677
        %v2562 = vmul.f32 %v2530, 0.70710677
        %v2563 = vmul.f32 %v2531, 0.70710677
        %v2564 = vmul.f32 %v2532, 0.70710677
        %v2565 = vmul.f32 %v2533, 0.70710677
        %v2566 = vmul.f32 %v2534, 0.70710677
        %v2567 = vmul.f32 %v2535, 0.70710677
        %v2568 = vmul.f32 %v2536, 0.70710677
        %v2569 = vmul.f32 %v2537, 0.70710677
        %v2570 = vmul.f32 %v2538, 0.70710677
        %v2571 = vmul.f32 %v2539, 0.70710677
        %v2572 = vmul.f32 %v2540, 0.70710677
        %v2573 = vmul.f32 %v2541, 0.70710677
        %v2574 = vmul.f32 %v2542, 0.70710677
        %v2575 = vmul.f32 %v2543, 0.70710677
        %v2576 = vmul.f32 %v2544, 0.70710677
        %v2577 = vmul.f32 %v2545, 0.70710677
        %v2578 = vmul.f32 %v2546, 0.70710677
        %v2579 = vpack.c.bf16 %v2548, %v2547
        %v2580 = vpack.c.bf16 %v2550, %v2549
        %v2581 = vpack.c.bf16 %v2552, %v2551
        %v2582 = vpack.c.bf16 %v2554, %v2553
        %v2583 = vpack.c.bf16 %v2556, %v2555
        %v2584 = vpack.c.bf16 %v2558, %v2557
        %v2585 = vpack.c.bf16 %v2560, %v2559
        %v2586 = vpack.c.bf16 %v2562, %v2561
        %v2587 = vpack.c.bf16 %v2564, %v2563
        %v2588 = vpack.c.bf16 %v2566, %v2565
        %v2589 = vpack.c.bf16 %v2568, %v2567
        %v2590 = vpack.c.bf16 %v2570, %v2569
        %v2591 = vpack.c.bf16 %v2572, %v2571
        %v2592 = vpack.c.bf16 %v2574, %v2573
        %v2593 = vpack.c.bf16 %v2576, %v2575
        %v2594 = vpack.c.bf16 %v2578, %v2577
        %v2595 = vld [vmem:[%s13] sm:$0xf]
        %v2596 = vld [vmem:[%s13 + $0x4] sm:$0xf]
        %v2597 = vld [vmem:[%s13 + $0x8] sm:$0xf]
        %v2598 = vld [vmem:[%s13 + $0xc] sm:$0xf]
        %v2599 = vld [vmem:[%s13 + $0x10] sm:$0xf]
        %v2600 = vld [vmem:[%s13 + $0x14] sm:$0xf]
        %v2601 = vld [vmem:[%s13 + $0x18] sm:$0xf]
        %v2602 = vld [vmem:[%s13 + $0x1c] sm:$0xf]
        %v2611 = vunpack.c.l.b16 %v2595
        %v2612 = vunpack.c.l.b16 %v2596
        %v2613 = vunpack.c.l.b16 %v2597
        %v2614 = vunpack.c.l.b16 %v2598
        %v2615 = vunpack.c.l.b16 %v2599
        %v2616 = vunpack.c.l.b16 %v2600
        %v2617 = vunpack.c.l.b16 %v2601
        %v2618 = vunpack.c.l.b16 %v2602
        %v2619 = vpack.c.b16 %v2612, %v2611
        %v2620 = vpack.c.b16 %v2614, %v2613
        %v2621 = vpack.c.b16 %v2616, %v2615
        %v2622 = vpack.c.b16 %v2618, %v2617
        %v2628 = vsel %vm1080, %v2579, 0
        %v2631 = vsel %vm1080, %v2580, 0
        %v2634 = vsel %vm1080, %v2581, 0
        %v2637 = vsel %vm1080, %v2582, 0
        %v2640 = vsel %vm1080, %v2583, 0
        %v2643 = vsel %vm1080, %v2584, 0
        %v2646 = vsel %vm1080, %v2585, 0
        %v2649 = vsel %vm1080, %v2586, 0
        %v2652 = vsel %vm1080, %v2587, 0
        %v2655 = vsel %vm1080, %v2588, 0
        %v2658 = vsel %vm1080, %v2589, 0
        %v2661 = vsel %vm1080, %v2590, 0
        %v2664 = vsel %vm1080, %v2591, 0
        %v2667 = vsel %vm1080, %v2592, 0
        %v2670 = vsel %vm1080, %v2593, 0
        %v2673 = vsel %vm1080, %v2594, 0
        %2675 = vmatprep.subr.bf16.mxu0 0
        %2676 = vmatpush1.bf16.msra.mxu0 %v2619
        %2677 = vmatprep.subr.bf16.mxu0 0
        %2678 = vmatpush1.bf16.msra.mxu0 %v2620
        %2679 = vmatprep.subr.bf16.mxu0 0
        %2680 = vmatpush1.bf16.msra.mxu0 %v2621
        %2681 = vmatprep.subr.bf16.mxu0 0
        %2682 = vmatpush1.bf16.msra.mxu0 %v2622
        %2683 = vmatprep.subr.bf16.mxu0 0
        %2684 = vmatpush1.bf16.msra.mxu0 0
        %2685 = vmatprep.subr.bf16.mxu0 0
        %2686 = vmatpush1.bf16.msra.mxu0 0
        %2687 = vmatprep.subr.bf16.mxu0 0
        %2688 = vmatpush1.bf16.msra.mxu0 0
        %2689 = vmatprep.subr.bf16.mxu0 0
        %2690 = vmatpush1.bf16.msra.mxu0 0
        %2691 = vmatprep.subr.bf16.mxu0 0
        %2692 = vmatpush1.bf16.msra.mxu0 0
        %2693 = vmatprep.subr.bf16.mxu0 0
        %2694 = vmatpush1.bf16.msra.mxu0 0
        %2695 = vmatprep.subr.bf16.mxu0 0
        %2696 = vmatpush1.bf16.msra.mxu0 0
        %2697 = vmatprep.subr.bf16.mxu0 0
        %2698 = vmatpush1.bf16.msra.mxu0 0
        %2699 = vmatprep.subr.bf16.mxu0 0
        %2700 = vmatpush1.bf16.msra.mxu0 0
        %2701 = vmatprep.subr.bf16.mxu0 0
        %2702 = vmatpush1.bf16.msra.mxu0 0
        %2703 = vmatprep.subr.bf16.mxu0 0
        %2704 = vmatpush1.bf16.msra.mxu0 0
        %2705 = vmatprep.subr.bf16.mxu0 0
        %2706 = vmatpush1.bf16.msra.mxu0 0
        %2707 = vmatprep.mubr.bf16.mxu0 0
        %2708 = vmatmul.mubr.bf16.gmra.mrb[0].mxu0 %v2628
        %v2709 = vpop.f32.mrb[0].mxu0
        %v2710 = vadd.f32 0.0, %v2709
        %v2711 = vpop.f32.mrb[0].mxu0
        %v2712 = vpop.f32.mrb[0].mxu0
        %v2713 = vadd.f32 0.0, %v2712
        %v2714 = vpop.f32.mrb[0].mxu0
        %2715 = vmatprep.mubr.bf16.mxu0 0
        %2716 = vmatmul.mubr.bf16.gmra.mrb[0].mxu0 %v2631
        %v2717 = vpop.f32.mrb[0].mxu0
        %v2718 = vadd.f32 0.0, %v2717
        %v2719 = vpop.f32.mrb[0].mxu0
        %v2720 = vpop.f32.mrb[0].mxu0
        %v2721 = vadd.f32 0.0, %v2720
        %v2722 = vpop.f32.mrb[0].mxu0
        %2723 = vmatprep.mubr.bf16.mxu0 0
        %2724 = vmatmul.mubr.bf16.gmra.mrb[0].mxu0 %v2634
        %v2725 = vpop.f32.mrb[0].mxu0
        %v2726 = vadd.f32 0.0, %v2725
        %v2727 = vpop.f32.mrb[0].mxu0
        %v2728 = vpop.f32.mrb[0].mxu0
        %v2729 = vadd.f32 0.0, %v2728
        %v2730 = vpop.f32.mrb[0].mxu0
        %2731 = vmatprep.mubr.bf16.mxu0 0
        %2732 = vmatmul.mubr.bf16.gmra.mrb[0].mxu0 %v2637
        %v2733 = vpop.f32.mrb[0].mxu0
        %v2734 = vadd.f32 0.0, %v2733
        %v2735 = vpop.f32.mrb[0].mxu0
        %v2736 = vpop.f32.mrb[0].mxu0
        %v2737 = vadd.f32 0.0, %v2736
        %v2738 = vpop.f32.mrb[0].mxu0
        %2739 = vmatprep.mubr.bf16.mxu0 0
        %2740 = vmatmul.mubr.bf16.gmra.mrb[0].mxu0 %v2640
        %v2741 = vpop.f32.mrb[0].mxu0
        %v2742 = vadd.f32 0.0, %v2741
        %v2743 = vpop.f32.mrb[0].mxu0
        %v2744 = vpop.f32.mrb[0].mxu0
        %v2745 = vadd.f32 0.0, %v2744
        %v2746 = vpop.f32.mrb[0].mxu0
        %2747 = vmatprep.mubr.bf16.mxu0 0
        %2748 = vmatmul.mubr.bf16.gmra.mrb[0].mxu0 %v2643
        %v2749 = vpop.f32.mrb[0].mxu0
        %v2750 = vadd.f32 0.0, %v2749
        %v2751 = vpop.f32.mrb[0].mxu0
        %v2752 = vpop.f32.mrb[0].mxu0
        %v2753 = vadd.f32 0.0, %v2752
        %v2754 = vpop.f32.mrb[0].mxu0
        %2755 = vmatprep.mubr.bf16.mxu0 0
        %2756 = vmatmul.mubr.bf16.gmra.mrb[0].mxu0 %v2646
        %v2757 = vpop.f32.mrb[0].mxu0
        %v2758 = vadd.f32 0.0, %v2757
        %v2759 = vpop.f32.mrb[0].mxu0
        %v2760 = vpop.f32.mrb[0].mxu0
        %v2761 = vadd.f32 0.0, %v2760
        %v2762 = vpop.f32.mrb[0].mxu0
        %2763 = vmatprep.mubr.bf16.mxu0 0
        %2764 = vmatmul.mubr.bf16.gmra.mrb[0].mxu0 %v2649
        %v2765 = vpop.f32.mrb[0].mxu0
        %v2766 = vadd.f32 0.0, %v2765
        %v2767 = vpop.f32.mrb[0].mxu0
        %v2768 = vpop.f32.mrb[0].mxu0
        %v2769 = vadd.f32 0.0, %v2768
        %v2770 = vpop.f32.mrb[0].mxu0
        %2771 = vmatprep.mubr.bf16.mxu0 0
        %2772 = vmatmul.mubr.bf16.gmra.mrb[0].mxu0 %v2652
        %v2773 = vpop.f32.mrb[0].mxu0
        %v2774 = vadd.f32 0.0, %v2773
        %v2775 = vpop.f32.mrb[0].mxu0
        %v2776 = vpop.f32.mrb[0].mxu0
        %v2777 = vadd.f32 0.0, %v2776
        %v2778 = vpop.f32.mrb[0].mxu0
        %2779 = vmatprep.mubr.bf16.mxu0 0
        %2780 = vmatmul.mubr.bf16.gmra.mrb[0].mxu0 %v2655
        %v2781 = vpop.f32.mrb[0].mxu0
        %v2782 = vadd.f32 0.0, %v2781
        %v2783 = vpop.f32.mrb[0].mxu0
        %v2784 = vpop.f32.mrb[0].mxu0
        %v2785 = vadd.f32 0.0, %v2784
        %v2786 = vpop.f32.mrb[0].mxu0
        %2787 = vmatprep.mubr.bf16.mxu0 0
        %2788 = vmatmul.mubr.bf16.gmra.mrb[0].mxu0 %v2658
        %v2789 = vpop.f32.mrb[0].mxu0
        %v2790 = vadd.f32 0.0, %v2789
        %v2791 = vpop.f32.mrb[0].mxu0
        %v2792 = vpop.f32.mrb[0].mxu0
        %v2793 = vadd.f32 0.0, %v2792
        %v2794 = vpop.f32.mrb[0].mxu0
        %2795 = vmatprep.mubr.bf16.mxu0 0
        %2796 = vmatmul.mubr.bf16.gmra.mrb[0].mxu0 %v2661
        %v2797 = vpop.f32.mrb[0].mxu0
        %v2798 = vadd.f32 0.0, %v2797
        %v2799 = vpop.f32.mrb[0].mxu0
        %v2800 = vpop.f32.mrb[0].mxu0
        %v2801 = vadd.f32 0.0, %v2800
        %v2802 = vpop.f32.mrb[0].mxu0
        %2803 = vmatprep.mubr.bf16.mxu0 0
        %2804 = vmatmul.mubr.bf16.gmra.mrb[0].mxu0 %v2664
        %v2805 = vpop.f32.mrb[0].mxu0
        %v2806 = vadd.f32 0.0, %v2805
        %v2807 = vpop.f32.mrb[0].mxu0
        %v2808 = vpop.f32.mrb[0].mxu0
        %v2809 = vadd.f32 0.0, %v2808
        %v2810 = vpop.f32.mrb[0].mxu0
        %2811 = vmatprep.mubr.bf16.mxu0 0
        %2812 = vmatmul.mubr.bf16.gmra.mrb[0].mxu0 %v2667
        %v2813 = vpop.f32.mrb[0].mxu0
        %v2814 = vadd.f32 0.0, %v2813
        %v2815 = vpop.f32.mrb[0].mxu0
        %v2816 = vpop.f32.mrb[0].mxu0
        %v2817 = vadd.f32 0.0, %v2816
        %v2818 = vpop.f32.mrb[0].mxu0
        %2819 = vmatprep.mubr.bf16.mxu0 0
        %2820 = vmatmul.mubr.bf16.gmra.mrb[0].mxu0 %v2670
        %v2821 = vpop.f32.mrb[0].mxu0
        %v2822 = vadd.f32 0.0, %v2821
        %v2823 = vpop.f32.mrb[0].mxu0
        %v2824 = vpop.f32.mrb[0].mxu0
        %v2825 = vadd.f32 0.0, %v2824
        %v2826 = vpop.f32.mrb[0].mxu0
        %2827 = vmatprep.mubr.bf16.mxu0 0
        %2828 = vmatmul.mubr.bf16.gmra.mrb[0].mxu0 %v2673
        %v2829 = vpop.f32.mrb[0].mxu0
        %v2830 = vadd.f32 0.0, %v2829
        %v2831 = vpop.f32.mrb[0].mxu0
        %v2832 = vpop.f32.mrb[0].mxu0
        %v2833 = vadd.f32 0.0, %v2832
        %v2834 = vpop.f32.mrb[0].mxu0
        %2835 = vdwg.mxu0
        %v2836 = vsub.f32 0.0, %v2710
        %v2837 = vsub.f32 0.0, %v2713
        %v2838 = vsub.f32 0.0, %v2718
        %v2839 = vsub.f32 0.0, %v2721
        %v2840 = vsub.f32 0.0, %v2726
        %v2841 = vsub.f32 0.0, %v2729
        %v2842 = vsub.f32 0.0, %v2734
        %v2843 = vsub.f32 0.0, %v2737
        %v2844 = vsub.f32 0.0, %v2742
        %v2845 = vsub.f32 0.0, %v2745
        %v2846 = vsub.f32 0.0, %v2750
        %v2847 = vsub.f32 0.0, %v2753
        %v2848 = vsub.f32 0.0, %v2758
        %v2849 = vsub.f32 0.0, %v2761
        %v2850 = vsub.f32 0.0, %v2766
        %v2851 = vsub.f32 0.0, %v2769
        %v2852 = vsub.f32 0.0, %v2774
        %v2853 = vsub.f32 0.0, %v2777
        %v2854 = vsub.f32 0.0, %v2782
        %v2855 = vsub.f32 0.0, %v2785
        %v2856 = vsub.f32 0.0, %v2790
        %v2857 = vsub.f32 0.0, %v2793
        %v2858 = vsub.f32 0.0, %v2798
        %v2859 = vsub.f32 0.0, %v2801
        %v2860 = vsub.f32 0.0, %v2806
        %v2861 = vsub.f32 0.0, %v2809
        %v2862 = vsub.f32 0.0, %v2814
        %v2863 = vsub.f32 0.0, %v2817
        %v2864 = vsub.f32 0.0, %v2822
        %v2865 = vsub.f32 0.0, %v2825
        %v2866 = vsub.f32 0.0, %v2830
        %v2867 = vsub.f32 0.0, %v2833
        %v2868 = vmul.f32 %v2836, 1.442695
        %v2869 = vpow.pop %v2868
        %v2870 = vmul.f32 %v2837, 1.442695
        %v2871 = vpow.pop %v2870
        %v2872 = vmul.f32 %v2838, 1.442695
        %v2873 = vpow.pop %v2872
        %v2874 = vmul.f32 %v2839, 1.442695
        %v2875 = vpow.pop %v2874
        %v2876 = vmul.f32 %v2840, 1.442695
        %v2877 = vpow.pop %v2876
        %v2878 = vmul.f32 %v2841, 1.442695
        %v2879 = vpow.pop %v2878
        %v2880 = vmul.f32 %v2842, 1.442695
        %v2881 = vpow.pop %v2880
        %v2882 = vmul.f32 %v2843, 1.442695
        %v2883 = vpow.pop %v2882
        %v2884 = vmul.f32 %v2844, 1.442695
        %v2885 = vpow.pop %v2884
        %v2886 = vmul.f32 %v2845, 1.442695
        %v2887 = vpow.pop %v2886
        %v2888 = vmul.f32 %v2846, 1.442695
        %v2889 = vpow.pop %v2888
        %v2890 = vmul.f32 %v2847, 1.442695
        %v2891 = vpow.pop %v2890
        %v2892 = vmul.f32 %v2848, 1.442695
        %v2893 = vpow.pop %v2892
        %v2894 = vmul.f32 %v2849, 1.442695
        %v2895 = vpow.pop %v2894
        %v2896 = vmul.f32 %v2850, 1.442695
        %v2897 = vpow.pop %v2896
        %v2898 = vmul.f32 %v2851, 1.442695
        %v2899 = vpow.pop %v2898
        %v2900 = vmul.f32 %v2852, 1.442695
        %v2901 = vpow.pop %v2900
        %v2902 = vmul.f32 %v2853, 1.442695
        %v2903 = vpow.pop %v2902
        %v2904 = vmul.f32 %v2854, 1.442695
        %v2905 = vpow.pop %v2904
        %v2906 = vmul.f32 %v2855, 1.442695
        %v2907 = vpow.pop %v2906
        %v2908 = vmul.f32 %v2856, 1.442695
        %v2909 = vpow.pop %v2908
        %v2910 = vmul.f32 %v2857, 1.442695
        %v2911 = vpow.pop %v2910
        %v2912 = vmul.f32 %v2858, 1.442695
        %v2913 = vpow.pop %v2912
        %v2914 = vmul.f32 %v2859, 1.442695
        %v2915 = vpow.pop %v2914
        %v2916 = vmul.f32 %v2860, 1.442695
        %v2917 = vpow.pop %v2916
        %v2918 = vmul.f32 %v2861, 1.442695
        %v2919 = vpow.pop %v2918
        %v2920 = vmul.f32 %v2862, 1.442695
        %v2921 = vpow.pop %v2920
        %v2922 = vmul.f32 %v2863, 1.442695
        %v2923 = vpow.pop %v2922
        %v2924 = vmul.f32 %v2864, 1.442695
        %v2925 = vpow.pop %v2924
        %v2926 = vmul.f32 %v2865, 1.442695
        %v2927 = vpow.pop %v2926
        %v2928 = vmul.f32 %v2866, 1.442695
        %v2929 = vpow.pop %v2928
        %v2930 = vmul.f32 %v2867, 1.442695
        %v2931 = vpow.pop %v2930
        %v2932 = vadd.f32 %v2869, 1.0
        %v2933 = vadd.f32 %v2871, 1.0
        %v2934 = vadd.f32 %v2873, 1.0
        %v2935 = vadd.f32 %v2875, 1.0
        %v2936 = vadd.f32 %v2877, 1.0
        %v2937 = vadd.f32 %v2879, 1.0
        %v2938 = vadd.f32 %v2881, 1.0
        %v2939 = vadd.f32 %v2883, 1.0
        %v2940 = vadd.f32 %v2885, 1.0
        %v2941 = vadd.f32 %v2887, 1.0
        %v2942 = vadd.f32 %v2889, 1.0
        %v2943 = vadd.f32 %v2891, 1.0
        %v2944 = vadd.f32 %v2893, 1.0
        %v2945 = vadd.f32 %v2895, 1.0
        %v2946 = vadd.f32 %v2897, 1.0
        %v2947 = vadd.f32 %v2899, 1.0
        %v2948 = vadd.f32 %v2901, 1.0
        %v2949 = vadd.f32 %v2903, 1.0
        %v2950 = vadd.f32 %v2905, 1.0
        %v2951 = vadd.f32 %v2907, 1.0
        %v2952 = vadd.f32 %v2909, 1.0
        %v2953 = vadd.f32 %v2911, 1.0
        %v2954 = vadd.f32 %v2913, 1.0
        %v2955 = vadd.f32 %v2915, 1.0
        %v2956 = vadd.f32 %v2917, 1.0
        %v2957 = vadd.f32 %v2919, 1.0
        %v2958 = vadd.f32 %v2921, 1.0
        %v2959 = vadd.f32 %v2923, 1.0
        %v2960 = vadd.f32 %v2925, 1.0
        %v2961 = vadd.f32 %v2927, 1.0
        %v2962 = vadd.f32 %v2929, 1.0
        %v2963 = vadd.f32 %v2931, 1.0
        %v2964 = vrcp.pop %v2932
        %v2965 = vmul.f32 1.0, %v2964
        %v2966 = vrcp.pop %v2933
        %v2967 = vmul.f32 1.0, %v2966
        %v2968 = vrcp.pop %v2934
        %v2969 = vmul.f32 1.0, %v2968
        %v2970 = vrcp.pop %v2935
        %v2971 = vmul.f32 1.0, %v2970
        %v2972 = vrcp.pop %v2936
        %v2973 = vmul.f32 1.0, %v2972
        %v2974 = vrcp.pop %v2937
        %v2975 = vmul.f32 1.0, %v2974
        %v2976 = vrcp.pop %v2938
        %v2977 = vmul.f32 1.0, %v2976
        %v2978 = vrcp.pop %v2939
        %v2979 = vmul.f32 1.0, %v2978
        %v2980 = vrcp.pop %v2940
        %v2981 = vmul.f32 1.0, %v2980
        %v2982 = vrcp.pop %v2941
        %v2983 = vmul.f32 1.0, %v2982
        %v2984 = vrcp.pop %v2942
        %v2985 = vmul.f32 1.0, %v2984
        %v2986 = vrcp.pop %v2943
        %v2987 = vmul.f32 1.0, %v2986
        %v2988 = vrcp.pop %v2944
        %v2989 = vmul.f32 1.0, %v2988
        %v2990 = vrcp.pop %v2945
        %v2991 = vmul.f32 1.0, %v2990
        %v2992 = vrcp.pop %v2946
        %v2993 = vmul.f32 1.0, %v2992
        %v2994 = vrcp.pop %v2947
        %v2995 = vmul.f32 1.0, %v2994
        %v2996 = vrcp.pop %v2948
        %v2997 = vmul.f32 1.0, %v2996
        %v2998 = vrcp.pop %v2949
        %v2999 = vmul.f32 1.0, %v2998
        %v3000 = vrcp.pop %v2950
        %v3001 = vmul.f32 1.0, %v3000
        %v3002 = vrcp.pop %v2951
        %v3003 = vmul.f32 1.0, %v3002
        %v3004 = vrcp.pop %v2952
        %v3005 = vmul.f32 1.0, %v3004
        %v3006 = vrcp.pop %v2953
        %v3007 = vmul.f32 1.0, %v3006
        %v3008 = vrcp.pop %v2954
        %v3009 = vmul.f32 1.0, %v3008
        %v3010 = vrcp.pop %v2955
        %v3011 = vmul.f32 1.0, %v3010
        %v3012 = vrcp.pop %v2956
        %v3013 = vmul.f32 1.0, %v3012
        %v3014 = vrcp.pop %v2957
        %v3015 = vmul.f32 1.0, %v3014
        %v3016 = vrcp.pop %v2958
        %v3017 = vmul.f32 1.0, %v3016
        %v3018 = vrcp.pop %v2959
        %v3019 = vmul.f32 1.0, %v3018
        %v3020 = vrcp.pop %v2960
        %v3021 = vmul.f32 1.0, %v3020
        %v3022 = vrcp.pop %v2961
        %v3023 = vmul.f32 1.0, %v3022
        %v3024 = vrcp.pop %v2962
        %v3025 = vmul.f32 1.0, %v3024
        %v3026 = vrcp.pop %v2963
        %v3027 = vmul.f32 1.0, %v3026
        %v3028 = vmul.f32 %v2710, %v2965
        %v3029 = vmul.f32 %v2713, %v2967
        %v3030 = vmul.f32 %v2718, %v2969
        %v3031 = vmul.f32 %v2721, %v2971
        %v3032 = vmul.f32 %v2726, %v2973
        %v3033 = vmul.f32 %v2729, %v2975
        %v3034 = vmul.f32 %v2734, %v2977
        %v3035 = vmul.f32 %v2737, %v2979
        %v3036 = vmul.f32 %v2742, %v2981
        %v3037 = vmul.f32 %v2745, %v2983
        %v3038 = vmul.f32 %v2750, %v2985
        %v3039 = vmul.f32 %v2753, %v2987
        %v3040 = vmul.f32 %v2758, %v2989
        %v3041 = vmul.f32 %v2761, %v2991
        %v3042 = vmul.f32 %v2766, %v2993
        %v3043 = vmul.f32 %v2769, %v2995
        %v3044 = vmul.f32 %v2774, %v2997
        %v3045 = vmul.f32 %v2777, %v2999
        %v3046 = vmul.f32 %v2782, %v3001
        %v3047 = vmul.f32 %v2785, %v3003
        %v3048 = vmul.f32 %v2790, %v3005
        %v3049 = vmul.f32 %v2793, %v3007
        %v3050 = vmul.f32 %v2798, %v3009
        %v3051 = vmul.f32 %v2801, %v3011
        %v3052 = vmul.f32 %v2806, %v3013
        %v3053 = vmul.f32 %v2809, %v3015
        %v3054 = vmul.f32 %v2814, %v3017
        %v3055 = vmul.f32 %v2817, %v3019
        %v3056 = vmul.f32 %v2822, %v3021
        %v3057 = vmul.f32 %v2825, %v3023
        %v3058 = vmul.f32 %v2830, %v3025
        %v3059 = vmul.f32 %v2833, %v3027
        %v3060 = vpack.c.bf16 %v3029, %v3028
        %v3061 = vpack.c.bf16 %v3031, %v3030
        %v3062 = vpack.c.bf16 %v3033, %v3032
        %v3063 = vpack.c.bf16 %v3035, %v3034
        %v3064 = vpack.c.bf16 %v3037, %v3036
        %v3065 = vpack.c.bf16 %v3039, %v3038
        %v3066 = vpack.c.bf16 %v3041, %v3040
        %v3067 = vpack.c.bf16 %v3043, %v3042
        %v3068 = vpack.c.bf16 %v3045, %v3044
        %v3069 = vpack.c.bf16 %v3047, %v3046
        %v3070 = vpack.c.bf16 %v3049, %v3048
        %v3071 = vpack.c.bf16 %v3051, %v3050
        %v3072 = vpack.c.bf16 %v3053, %v3052
        %v3073 = vpack.c.bf16 %v3055, %v3054
        %v3074 = vpack.c.bf16 %v3057, %v3056
        %v3075 = vpack.c.bf16 %v3059, %v3058
        %v3076 = vld [vmem:[%s14] sm:$0xf]
        %v3077 = vld [vmem:[%s14 + $0x4] sm:$0xf]
        %v3078 = vld [vmem:[%s14 + $0x8] sm:$0xf]
        %v3079 = vld [vmem:[%s14 + $0xc] sm:$0xf]
        %v3080 = vld [vmem:[%s14 + $0x10] sm:$0xf]
        %v3081 = vld [vmem:[%s14 + $0x14] sm:$0xf]
        %v3082 = vld [vmem:[%s14 + $0x18] sm:$0xf]
        %v3083 = vld [vmem:[%s14 + $0x1c] sm:$0xf]
        %v3092 = vunpack.c.l.b16 %v3076
        %v3093 = vunpack.c.l.b16 %v3077
        %v3094 = vunpack.c.l.b16 %v3078
        %v3095 = vunpack.c.l.b16 %v3079
        %v3096 = vunpack.c.l.b16 %v3080
        %v3097 = vunpack.c.l.b16 %v3081
        %v3098 = vunpack.c.l.b16 %v3082
        %v3099 = vunpack.c.l.b16 %v3083
        %v3100 = vpack.c.b16 %v3093, %v3092
        %v3101 = vpack.c.b16 %v3095, %v3094
        %v3102 = vpack.c.b16 %v3097, %v3096
        %v3103 = vpack.c.b16 %v3099, %v3098
        %v3109 = vsel %vm1080, %v3060, 0
        %v3112 = vsel %vm1080, %v3061, 0
        %v3115 = vsel %vm1080, %v3062, 0
        %v3118 = vsel %vm1080, %v3063, 0
        %v3121 = vsel %vm1080, %v3064, 0
        %v3124 = vsel %vm1080, %v3065, 0
        %v3127 = vsel %vm1080, %v3066, 0
        %v3130 = vsel %vm1080, %v3067, 0
        %v3133 = vsel %vm1080, %v3068, 0
        %v3136 = vsel %vm1080, %v3069, 0
        %v3139 = vsel %vm1080, %v3070, 0
        %v3142 = vsel %vm1080, %v3071, 0
        %v3145 = vsel %vm1080, %v3072, 0
        %v3148 = vsel %vm1080, %v3073, 0
        %v3151 = vsel %vm1080, %v3074, 0
        %v3154 = vsel %vm1080, %v3075, 0
        %3156 = vmatprep.subr.bf16.mxu0 0
        %3157 = vmatpush1.bf16.msra.mxu0 %v3100
        %3158 = vmatprep.subr.bf16.mxu0 0
        %3159 = vmatpush1.bf16.msra.mxu0 %v3101
        %3160 = vmatprep.subr.bf16.mxu0 0
        %3161 = vmatpush1.bf16.msra.mxu0 %v3102
        %3162 = vmatprep.subr.bf16.mxu0 0
        %3163 = vmatpush1.bf16.msra.mxu0 %v3103
        %3164 = vmatprep.subr.bf16.mxu0 0
        %3165 = vmatpush1.bf16.msra.mxu0 0
        %3166 = vmatprep.subr.bf16.mxu0 0
        %3167 = vmatpush1.bf16.msra.mxu0 0
        %3168 = vmatprep.subr.bf16.mxu0 0
        %3169 = vmatpush1.bf16.msra.mxu0 0
        %3170 = vmatprep.subr.bf16.mxu0 0
        %3171 = vmatpush1.bf16.msra.mxu0 0
        %3172 = vmatprep.subr.bf16.mxu0 0
        %3173 = vmatpush1.bf16.msra.mxu0 0
        %3174 = vmatprep.subr.bf16.mxu0 0
        %3175 = vmatpush1.bf16.msra.mxu0 0
        %3176 = vmatprep.subr.bf16.mxu0 0
        %3177 = vmatpush1.bf16.msra.mxu0 0
        %3178 = vmatprep.subr.bf16.mxu0 0
        %3179 = vmatpush1.bf16.msra.mxu0 0
        %3180 = vmatprep.subr.bf16.mxu0 0
        %3181 = vmatpush1.bf16.msra.mxu0 0
        %3182 = vmatprep.subr.bf16.mxu0 0
        %3183 = vmatpush1.bf16.msra.mxu0 0
        %3184 = vmatprep.subr.bf16.mxu0 0
        %3185 = vmatpush1.bf16.msra.mxu0 0
        %3186 = vmatprep.subr.bf16.mxu0 0
        %3187 = vmatpush1.bf16.msra.mxu0 0
        %3188 = vmatprep.mubr.bf16.mxu0 0
        %3189 = vmatmul.mubr.bf16.gmra.mrb[0].mxu0 %v3109
        %v3190 = vpop.f32.mrb[0].mxu0
        %v3191 = vadd.f32 0.0, %v3190
        %v3192 = vpop.f32.mrb[0].mxu0
        %v3193 = vpop.f32.mrb[0].mxu0
        %v3194 = vadd.f32 0.0, %v3193
        %v3195 = vpop.f32.mrb[0].mxu0
        %3196 = vmatprep.mubr.bf16.mxu0 0
        %3197 = vmatmul.mubr.bf16.gmra.mrb[0].mxu0 %v3112
        %v3198 = vpop.f32.mrb[0].mxu0
        %v3199 = vadd.f32 0.0, %v3198
        %v3200 = vpop.f32.mrb[0].mxu0
        %v3201 = vpop.f32.mrb[0].mxu0
        %v3202 = vadd.f32 0.0, %v3201
        %v3203 = vpop.f32.mrb[0].mxu0
        %3204 = vmatprep.mubr.bf16.mxu0 0
        %3205 = vmatmul.mubr.bf16.gmra.mrb[0].mxu0 %v3115
        %v3206 = vpop.f32.mrb[0].mxu0
        %v3207 = vadd.f32 0.0, %v3206
        %v3208 = vpop.f32.mrb[0].mxu0
        %v3209 = vpop.f32.mrb[0].mxu0
        %v3210 = vadd.f32 0.0, %v3209
        %v3211 = vpop.f32.mrb[0].mxu0
        %3212 = vmatprep.mubr.bf16.mxu0 0
        %3213 = vmatmul.mubr.bf16.gmra.mrb[0].mxu0 %v3118
        %v3214 = vpop.f32.mrb[0].mxu0
        %v3215 = vadd.f32 0.0, %v3214
        %v3216 = vpop.f32.mrb[0].mxu0
        %v3217 = vpop.f32.mrb[0].mxu0
        %v3218 = vadd.f32 0.0, %v3217
        %v3219 = vpop.f32.mrb[0].mxu0
        %3220 = vmatprep.mubr.bf16.mxu0 0
        %3221 = vmatmul.mubr.bf16.gmra.mrb[0].mxu0 %v3121
        %v3222 = vpop.f32.mrb[0].mxu0
        %v3223 = vadd.f32 0.0, %v3222
        %v3224 = vpop.f32.mrb[0].mxu0
        %v3225 = vpop.f32.mrb[0].mxu0
        %v3226 = vadd.f32 0.0, %v3225
        %v3227 = vpop.f32.mrb[0].mxu0
        %3228 = vmatprep.mubr.bf16.mxu0 0
        %3229 = vmatmul.mubr.bf16.gmra.mrb[0].mxu0 %v3124
        %v3230 = vpop.f32.mrb[0].mxu0
        %v3231 = vadd.f32 0.0, %v3230
        %v3232 = vpop.f32.mrb[0].mxu0
        %v3233 = vpop.f32.mrb[0].mxu0
        %v3234 = vadd.f32 0.0, %v3233
        %v3235 = vpop.f32.mrb[0].mxu0
        %3236 = vmatprep.mubr.bf16.mxu0 0
        %3237 = vmatmul.mubr.bf16.gmra.mrb[0].mxu0 %v3127
        %v3238 = vpop.f32.mrb[0].mxu0
        %v3239 = vadd.f32 0.0, %v3238
        %v3240 = vpop.f32.mrb[0].mxu0
        %v3241 = vpop.f32.mrb[0].mxu0
        %v3242 = vadd.f32 0.0, %v3241
        %v3243 = vpop.f32.mrb[0].mxu0
        %3244 = vmatprep.mubr.bf16.mxu0 0
        %3245 = vmatmul.mubr.bf16.gmra.mrb[0].mxu0 %v3130
        %v3246 = vpop.f32.mrb[0].mxu0
        %v3247 = vadd.f32 0.0, %v3246
        %v3248 = vpop.f32.mrb[0].mxu0
        %v3249 = vpop.f32.mrb[0].mxu0
        %v3250 = vadd.f32 0.0, %v3249
        %v3251 = vpop.f32.mrb[0].mxu0
        %3252 = vmatprep.mubr.bf16.mxu0 0
        %3253 = vmatmul.mubr.bf16.gmra.mrb[0].mxu0 %v3133
        %v3254 = vpop.f32.mrb[0].mxu0
        %v3255 = vadd.f32 0.0, %v3254
        %v3256 = vpop.f32.mrb[0].mxu0
        %v3257 = vpop.f32.mrb[0].mxu0
        %v3258 = vadd.f32 0.0, %v3257
        %v3259 = vpop.f32.mrb[0].mxu0
        %3260 = vmatprep.mubr.bf16.mxu0 0
        %3261 = vmatmul.mubr.bf16.gmra.mrb[0].mxu0 %v3136
        %v3262 = vpop.f32.mrb[0].mxu0
        %v3263 = vadd.f32 0.0, %v3262
        %v3264 = vpop.f32.mrb[0].mxu0
        %v3265 = vpop.f32.mrb[0].mxu0
        %v3266 = vadd.f32 0.0, %v3265
        %v3267 = vpop.f32.mrb[0].mxu0
        %3268 = vmatprep.mubr.bf16.mxu0 0
        %3269 = vmatmul.mubr.bf16.gmra.mrb[0].mxu0 %v3139
        %v3270 = vpop.f32.mrb[0].mxu0
        %v3271 = vadd.f32 0.0, %v3270
        %v3272 = vpop.f32.mrb[0].mxu0
        %v3273 = vpop.f32.mrb[0].mxu0
        %v3274 = vadd.f32 0.0, %v3273
        %v3275 = vpop.f32.mrb[0].mxu0
        %3276 = vmatprep.mubr.bf16.mxu0 0
        %3277 = vmatmul.mubr.bf16.gmra.mrb[0].mxu0 %v3142
        %v3278 = vpop.f32.mrb[0].mxu0
        %v3279 = vadd.f32 0.0, %v3278
        %v3280 = vpop.f32.mrb[0].mxu0
        %v3281 = vpop.f32.mrb[0].mxu0
        %v3282 = vadd.f32 0.0, %v3281
        %v3283 = vpop.f32.mrb[0].mxu0
        %3284 = vmatprep.mubr.bf16.mxu0 0
        %3285 = vmatmul.mubr.bf16.gmra.mrb[0].mxu0 %v3145
        %v3286 = vpop.f32.mrb[0].mxu0
        %v3287 = vadd.f32 0.0, %v3286
        %v3288 = vpop.f32.mrb[0].mxu0
        %v3289 = vpop.f32.mrb[0].mxu0
        %v3290 = vadd.f32 0.0, %v3289
        %v3291 = vpop.f32.mrb[0].mxu0
        %3292 = vmatprep.mubr.bf16.mxu0 0
        %3293 = vmatmul.mubr.bf16.gmra.mrb[0].mxu0 %v3148
        %v3294 = vpop.f32.mrb[0].mxu0
        %v3295 = vadd.f32 0.0, %v3294
        %v3296 = vpop.f32.mrb[0].mxu0
        %v3297 = vpop.f32.mrb[0].mxu0
        %v3298 = vadd.f32 0.0, %v3297
        %v3299 = vpop.f32.mrb[0].mxu0
        %3300 = vmatprep.mubr.bf16.mxu0 0
        %3301 = vmatmul.mubr.bf16.gmra.mrb[0].mxu0 %v3151
        %v3302 = vpop.f32.mrb[0].mxu0
        %v3303 = vadd.f32 0.0, %v3302
        %v3304 = vpop.f32.mrb[0].mxu0
        %v3305 = vpop.f32.mrb[0].mxu0
        %v3306 = vadd.f32 0.0, %v3305
        %v3307 = vpop.f32.mrb[0].mxu0
        %3308 = vmatprep.mubr.bf16.mxu0 0
        %3309 = vmatmul.mubr.bf16.gmra.mrb[0].mxu0 %v3154
        %v3310 = vpop.f32.mrb[0].mxu0
        %v3311 = vadd.f32 0.0, %v3310
        %v3312 = vpop.f32.mrb[0].mxu0
        %v3313 = vpop.f32.mrb[0].mxu0
        %v3314 = vadd.f32 0.0, %v3313
        %v3315 = vpop.f32.mrb[0].mxu0
        %3316 = vdwg.mxu0
        %v3317 = vsub.f32 0.0, %v3191
        %v3318 = vsub.f32 0.0, %v3194
        %v3319 = vsub.f32 0.0, %v3199
        %v3320 = vsub.f32 0.0, %v3202
        %v3321 = vsub.f32 0.0, %v3207
        %v3322 = vsub.f32 0.0, %v3210
        %v3323 = vsub.f32 0.0, %v3215
        %v3324 = vsub.f32 0.0, %v3218
        %v3325 = vsub.f32 0.0, %v3223
        %v3326 = vsub.f32 0.0, %v3226
        %v3327 = vsub.f32 0.0, %v3231
        %v3328 = vsub.f32 0.0, %v3234
        %v3329 = vsub.f32 0.0, %v3239
        %v3330 = vsub.f32 0.0, %v3242
        %v3331 = vsub.f32 0.0, %v3247
        %v3332 = vsub.f32 0.0, %v3250
        %v3333 = vsub.f32 0.0, %v3255
        %v3334 = vsub.f32 0.0, %v3258
        %v3335 = vsub.f32 0.0, %v3263
        %v3336 = vsub.f32 0.0, %v3266
        %v3337 = vsub.f32 0.0, %v3271
        %v3338 = vsub.f32 0.0, %v3274
        %v3339 = vsub.f32 0.0, %v3279
        %v3340 = vsub.f32 0.0, %v3282
        %v3341 = vsub.f32 0.0, %v3287
        %v3342 = vsub.f32 0.0, %v3290
        %v3343 = vsub.f32 0.0, %v3295
        %v3344 = vsub.f32 0.0, %v3298
        %v3345 = vsub.f32 0.0, %v3303
        %v3346 = vsub.f32 0.0, %v3306
        %v3347 = vsub.f32 0.0, %v3311
        %v3348 = vsub.f32 0.0, %v3314
        %v3349 = vmul.f32 %v3317, 1.442695
        %v3350 = vpow.pop %v3349
        %v3351 = vmul.f32 %v3318, 1.442695
        %v3352 = vpow.pop %v3351
        %v3353 = vmul.f32 %v3319, 1.442695
        %v3354 = vpow.pop %v3353
        %v3355 = vmul.f32 %v3320, 1.442695
        %v3356 = vpow.pop %v3355
        %v3357 = vmul.f32 %v3321, 1.442695
        %v3358 = vpow.pop %v3357
        %v3359 = vmul.f32 %v3322, 1.442695
        %v3360 = vpow.pop %v3359
        %v3361 = vmul.f32 %v3323, 1.442695
        %v3362 = vpow.pop %v3361
        %v3363 = vmul.f32 %v3324, 1.442695
        %v3364 = vpow.pop %v3363
        %v3365 = vmul.f32 %v3325, 1.442695
        %v3366 = vpow.pop %v3365
        %v3367 = vmul.f32 %v3326, 1.442695
        %v3368 = vpow.pop %v3367
        %v3369 = vmul.f32 %v3327, 1.442695
        %v3370 = vpow.pop %v3369
        %v3371 = vmul.f32 %v3328, 1.442695
        %v3372 = vpow.pop %v3371
        %v3373 = vmul.f32 %v3329, 1.442695
        %v3374 = vpow.pop %v3373
        %v3375 = vmul.f32 %v3330, 1.442695
        %v3376 = vpow.pop %v3375
        %v3377 = vmul.f32 %v3331, 1.442695
        %v3378 = vpow.pop %v3377
        %v3379 = vmul.f32 %v3332, 1.442695
        %v3380 = vpow.pop %v3379
        %v3381 = vmul.f32 %v3333, 1.442695
        %v3382 = vpow.pop %v3381
        %v3383 = vmul.f32 %v3334, 1.442695
        %v3384 = vpow.pop %v3383
        %v3385 = vmul.f32 %v3335, 1.442695
        %v3386 = vpow.pop %v3385
        %v3387 = vmul.f32 %v3336, 1.442695
        %v3388 = vpow.pop %v3387
        %v3389 = vmul.f32 %v3337, 1.442695
        %v3390 = vpow.pop %v3389
        %v3391 = vmul.f32 %v3338, 1.442695
        %v3392 = vpow.pop %v3391
        %v3393 = vmul.f32 %v3339, 1.442695
        %v3394 = vpow.pop %v3393
        %v3395 = vmul.f32 %v3340, 1.442695
        %v3396 = vpow.pop %v3395
        %v3397 = vmul.f32 %v3341, 1.442695
        %v3398 = vpow.pop %v3397
        %v3399 = vmul.f32 %v3342, 1.442695
        %v3400 = vpow.pop %v3399
        %v3401 = vmul.f32 %v3343, 1.442695
        %v3402 = vpow.pop %v3401
        %v3403 = vmul.f32 %v3344, 1.442695
        %v3404 = vpow.pop %v3403
        %v3405 = vmul.f32 %v3345, 1.442695
        %v3406 = vpow.pop %v3405
        %v3407 = vmul.f32 %v3346, 1.442695
        %v3408 = vpow.pop %v3407
        %v3409 = vmul.f32 %v3347, 1.442695
        %v3410 = vpow.pop %v3409
        %v3411 = vmul.f32 %v3348, 1.442695
        %v3412 = vpow.pop %v3411
        %v3413 = vadd.f32 %v3350, 1.0
        %v3414 = vadd.f32 %v3352, 1.0
        %v3415 = vadd.f32 %v3354, 1.0
        %v3416 = vadd.f32 %v3356, 1.0
        %v3417 = vadd.f32 %v3358, 1.0
        %v3418 = vadd.f32 %v3360, 1.0
        %v3419 = vadd.f32 %v3362, 1.0
        %v3420 = vadd.f32 %v3364, 1.0
        %v3421 = vadd.f32 %v3366, 1.0
        %v3422 = vadd.f32 %v3368, 1.0
        %v3423 = vadd.f32 %v3370, 1.0
        %v3424 = vadd.f32 %v3372, 1.0
        %v3425 = vadd.f32 %v3374, 1.0
        %v3426 = vadd.f32 %v3376, 1.0
        %v3427 = vadd.f32 %v3378, 1.0
        %v3428 = vadd.f32 %v3380, 1.0
        %v3429 = vadd.f32 %v3382, 1.0
        %v3430 = vadd.f32 %v3384, 1.0
        %v3431 = vadd.f32 %v3386, 1.0
        %v3432 = vadd.f32 %v3388, 1.0
        %v3433 = vadd.f32 %v3390, 1.0
        %v3434 = vadd.f32 %v3392, 1.0
        %v3435 = vadd.f32 %v3394, 1.0
        %v3436 = vadd.f32 %v3396, 1.0
        %v3437 = vadd.f32 %v3398, 1.0
        %v3438 = vadd.f32 %v3400, 1.0
        %v3439 = vadd.f32 %v3402, 1.0
        %v3440 = vadd.f32 %v3404, 1.0
        %v3441 = vadd.f32 %v3406, 1.0
        %v3442 = vadd.f32 %v3408, 1.0
        %v3443 = vadd.f32 %v3410, 1.0
        %v3444 = vadd.f32 %v3412, 1.0
        %v3445 = vrcp.pop %v3413
        %v3446 = vmul.f32 1.0, %v3445
        %v3447 = vrcp.pop %v3414
        %v3448 = vmul.f32 1.0, %v3447
        %v3449 = vrcp.pop %v3415
        %v3450 = vmul.f32 1.0, %v3449
        %v3451 = vrcp.pop %v3416
        %v3452 = vmul.f32 1.0, %v3451
        %v3453 = vrcp.pop %v3417
        %v3454 = vmul.f32 1.0, %v3453
        %v3455 = vrcp.pop %v3418
        %v3456 = vmul.f32 1.0, %v3455
        %v3457 = vrcp.pop %v3419
        %v3458 = vmul.f32 1.0, %v3457
        %v3459 = vrcp.pop %v3420
        %v3460 = vmul.f32 1.0, %v3459
        %v3461 = vrcp.pop %v3421
        %v3462 = vmul.f32 1.0, %v3461
        %v3463 = vrcp.pop %v3422
        %v3464 = vmul.f32 1.0, %v3463
        %v3465 = vrcp.pop %v3423
        %v3466 = vmul.f32 1.0, %v3465
        %v3467 = vrcp.pop %v3424
        %v3468 = vmul.f32 1.0, %v3467
        %v3469 = vrcp.pop %v3425
        %v3470 = vmul.f32 1.0, %v3469
        %v3471 = vrcp.pop %v3426
        %v3472 = vmul.f32 1.0, %v3471
        %v3473 = vrcp.pop %v3427
        %v3474 = vmul.f32 1.0, %v3473
        %v3475 = vrcp.pop %v3428
        %v3476 = vmul.f32 1.0, %v3475
        %v3477 = vrcp.pop %v3429
        %v3478 = vmul.f32 1.0, %v3477
        %v3479 = vrcp.pop %v3430
        %v3480 = vmul.f32 1.0, %v3479
        %v3481 = vrcp.pop %v3431
        %v3482 = vmul.f32 1.0, %v3481
        %v3483 = vrcp.pop %v3432
        %v3484 = vmul.f32 1.0, %v3483
        %v3485 = vrcp.pop %v3433
        %v3486 = vmul.f32 1.0, %v3485
        %v3487 = vrcp.pop %v3434
        %v3488 = vmul.f32 1.0, %v3487
        %v3489 = vrcp.pop %v3435
        %v3490 = vmul.f32 1.0, %v3489
        %v3491 = vrcp.pop %v3436
        %v3492 = vmul.f32 1.0, %v3491
        %v3493 = vrcp.pop %v3437
        %v3494 = vmul.f32 1.0, %v3493
        %v3495 = vrcp.pop %v3438
        %v3496 = vmul.f32 1.0, %v3495
        %v3497 = vrcp.pop %v3439
        %v3498 = vmul.f32 1.0, %v3497
        %v3499 = vrcp.pop %v3440
        %v3500 = vmul.f32 1.0, %v3499
        %v3501 = vrcp.pop %v3441
        %v3502 = vmul.f32 1.0, %v3501
        %v3503 = vrcp.pop %v3442
        %v3504 = vmul.f32 1.0, %v3503
        %v3505 = vrcp.pop %v3443
        %v3506 = vmul.f32 1.0, %v3505
        %v3507 = vrcp.pop %v3444
        %v3508 = vmul.f32 1.0, %v3507
        %v3509 = vmul.f32 %v3191, %v3446
        %v3510 = vmul.f32 %v3194, %v3448
        %v3511 = vmul.f32 %v3199, %v3450
        %v3512 = vmul.f32 %v3202, %v3452
        %v3513 = vmul.f32 %v3207, %v3454
        %v3514 = vmul.f32 %v3210, %v3456
        %v3515 = vmul.f32 %v3215, %v3458
        %v3516 = vmul.f32 %v3218, %v3460
        %v3517 = vmul.f32 %v3223, %v3462
        %v3518 = vmul.f32 %v3226, %v3464
        %v3519 = vmul.f32 %v3231, %v3466
        %v3520 = vmul.f32 %v3234, %v3468
        %v3521 = vmul.f32 %v3239, %v3470
        %v3522 = vmul.f32 %v3242, %v3472
        %v3523 = vmul.f32 %v3247, %v3474
        %v3524 = vmul.f32 %v3250, %v3476
        %v3525 = vmul.f32 %v3255, %v3478
        %v3526 = vmul.f32 %v3258, %v3480
        %v3527 = vmul.f32 %v3263, %v3482
        %v3528 = vmul.f32 %v3266, %v3484
        %v3529 = vmul.f32 %v3271, %v3486
        %v3530 = vmul.f32 %v3274, %v3488
        %v3531 = vmul.f32 %v3279, %v3490
        %v3532 = vmul.f32 %v3282, %v3492
        %v3533 = vmul.f32 %v3287, %v3494
        %v3534 = vmul.f32 %v3290, %v3496
        %v3535 = vmul.f32 %v3295, %v3498
        %v3536 = vmul.f32 %v3298, %v3500
        %v3537 = vmul.f32 %v3303, %v3502
        %v3538 = vmul.f32 %v3306, %v3504
        %v3539 = vmul.f32 %v3311, %v3506
        %v3540 = vmul.f32 %v3314, %v3508
        %v3541 = vadd.f32 %v2547, %v3509
        %v3542 = vadd.f32 %v2548, %v3510
        %v3543 = vadd.f32 %v2549, %v3511
        %v3544 = vadd.f32 %v2550, %v3512
        %v3545 = vadd.f32 %v2551, %v3513
        %v3546 = vadd.f32 %v2552, %v3514
        %v3547 = vadd.f32 %v2553, %v3515
        %v3548 = vadd.f32 %v2554, %v3516
        %v3549 = vadd.f32 %v2555, %v3517
        %v3550 = vadd.f32 %v2556, %v3518
        %v3551 = vadd.f32 %v2557, %v3519
        %v3552 = vadd.f32 %v2558, %v3520
        %v3553 = vadd.f32 %v2559, %v3521
        %v3554 = vadd.f32 %v2560, %v3522
        %v3555 = vadd.f32 %v2561, %v3523
        %v3556 = vadd.f32 %v2562, %v3524
        %v3557 = vadd.f32 %v2563, %v3525
        %v3558 = vadd.f32 %v2564, %v3526
        %v3559 = vadd.f32 %v2565, %v3527
        %v3560 = vadd.f32 %v2566, %v3528
        %v3561 = vadd.f32 %v2567, %v3529
        %v3562 = vadd.f32 %v2568, %v3530
        %v3563 = vadd.f32 %v2569, %v3531
        %v3564 = vadd.f32 %v2570, %v3532
        %v3565 = vadd.f32 %v2571, %v3533
        %v3566 = vadd.f32 %v2572, %v3534
        %v3567 = vadd.f32 %v2573, %v3535
        %v3568 = vadd.f32 %v2574, %v3536
        %v3569 = vadd.f32 %v2575, %v3537
        %v3570 = vadd.f32 %v2576, %v3538
        %v3571 = vadd.f32 %v2577, %v3539
        %v3572 = vadd.f32 %v2578, %v3540
        %v3573 = vmul.f32 %v3541, 0.70710677
        %v3574 = vmul.f32 %v3542, 0.70710677
        %v3575 = vmul.f32 %v3543, 0.70710677
        %v3576 = vmul.f32 %v3544, 0.70710677
        %v3577 = vmul.f32 %v3545, 0.70710677
        %v3578 = vmul.f32 %v3546, 0.70710677
        %v3579 = vmul.f32 %v3547, 0.70710677
        %v3580 = vmul.f32 %v3548, 0.70710677
        %v3581 = vmul.f32 %v3549, 0.70710677
        %v3582 = vmul.f32 %v3550, 0.70710677
        %v3583 = vmul.f32 %v3551, 0.70710677
        %v3584 = vmul.f32 %v3552, 0.70710677
        %v3585 = vmul.f32 %v3553, 0.70710677
        %v3586 = vmul.f32 %v3554, 0.70710677
        %v3587 = vmul.f32 %v3555, 0.70710677
        %v3588 = vmul.f32 %v3556, 0.70710677
        %v3589 = vmul.f32 %v3557, 0.70710677
        %v3590 = vmul.f32 %v3558, 0.70710677
        %v3591 = vmul.f32 %v3559, 0.70710677
        %v3592 = vmul.f32 %v3560, 0.70710677
        %v3593 = vmul.f32 %v3561, 0.70710677
        %v3594 = vmul.f32 %v3562, 0.70710677
        %v3595 = vmul.f32 %v3563, 0.70710677
        %v3596 = vmul.f32 %v3564, 0.70710677
        %v3597 = vmul.f32 %v3565, 0.70710677
        %v3598 = vmul.f32 %v3566, 0.70710677
        %v3599 = vmul.f32 %v3567, 0.70710677
        %v3600 = vmul.f32 %v3568, 0.70710677
        %v3601 = vmul.f32 %v3569, 0.70710677
        %v3602 = vmul.f32 %v3570, 0.70710677
        %v3603 = vmul.f32 %v3571, 0.70710677
        %v3604 = vmul.f32 %v3572, 0.70710677
        %v3605 = vpack.c.bf16 %v3574, %v3573
        %v3606 = vpack.c.bf16 %v3576, %v3575
        %v3607 = vpack.c.bf16 %v3578, %v3577
        %v3608 = vpack.c.bf16 %v3580, %v3579
        %v3609 = vpack.c.bf16 %v3582, %v3581
        %v3610 = vpack.c.bf16 %v3584, %v3583
        %v3611 = vpack.c.bf16 %v3586, %v3585
        %v3612 = vpack.c.bf16 %v3588, %v3587
        %v3613 = vpack.c.bf16 %v3590, %v3589
        %v3614 = vpack.c.bf16 %v3592, %v3591
        %v3615 = vpack.c.bf16 %v3594, %v3593
        %v3616 = vpack.c.bf16 %v3596, %v3595
        %v3617 = vpack.c.bf16 %v3598, %v3597
        %v3618 = vpack.c.bf16 %v3600, %v3599
        %v3619 = vpack.c.bf16 %v3602, %v3601
        %v3620 = vpack.c.bf16 %v3604, %v3603
        %v3621 = vld [vmem:[%s15] sm:$0xf]
        %v3622 = vld [vmem:[%s15 + $0x4] sm:$0xf]
        %v3623 = vld [vmem:[%s15 + $0x8] sm:$0xf]
        %v3624 = vld [vmem:[%s15 + $0xc] sm:$0xf]
        %v3625 = vld [vmem:[%s15 + $0x10] sm:$0xf]
        %v3626 = vld [vmem:[%s15 + $0x14] sm:$0xf]
        %v3627 = vld [vmem:[%s15 + $0x18] sm:$0xf]
        %v3628 = vld [vmem:[%s15 + $0x1c] sm:$0xf]
        %v3637 = vunpack.c.l.b16 %v3621
        %v3638 = vunpack.c.l.b16 %v3622
        %v3639 = vunpack.c.l.b16 %v3623
        %v3640 = vunpack.c.l.b16 %v3624
        %v3641 = vunpack.c.l.b16 %v3625
        %v3642 = vunpack.c.l.b16 %v3626
        %v3643 = vunpack.c.l.b16 %v3627
        %v3644 = vunpack.c.l.b16 %v3628
        %v3645 = vpack.c.b16 %v3638, %v3637
        %v3646 = vpack.c.b16 %v3640, %v3639
        %v3647 = vpack.c.b16 %v3642, %v3641
        %v3648 = vpack.c.b16 %v3644, %v3643
        %v3654 = vsel %vm1080, %v3605, 0
        %v3657 = vsel %vm1080, %v3606, 0
        %v3660 = vsel %vm1080, %v3607, 0
        %v3663 = vsel %vm1080, %v3608, 0
        %v3666 = vsel %vm1080, %v3609, 0
        %v3669 = vsel %vm1080, %v3610, 0
        %v3672 = vsel %vm1080, %v3611, 0
        %v3675 = vsel %vm1080, %v3612, 0
        %v3678 = vsel %vm1080, %v3613, 0
        %v3681 = vsel %vm1080, %v3614, 0
        %v3684 = vsel %vm1080, %v3615, 0
        %v3687 = vsel %vm1080, %v3616, 0
        %v3690 = vsel %vm1080, %v3617, 0
        %v3693 = vsel %vm1080, %v3618, 0
        %v3696 = vsel %vm1080, %v3619, 0
        %v3699 = vsel %vm1080, %v3620, 0
        %3701 = vmatprep.subr.bf16.mxu0 0
        %3702 = vmatpush1.bf16.msra.mxu0 %v3645
        %3703 = vmatprep.subr.bf16.mxu0 0
        %3704 = vmatpush1.bf16.msra.mxu0 %v3646
        %3705 = vmatprep.subr.bf16.mxu0 0
        %3706 = vmatpush1.bf16.msra.mxu0 %v3647
        %3707 = vmatprep.subr.bf16.mxu0 0
        %3708 = vmatpush1.bf16.msra.mxu0 %v3648
        %3709 = vmatprep.subr.bf16.mxu0 0
        %3710 = vmatpush1.bf16.msra.mxu0 0
        %3711 = vmatprep.subr.bf16.mxu0 0
        %3712 = vmatpush1.bf16.msra.mxu0 0
        %3713 = vmatprep.subr.bf16.mxu0 0
        %3714 = vmatpush1.bf16.msra.mxu0 0
        %3715 = vmatprep.subr.bf16.mxu0 0
        %3716 = vmatpush1.bf16.msra.mxu0 0
        %3717 = vmatprep.subr.bf16.mxu0 0
        %3718 = vmatpush1.bf16.msra.mxu0 0
        %3719 = vmatprep.subr.bf16.mxu0 0
        %3720 = vmatpush1.bf16.msra.mxu0 0
        %3721 = vmatprep.subr.bf16.mxu0 0
        %3722 = vmatpush1.bf16.msra.mxu0 0
        %3723 = vmatprep.subr.bf16.mxu0 0
        %3724 = vmatpush1.bf16.msra.mxu0 0
        %3725 = vmatprep.subr.bf16.mxu0 0
        %3726 = vmatpush1.bf16.msra.mxu0 0
        %3727 = vmatprep.subr.bf16.mxu0 0
        %3728 = vmatpush1.bf16.msra.mxu0 0
        %3729 = vmatprep.subr.bf16.mxu0 0
        %3730 = vmatpush1.bf16.msra.mxu0 0
        %3731 = vmatprep.subr.bf16.mxu0 0
        %3732 = vmatpush1.bf16.msra.mxu0 0
        %3733 = vmatprep.mubr.bf16.mxu0 0
        %3734 = vmatmul.mubr.bf16.gmra.mrb[0].mxu0 %v3654
        %v3735 = vpop.f32.mrb[0].mxu0
        %v3736 = vadd.f32 0.0, %v3735
        %v3737 = vpop.f32.mrb[0].mxu0
        %v3738 = vpop.f32.mrb[0].mxu0
        %v3739 = vadd.f32 0.0, %v3738
        %v3740 = vpop.f32.mrb[0].mxu0
        %3741 = vmatprep.mubr.bf16.mxu0 0
        %3742 = vmatmul.mubr.bf16.gmra.mrb[0].mxu0 %v3657
        %v3743 = vpop.f32.mrb[0].mxu0
        %v3744 = vadd.f32 0.0, %v3743
        %v3745 = vpop.f32.mrb[0].mxu0
        %v3746 = vpop.f32.mrb[0].mxu0
        %v3747 = vadd.f32 0.0, %v3746
        %v3748 = vpop.f32.mrb[0].mxu0
        %3749 = vmatprep.mubr.bf16.mxu0 0
        %3750 = vmatmul.mubr.bf16.gmra.mrb[0].mxu0 %v3660
        %v3751 = vpop.f32.mrb[0].mxu0
        %v3752 = vadd.f32 0.0, %v3751
        %v3753 = vpop.f32.mrb[0].mxu0
        %v3754 = vpop.f32.mrb[0].mxu0
        %v3755 = vadd.f32 0.0, %v3754
        %v3756 = vpop.f32.mrb[0].mxu0
        %3757 = vmatprep.mubr.bf16.mxu0 0
        %3758 = vmatmul.mubr.bf16.gmra.mrb[0].mxu0 %v3663
        %v3759 = vpop.f32.mrb[0].mxu0
        %v3760 = vadd.f32 0.0, %v3759
        %v3761 = vpop.f32.mrb[0].mxu0
        %v3762 = vpop.f32.mrb[0].mxu0
        %v3763 = vadd.f32 0.0, %v3762
        %v3764 = vpop.f32.mrb[0].mxu0
        %3765 = vmatprep.mubr.bf16.mxu0 0
        %3766 = vmatmul.mubr.bf16.gmra.mrb[0].mxu0 %v3666
        %v3767 = vpop.f32.mrb[0].mxu0
        %v3768 = vadd.f32 0.0, %v3767
        %v3769 = vpop.f32.mrb[0].mxu0
        %v3770 = vpop.f32.mrb[0].mxu0
        %v3771 = vadd.f32 0.0, %v3770
        %v3772 = vpop.f32.mrb[0].mxu0
        %3773 = vmatprep.mubr.bf16.mxu0 0
        %3774 = vmatmul.mubr.bf16.gmra.mrb[0].mxu0 %v3669
        %v3775 = vpop.f32.mrb[0].mxu0
        %v3776 = vadd.f32 0.0, %v3775
        %v3777 = vpop.f32.mrb[0].mxu0
        %v3778 = vpop.f32.mrb[0].mxu0
        %v3779 = vadd.f32 0.0, %v3778
        %v3780 = vpop.f32.mrb[0].mxu0
        %3781 = vmatprep.mubr.bf16.mxu0 0
        %3782 = vmatmul.mubr.bf16.gmra.mrb[0].mxu0 %v3672
        %v3783 = vpop.f32.mrb[0].mxu0
        %v3784 = vadd.f32 0.0, %v3783
        %v3785 = vpop.f32.mrb[0].mxu0
        %v3786 = vpop.f32.mrb[0].mxu0
        %v3787 = vadd.f32 0.0, %v3786
        %v3788 = vpop.f32.mrb[0].mxu0
        %3789 = vmatprep.mubr.bf16.mxu0 0
        %3790 = vmatmul.mubr.bf16.gmra.mrb[0].mxu0 %v3675
        %v3791 = vpop.f32.mrb[0].mxu0
        %v3792 = vadd.f32 0.0, %v3791
        %v3793 = vpop.f32.mrb[0].mxu0
        %v3794 = vpop.f32.mrb[0].mxu0
        %v3795 = vadd.f32 0.0, %v3794
        %v3796 = vpop.f32.mrb[0].mxu0
        %3797 = vmatprep.mubr.bf16.mxu0 0
        %3798 = vmatmul.mubr.bf16.gmra.mrb[0].mxu0 %v3678
        %v3799 = vpop.f32.mrb[0].mxu0
        %v3800 = vadd.f32 0.0, %v3799
        %v3801 = vpop.f32.mrb[0].mxu0
        %v3802 = vpop.f32.mrb[0].mxu0
        %v3803 = vadd.f32 0.0, %v3802
        %v3804 = vpop.f32.mrb[0].mxu0
        %3805 = vmatprep.mubr.bf16.mxu0 0
        %3806 = vmatmul.mubr.bf16.gmra.mrb[0].mxu0 %v3681
        %v3807 = vpop.f32.mrb[0].mxu0
        %v3808 = vadd.f32 0.0, %v3807
        %v3809 = vpop.f32.mrb[0].mxu0
        %v3810 = vpop.f32.mrb[0].mxu0
        %v3811 = vadd.f32 0.0, %v3810
        %v3812 = vpop.f32.mrb[0].mxu0
        %3813 = vmatprep.mubr.bf16.mxu0 0
        %3814 = vmatmul.mubr.bf16.gmra.mrb[0].mxu0 %v3684
        %v3815 = vpop.f32.mrb[0].mxu0
        %v3816 = vadd.f32 0.0, %v3815
        %v3817 = vpop.f32.mrb[0].mxu0
        %v3818 = vpop.f32.mrb[0].mxu0
        %v3819 = vadd.f32 0.0, %v3818
        %v3820 = vpop.f32.mrb[0].mxu0
        %3821 = vmatprep.mubr.bf16.mxu0 0
        %3822 = vmatmul.mubr.bf16.gmra.mrb[0].mxu0 %v3687
        %v3823 = vpop.f32.mrb[0].mxu0
        %v3824 = vadd.f32 0.0, %v3823
        %v3825 = vpop.f32.mrb[0].mxu0
        %v3826 = vpop.f32.mrb[0].mxu0
        %v3827 = vadd.f32 0.0, %v3826
        %v3828 = vpop.f32.mrb[0].mxu0
        %3829 = vmatprep.mubr.bf16.mxu0 0
        %3830 = vmatmul.mubr.bf16.gmra.mrb[0].mxu0 %v3690
        %v3831 = vpop.f32.mrb[0].mxu0
        %v3832 = vadd.f32 0.0, %v3831
        %v3833 = vpop.f32.mrb[0].mxu0
        %v3834 = vpop.f32.mrb[0].mxu0
        %v3835 = vadd.f32 0.0, %v3834
        %v3836 = vpop.f32.mrb[0].mxu0
        %3837 = vmatprep.mubr.bf16.mxu0 0
        %3838 = vmatmul.mubr.bf16.gmra.mrb[0].mxu0 %v3693
        %v3839 = vpop.f32.mrb[0].mxu0
        %v3840 = vadd.f32 0.0, %v3839
        %v3841 = vpop.f32.mrb[0].mxu0
        %v3842 = vpop.f32.mrb[0].mxu0
        %v3843 = vadd.f32 0.0, %v3842
        %v3844 = vpop.f32.mrb[0].mxu0
        %3845 = vmatprep.mubr.bf16.mxu0 0
        %3846 = vmatmul.mubr.bf16.gmra.mrb[0].mxu0 %v3696
        %v3847 = vpop.f32.mrb[0].mxu0
        %v3848 = vadd.f32 0.0, %v3847
        %v3849 = vpop.f32.mrb[0].mxu0
        %v3850 = vpop.f32.mrb[0].mxu0
        %v3851 = vadd.f32 0.0, %v3850
        %v3852 = vpop.f32.mrb[0].mxu0
        %3853 = vmatprep.mubr.bf16.mxu0 0
        %3854 = vmatmul.mubr.bf16.gmra.mrb[0].mxu0 %v3699
        %v3855 = vpop.f32.mrb[0].mxu0
        %v3856 = vadd.f32 0.0, %v3855
        %v3857 = vpop.f32.mrb[0].mxu0
        %v3858 = vpop.f32.mrb[0].mxu0
        %v3859 = vadd.f32 0.0, %v3858
        %v3860 = vpop.f32.mrb[0].mxu0
        %3861 = vdwg.mxu0
        %3862 = vst [vmem:[%s571] sm:$0xff] %v3736
        %3863 = vst [vmem:[%s571 + $0x8] sm:$0xff] %v3739
        %3864 = vst [vmem:[%s571 + $0x10] sm:$0xff] %v3744
        %3865 = vst [vmem:[%s571 + $0x18] sm:$0xff] %v3747
        %3866 = vst [vmem:[%s571 + $0x20] sm:$0xff] %v3752
        %3867 = vst [vmem:[%s571 + $0x28] sm:$0xff] %v3755
        %3868 = vst [vmem:[%s571 + $0x30] sm:$0xff] %v3760
        %3869 = vst [vmem:[%s571 + $0x38] sm:$0xff] %v3763
        %3870 = vst [vmem:[%s571 + $0x40] sm:$0xff] %v3768
        %3871 = vst [vmem:[%s571 + $0x48] sm:$0xff] %v3771
        %3872 = vst [vmem:[%s571 + $0x50] sm:$0xff] %v3776
        %3873 = vst [vmem:[%s571 + $0x58] sm:$0xff] %v3779
        %3874 = vst [vmem:[%s571 + $0x60] sm:$0xff] %v3784
        %3875 = vst [vmem:[%s571 + $0x68] sm:$0xff] %v3787
        %3876 = vst [vmem:[%s571 + $0x70] sm:$0xff] %v3792
        %3877 = vst [vmem:[%s571 + $0x78] sm:$0xff] %v3795
        %3878 = vst [vmem:[%s571 + $0x80] sm:$0xff] %v3800
        %3879 = vst [vmem:[%s571 + $0x88] sm:$0xff] %v3803
        %3880 = vst [vmem:[%s571 + $0x90] sm:$0xff] %v3808
        %3881 = vst [vmem:[%s571 + $0x98] sm:$0xff] %v3811
        %3882 = vst [vmem:[%s571 + $0xa0] sm:$0xff] %v3816
        %3883 = vst [vmem:[%s571 + $0xa8] sm:$0xff] %v3819
        %3884 = vst [vmem:[%s571 + $0xb0] sm:$0xff] %v3824
        %3885 = vst [vmem:[%s571 + $0xb8] sm:$0xff] %v3827
        %3886 = vst [vmem:[%s571 + $0xc0] sm:$0xff] %v3832
        %3887 = vst [vmem:[%s571 + $0xc8] sm:$0xff] %v3835
        %3888 = vst [vmem:[%s571 + $0xd0] sm:$0xff] %v3840
        %3889 = vst [vmem:[%s571 + $0xd8] sm:$0xff] %v3843
        %3890 = vst [vmem:[%s571 + $0xe0] sm:$0xff] %v3848
        %3891 = vst [vmem:[%s571 + $0xe8] sm:$0xff] %v3851
        %3892 = vst [vmem:[%s571 + $0xf0] sm:$0xff] %v3856
        %3893 = vst [vmem:[%s571 + $0xf8] sm:$0xff] %v3859
        %p3894 = scmp.eq.s32.totalorder %s33, 3
        // Predicated region
        $region89: #{tpu_custom_call.1} parent=83 // pred_check
          %p3895 = pneg %p3894
        $region90: #{tpu_custom_call.1} parent=83 // pred_check_branch
          %3897 = sbr.rel (%p3895) target = $region92
        $region91: #{tpu_custom_call.1} parent=83 // pred_region
          %v3898 = vld [vmem:[#allocation2] sm:$0xff]
          %v3899 = vld [vmem:[#allocation2 + $0x8] sm:$0xff]
          %v3900 = vld [vmem:[#allocation2 + $0x10] sm:$0xff]
          %v3901 = vld [vmem:[#allocation2 + $0x18] sm:$0xff]
          %v3902 = vld [vmem:[#allocation2 + $0x20] sm:$0xff]
          %v3903 = vld [vmem:[#allocation2 + $0x28] sm:$0xff]
          %v3904 = vld [vmem:[#allocation2 + $0x30] sm:$0xff]
          %v3905 = vpack.c.bf16 %v3899, %v3898
          %v3906 = vpack.c.bf16 %v3901, %v3900
          %v3907 = vpack.c.bf16 %v3903, %v3902
          %v3908 = vpack.c.bf16 %v3904, %v3904
          %v3909 = vld [vmem:[%s4] sm:$0xf]
          %v3910 = vld [vmem:[%s4 + $0x4] sm:$0xf]
          %v3911 = vld [vmem:[%s4 + $0x8] sm:$0xf]
          %v3912 = vld [vmem:[%s4 + $0xc] sm:$0xf]
          %v3913 = vld [vmem:[%s4 + $0x10] sm:$0xf]
          %v3914 = vld [vmem:[%s4 + $0x14] sm:$0xf]
          %v3915 = vld [vmem:[%s4 + $0x18] sm:$0xf]
          %v3916 = vld [vmem:[%s4 + $0x1c] sm:$0xf]
          %v3925 = vunpack.c.l.b16 %v3909
          %v3926 = vunpack.c.l.b16 %v3910
          %v3927 = vunpack.c.l.b16 %v3911
          %v3928 = vunpack.c.l.b16 %v3912
          %v3929 = vunpack.c.l.b16 %v3913
          %v3930 = vunpack.c.l.b16 %v3914
          %v3931 = vunpack.c.l.b16 %v3915
          %v3932 = vunpack.c.l.b16 %v3916
          %v3933 = vpack.c.b16 %v3926, %v3925
          %v3934 = vpack.c.b16 %v3928, %v3927
          %v3935 = vpack.c.b16 %v3930, %v3929
          %v3936 = vpack.c.b16 %v3932, %v3931
          %v3942 = vsel %vm1080, %v3905, 0
          %v3945 = vsel %vm1080, %v3906, 0
          %v3948 = vsel %vm1080, %v3907, 0
          %v3951 = vsel %vm1080, %v3908, 0
          %3953 = vmatprep.subr.bf16.mxu0 0
          %3954 = vmatpush1.bf16.msra.mxu0 %v3933
          %3955 = vmatprep.subr.bf16.mxu0 0
          %3956 = vmatpush1.bf16.msra.mxu0 %v3934
          %3957 = vmatprep.subr.bf16.mxu0 0
          %3958 = vmatpush1.bf16.msra.mxu0 %v3935
          %3959 = vmatprep.subr.bf16.mxu0 0
          %3960 = vmatpush1.bf16.msra.mxu0 %v3936
          %3961 = vmatprep.subr.bf16.mxu0 0
          %3962 = vmatpush1.bf16.msra.mxu0 0
          %3963 = vmatprep.subr.bf16.mxu0 0
          %3964 = vmatpush1.bf16.msra.mxu0 0
          %3965 = vmatprep.subr.bf16.mxu0 0
          %3966 = vmatpush1.bf16.msra.mxu0 0
          %3967 = vmatprep.subr.bf16.mxu0 0
          %3968 = vmatpush1.bf16.msra.mxu0 0
          %3969 = vmatprep.subr.bf16.mxu0 0
          %3970 = vmatpush1.bf16.msra.mxu0 0
          %3971 = vmatprep.subr.bf16.mxu0 0
          %3972 = vmatpush1.bf16.msra.mxu0 0
          %3973 = vmatprep.subr.bf16.mxu0 0
          %3974 = vmatpush1.bf16.msra.mxu0 0
          %3975 = vmatprep.subr.bf16.mxu0 0
          %3976 = vmatpush1.bf16.msra.mxu0 0
          %3977 = vmatprep.subr.bf16.mxu0 0
          %3978 = vmatpush1.bf16.msra.mxu0 0
          %3979 = vmatprep.subr.bf16.mxu0 0
          %3980 = vmatpush1.bf16.msra.mxu0 0
          %3981 = vmatprep.subr.bf16.mxu0 0
          %3982 = vmatpush1.bf16.msra.mxu0 0
          %3983 = vmatprep.subr.bf16.mxu0 0
          %3984 = vmatpush1.bf16.msra.mxu0 0
          %3985 = vmatprep.mubr.bf16.mxu0 0
          %3986 = vmatmul.mubr.bf16.gmra.mrb[0].mxu0 %v3942
          %v3987 = vpop.f32.mrb[0].mxu0
          %v3988 = vadd.f32 0.0, %v3987
          %v3989 = vpop.f32.mrb[0].mxu0
          %v3990 = vpop.f32.mrb[0].mxu0
          %v3991 = vadd.f32 0.0, %v3990
          %v3992 = vpop.f32.mrb[0].mxu0
          %3993 = vmatprep.mubr.bf16.mxu0 0
          %3994 = vmatmul.mubr.bf16.gmra.mrb[0].mxu0 %v3945
          %v3995 = vpop.f32.mrb[0].mxu0
          %v3996 = vadd.f32 0.0, %v3995
          %v3997 = vpop.f32.mrb[0].mxu0
          %v3998 = vpop.f32.mrb[0].mxu0
          %v3999 = vadd.f32 0.0, %v3998
          %v4000 = vpop.f32.mrb[0].mxu0
          %4001 = vmatprep.mubr.bf16.mxu0 0
          %4002 = vmatmul.mubr.bf16.gmra.mrb[0].mxu0 %v3948
          %v4003 = vpop.f32.mrb[0].mxu0
          %v4004 = vadd.f32 0.0, %v4003
          %v4005 = vpop.f32.mrb[0].mxu0
          %v4006 = vpop.f32.mrb[0].mxu0
          %v4007 = vadd.f32 0.0, %v4006
          %v4008 = vpop.f32.mrb[0].mxu0
          %4009 = vmatprep.mubr.bf16.mxu0 0
          %4010 = vmatmul.mubr.bf16.gmra.mrb[0].mxu0 %v3951
          %v4011 = vpop.f32.mrb[0].mxu0
          %v4012 = vadd.f32 0.0, %v4011
          %v4013 = vpop.f32.mrb[0].mxu0
          %v4014 = vpop.f32.mrb[0].mxu0
          %v4015 = vpop.f32.mrb[0].mxu0
          %4016 = vdwg.mxu0
          %v4017 = vsub.f32 0.0, %v3988
          %v4018 = vsub.f32 0.0, %v3991
          %v4019 = vsub.f32 0.0, %v3996
          %v4020 = vsub.f32 0.0, %v3999
          %v4021 = vsub.f32 0.0, %v4004
          %v4022 = vsub.f32 0.0, %v4007
          %v4023 = vsub.f32 0.0, %v4012
          %v4024 = vmul.f32 %v4017, 1.442695
          %v4025 = vpow.pop %v4024
          %v4026 = vmul.f32 %v4018, 1.442695
          %v4027 = vpow.pop %v4026
          %v4028 = vmul.f32 %v4019, 1.442695
          %v4029 = vpow.pop %v4028
          %v4030 = vmul.f32 %v4020, 1.442695
          %v4031 = vpow.pop %v4030
          %v4032 = vmul.f32 %v4021, 1.442695
          %v4033 = vpow.pop %v4032
          %v4034 = vmul.f32 %v4022, 1.442695
          %v4035 = vpow.pop %v4034
          %v4036 = vmul.f32 %v4023, 1.442695
          %v4037 = vpow.pop %v4036
          %v4038 = vadd.f32 %v4025, 1.0
          %v4039 = vadd.f32 %v4027, 1.0
          %v4040 = vadd.f32 %v4029, 1.0
          %v4041 = vadd.f32 %v4031, 1.0
          %v4042 = vadd.f32 %v4033, 1.0
          %v4043 = vadd.f32 %v4035, 1.0
          %v4044 = vadd.f32 %v4037, 1.0
          %v4045 = vrcp.pop %v4038
          %v4046 = vmul.f32 1.0, %v4045
          %v4047 = vrcp.pop %v4039
          %v4048 = vmul.f32 1.0, %v4047
          %v4049 = vrcp.pop %v4040
          %v4050 = vmul.f32 1.0, %v4049
          %v4051 = vrcp.pop %v4041
          %v4052 = vmul.f32 1.0, %v4051
          %v4053 = vrcp.pop %v4042
          %v4054 = vmul.f32 1.0, %v4053
          %v4055 = vrcp.pop %v4043
          %v4056 = vmul.f32 1.0, %v4055
          %v4057 = vrcp.pop %v4044
          %v4058 = vmul.f32 1.0, %v4057
          %v4059 = vmul.f32 %v3988, %v4046
          %v4060 = vmul.f32 %v3991, %v4048
          %v4061 = vmul.f32 %v3996, %v4050
          %v4062 = vmul.f32 %v3999, %v4052
          %v4063 = vmul.f32 %v4004, %v4054
          %v4064 = vmul.f32 %v4007, %v4056
          %v4065 = vmul.f32 %v4012, %v4058
          %v4066 = vpack.c.bf16 %v4060, %v4059
          %v4067 = vpack.c.bf16 %v4062, %v4061
          %v4068 = vpack.c.bf16 %v4064, %v4063
          %v4069 = vpack.c.bf16 %v4065, %v4065
          %v4070 = vld [vmem:[%s5] sm:$0xf]
          %v4071 = vld [vmem:[%s5 + $0x4] sm:$0xf]
          %v4072 = vld [vmem:[%s5 + $0x8] sm:$0xf]
          %v4073 = vld [vmem:[%s5 + $0xc] sm:$0xf]
          %v4074 = vld [vmem:[%s5 + $0x10] sm:$0xf]
          %v4075 = vld [vmem:[%s5 + $0x14] sm:$0xf]
          %v4076 = vld [vmem:[%s5 + $0x18] sm:$0xf]
          %v4077 = vld [vmem:[%s5 + $0x1c] sm:$0xf]
          %v4086 = vunpack.c.l.b16 %v4070
          %v4087 = vunpack.c.l.b16 %v4071
          %v4088 = vunpack.c.l.b16 %v4072
          %v4089 = vunpack.c.l.b16 %v4073
          %v4090 = vunpack.c.l.b16 %v4074
          %v4091 = vunpack.c.l.b16 %v4075
          %v4092 = vunpack.c.l.b16 %v4076
          %v4093 = vunpack.c.l.b16 %v4077
          %v4094 = vpack.c.b16 %v4087, %v4086
          %v4095 = vpack.c.b16 %v4089, %v4088
          %v4096 = vpack.c.b16 %v4091, %v4090
          %v4097 = vpack.c.b16 %v4093, %v4092
          %v4103 = vsel %vm1080, %v4066, 0
          %v4106 = vsel %vm1080, %v4067, 0
          %v4109 = vsel %vm1080, %v4068, 0
          %v4112 = vsel %vm1080, %v4069, 0
          %4114 = vmatprep.subr.bf16.mxu0 0
          %4115 = vmatpush1.bf16.msra.mxu0 %v4094
          %4116 = vmatprep.subr.bf16.mxu0 0
          %4117 = vmatpush1.bf16.msra.mxu0 %v4095
          %4118 = vmatprep.subr.bf16.mxu0 0
          %4119 = vmatpush1.bf16.msra.mxu0 %v4096
          %4120 = vmatprep.subr.bf16.mxu0 0
          %4121 = vmatpush1.bf16.msra.mxu0 %v4097
          %4122 = vmatprep.subr.bf16.mxu0 0
          %4123 = vmatpush1.bf16.msra.mxu0 0
          %4124 = vmatprep.subr.bf16.mxu0 0
          %4125 = vmatpush1.bf16.msra.mxu0 0
          %4126 = vmatprep.subr.bf16.mxu0 0
          %4127 = vmatpush1.bf16.msra.mxu0 0
          %4128 = vmatprep.subr.bf16.mxu0 0
          %4129 = vmatpush1.bf16.msra.mxu0 0
          %4130 = vmatprep.subr.bf16.mxu0 0
          %4131 = vmatpush1.bf16.msra.mxu0 0
          %4132 = vmatprep.subr.bf16.mxu0 0
          %4133 = vmatpush1.bf16.msra.mxu0 0
          %4134 = vmatprep.subr.bf16.mxu0 0
          %4135 = vmatpush1.bf16.msra.mxu0 0
          %4136 = vmatprep.subr.bf16.mxu0 0
          %4137 = vmatpush1.bf16.msra.mxu0 0
          %4138 = vmatprep.subr.bf16.mxu0 0
          %4139 = vmatpush1.bf16.msra.mxu0 0
          %4140 = vmatprep.subr.bf16.mxu0 0
          %4141 = vmatpush1.bf16.msra.mxu0 0
          %4142 = vmatprep.subr.bf16.mxu0 0
          %4143 = vmatpush1.bf16.msra.mxu0 0
          %4144 = vmatprep.subr.bf16.mxu0 0
          %4145 = vmatpush1.bf16.msra.mxu0 0
          %4146 = vmatprep.mubr.bf16.mxu0 0
          %4147 = vmatmul.mubr.bf16.gmra.mrb[0].mxu0 %v4103
          %v4148 = vpop.f32.mrb[0].mxu0
          %v4149 = vadd.f32 0.0, %v4148
          %v4150 = vpop.f32.mrb[0].mxu0
          %v4151 = vpop.f32.mrb[0].mxu0
          %v4152 = vadd.f32 0.0, %v4151
          %v4153 = vpop.f32.mrb[0].mxu0
          %4154 = vmatprep.mubr.bf16.mxu0 0
          %4155 = vmatmul.mubr.bf16.gmra.mrb[0].mxu0 %v4106
          %v4156 = vpop.f32.mrb[0].mxu0
          %v4157 = vadd.f32 0.0, %v4156
          %v4158 = vpop.f32.mrb[0].mxu0
          %v4159 = vpop.f32.mrb[0].mxu0
          %v4160 = vadd.f32 0.0, %v4159
          %v4161 = vpop.f32.mrb[0].mxu0
          %4162 = vmatprep.mubr.bf16.mxu0 0
          %4163 = vmatmul.mubr.bf16.gmra.mrb[0].mxu0 %v4109
          %v4164 = vpop.f32.mrb[0].mxu0
          %v4165 = vadd.f32 0.0, %v4164
          %v4166 = vpop.f32.mrb[0].mxu0
          %v4167 = vpop.f32.mrb[0].mxu0
          %v4168 = vadd.f32 0.0, %v4167
          %v4169 = vpop.f32.mrb[0].mxu0
          %4170 = vmatprep.mubr.bf16.mxu0 0
          %4171 = vmatmul.mubr.bf16.gmra.mrb[0].mxu0 %v4112
          %v4172 = vpop.f32.mrb[0].mxu0
          %v4173 = vadd.f32 0.0, %v4172
          %v4174 = vpop.f32.mrb[0].mxu0
          %v4175 = vpop.f32.mrb[0].mxu0
          %v4176 = vpop.f32.mrb[0].mxu0
          %4177 = vdwg.mxu0
          %v4178 = vsub.f32 0.0, %v4149
          %v4179 = vsub.f32 0.0, %v4152
          %v4180 = vsub.f32 0.0, %v4157
          %v4181 = vsub.f32 0.0, %v4160
          %v4182 = vsub.f32 0.0, %v4165
          %v4183 = vsub.f32 0.0, %v4168
          %v4184 = vsub.f32 0.0, %v4173
          %v4185 = vmul.f32 %v4178, 1.442695
          %v4186 = vpow.pop %v4185
          %v4187 = vmul.f32 %v4179, 1.442695
          %v4188 = vpow.pop %v4187
          %v4189 = vmul.f32 %v4180, 1.442695
          %v4190 = vpow.pop %v4189
          %v4191 = vmul.f32 %v4181, 1.442695
          %v4192 = vpow.pop %v4191
          %v4193 = vmul.f32 %v4182, 1.442695
          %v4194 = vpow.pop %v4193
          %v4195 = vmul.f32 %v4183, 1.442695
          %v4196 = vpow.pop %v4195
          %v4197 = vmul.f32 %v4184, 1.442695
          %v4198 = vpow.pop %v4197
          %v4199 = vadd.f32 %v4186, 1.0
          %v4200 = vadd.f32 %v4188, 1.0
          %v4201 = vadd.f32 %v4190, 1.0
          %v4202 = vadd.f32 %v4192, 1.0
          %v4203 = vadd.f32 %v4194, 1.0
          %v4204 = vadd.f32 %v4196, 1.0
          %v4205 = vadd.f32 %v4198, 1.0
          %v4206 = vrcp.pop %v4199
          %v4207 = vmul.f32 1.0, %v4206
          %v4208 = vrcp.pop %v4200
          %v4209 = vmul.f32 1.0, %v4208
          %v4210 = vrcp.pop %v4201
          %v4211 = vmul.f32 1.0, %v4210
          %v4212 = vrcp.pop %v4202
          %v4213 = vmul.f32 1.0, %v4212
          %v4214 = vrcp.pop %v4203
          %v4215 = vmul.f32 1.0, %v4214
          %v4216 = vrcp.pop %v4204
          %v4217 = vmul.f32 1.0, %v4216
          %v4218 = vrcp.pop %v4205
          %v4219 = vmul.f32 1.0, %v4218
          %v4220 = vmul.f32 %v4149, %v4207
          %v4221 = vmul.f32 %v4152, %v4209
          %v4222 = vmul.f32 %v4157, %v4211
          %v4223 = vmul.f32 %v4160, %v4213
          %v4224 = vmul.f32 %v4165, %v4215
          %v4225 = vmul.f32 %v4168, %v4217
          %v4226 = vmul.f32 %v4173, %v4219
          %v4227 = vpack.c.bf16 %v4221, %v4220
          %v4228 = vpack.c.bf16 %v4223, %v4222
          %v4229 = vpack.c.bf16 %v4225, %v4224
          %v4230 = vpack.c.bf16 %v4226, %v4226
          %v4231 = vld [vmem:[%s6] sm:$0xf]
          %v4232 = vld [vmem:[%s6 + $0x4] sm:$0xf]
          %v4233 = vld [vmem:[%s6 + $0x8] sm:$0xf]
          %v4234 = vld [vmem:[%s6 + $0xc] sm:$0xf]
          %v4235 = vld [vmem:[%s6 + $0x10] sm:$0xf]
          %v4236 = vld [vmem:[%s6 + $0x14] sm:$0xf]
          %v4237 = vld [vmem:[%s6 + $0x18] sm:$0xf]
          %v4238 = vld [vmem:[%s6 + $0x1c] sm:$0xf]
          %v4247 = vunpack.c.l.b16 %v4231
          %v4248 = vunpack.c.l.b16 %v4232
          %v4249 = vunpack.c.l.b16 %v4233
          %v4250 = vunpack.c.l.b16 %v4234
          %v4251 = vunpack.c.l.b16 %v4235
          %v4252 = vunpack.c.l.b16 %v4236
          %v4253 = vunpack.c.l.b16 %v4237
          %v4254 = vunpack.c.l.b16 %v4238
          %v4255 = vpack.c.b16 %v4248, %v4247
          %v4256 = vpack.c.b16 %v4250, %v4249
          %v4257 = vpack.c.b16 %v4252, %v4251
          %v4258 = vpack.c.b16 %v4254, %v4253
          %v4264 = vsel %vm1080, %v4227, 0
          %v4267 = vsel %vm1080, %v4228, 0
          %v4270 = vsel %vm1080, %v4229, 0
          %v4273 = vsel %vm1080, %v4230, 0
          %4275 = vmatprep.subr.bf16.mxu0 0
          %4276 = vmatpush1.bf16.msra.mxu0 %v4255
          %4277 = vmatprep.subr.bf16.mxu0 0
          %4278 = vmatpush1.bf16.msra.mxu0 %v4256
          %4279 = vmatprep.subr.bf16.mxu0 0
          %4280 = vmatpush1.bf16.msra.mxu0 %v4257
          %4281 = vmatprep.subr.bf16.mxu0 0
          %4282 = vmatpush1.bf16.msra.mxu0 %v4258
          %4283 = vmatprep.subr.bf16.mxu0 0
          %4284 = vmatpush1.bf16.msra.mxu0 0
          %4285 = vmatprep.subr.bf16.mxu0 0
          %4286 = vmatpush1.bf16.msra.mxu0 0
          %4287 = vmatprep.subr.bf16.mxu0 0
          %4288 = vmatpush1.bf16.msra.mxu0 0
          %4289 = vmatprep.subr.bf16.mxu0 0
          %4290 = vmatpush1.bf16.msra.mxu0 0
          %4291 = vmatprep.subr.bf16.mxu0 0
          %4292 = vmatpush1.bf16.msra.mxu0 0
          %4293 = vmatprep.subr.bf16.mxu0 0
          %4294 = vmatpush1.bf16.msra.mxu0 0
          %4295 = vmatprep.subr.bf16.mxu0 0
          %4296 = vmatpush1.bf16.msra.mxu0 0
          %4297 = vmatprep.subr.bf16.mxu0 0
          %4298 = vmatpush1.bf16.msra.mxu0 0
          %4299 = vmatprep.subr.bf16.mxu0 0
          %4300 = vmatpush1.bf16.msra.mxu0 0
          %4301 = vmatprep.subr.bf16.mxu0 0
          %4302 = vmatpush1.bf16.msra.mxu0 0
          %4303 = vmatprep.subr.bf16.mxu0 0
          %4304 = vmatpush1.bf16.msra.mxu0 0
          %4305 = vmatprep.subr.bf16.mxu0 0
          %4306 = vmatpush1.bf16.msra.mxu0 0
          %4307 = vmatprep.mubr.bf16.mxu0 0
          %4308 = vmatmul.mubr.bf16.gmra.mrb[0].mxu0 %v4264
          %v4309 = vpop.f32.mrb[0].mxu0
          %v4310 = vadd.f32 0.0, %v4309
          %v4311 = vpop.f32.mrb[0].mxu0
          %v4312 = vpop.f32.mrb[0].mxu0
          %v4313 = vadd.f32 0.0, %v4312
          %v4314 = vpop.f32.mrb[0].mxu0
          %4315 = vmatprep.mubr.bf16.mxu0 0
          %4316 = vmatmul.mubr.bf16.gmra.mrb[0].mxu0 %v4267
          %v4317 = vpop.f32.mrb[0].mxu0
          %v4318 = vadd.f32 0.0, %v4317
          %v4319 = vpop.f32.mrb[0].mxu0
          %v4320 = vpop.f32.mrb[0].mxu0
          %v4321 = vadd.f32 0.0, %v4320
          %v4322 = vpop.f32.mrb[0].mxu0
          %4323 = vmatprep.mubr.bf16.mxu0 0
          %4324 = vmatmul.mubr.bf16.gmra.mrb[0].mxu0 %v4270
          %v4325 = vpop.f32.mrb[0].mxu0
          %v4326 = vadd.f32 0.0, %v4325
          %v4327 = vpop.f32.mrb[0].mxu0
          %v4328 = vpop.f32.mrb[0].mxu0
          %v4329 = vadd.f32 0.0, %v4328
          %v4330 = vpop.f32.mrb[0].mxu0
          %4331 = vmatprep.mubr.bf16.mxu0 0
          %4332 = vmatmul.mubr.bf16.gmra.mrb[0].mxu0 %v4273
          %v4333 = vpop.f32.mrb[0].mxu0
          %v4334 = vadd.f32 0.0, %v4333
          %v4335 = vpop.f32.mrb[0].mxu0
          %v4336 = vpop.f32.mrb[0].mxu0
          %v4337 = vpop.f32.mrb[0].mxu0
          %4338 = vdwg.mxu0
          %v4339 = vsub.f32 0.0, %v4310
          %v4340 = vsub.f32 0.0, %v4313
          %v4341 = vsub.f32 0.0, %v4318
          %v4342 = vsub.f32 0.0, %v4321
          %v4343 = vsub.f32 0.0, %v4326
          %v4344 = vsub.f32 0.0, %v4329
          %v4345 = vsub.f32 0.0, %v4334
          %v4346 = vmul.f32 %v4339, 1.442695
          %v4347 = vpow.pop %v4346
          %v4348 = vmul.f32 %v4340, 1.442695
          %v4349 = vpow.pop %v4348
          %v4350 = vmul.f32 %v4341, 1.442695
          %v4351 = vpow.pop %v4350
          %v4352 = vmul.f32 %v4342, 1.442695
          %v4353 = vpow.pop %v4352
          %v4354 = vmul.f32 %v4343, 1.442695
          %v4355 = vpow.pop %v4354
          %v4356 = vmul.f32 %v4344, 1.442695
          %v4357 = vpow.pop %v4356
          %v4358 = vmul.f32 %v4345, 1.442695
          %v4359 = vpow.pop %v4358
          %v4360 = vadd.f32 %v4347, 1.0
          %v4361 = vadd.f32 %v4349, 1.0
          %v4362 = vadd.f32 %v4351, 1.0
          %v4363 = vadd.f32 %v4353, 1.0
          %v4364 = vadd.f32 %v4355, 1.0
          %v4365 = vadd.f32 %v4357, 1.0
          %v4366 = vadd.f32 %v4359, 1.0
          %v4367 = vrcp.pop %v4360
          %v4368 = vmul.f32 1.0, %v4367
          %v4369 = vrcp.pop %v4361
          %v4370 = vmul.f32 1.0, %v4369
          %v4371 = vrcp.pop %v4362
          %v4372 = vmul.f32 1.0, %v4371
          %v4373 = vrcp.pop %v4363
          %v4374 = vmul.f32 1.0, %v4373
          %v4375 = vrcp.pop %v4364
          %v4376 = vmul.f32 1.0, %v4375
          %v4377 = vrcp.pop %v4365
          %v4378 = vmul.f32 1.0, %v4377
          %v4379 = vrcp.pop %v4366
          %v4380 = vmul.f32 1.0, %v4379
          %v4381 = vmul.f32 %v4310, %v4368
          %v4382 = vmul.f32 %v4313, %v4370
          %v4383 = vmul.f32 %v4318, %v4372
          %v4384 = vmul.f32 %v4321, %v4374
          %v4385 = vmul.f32 %v4326, %v4376
          %v4386 = vmul.f32 %v4329, %v4378
          %v4387 = vmul.f32 %v4334, %v4380
          %v4388 = vadd.f32 %v4059, %v4381
          %v4389 = vadd.f32 %v4060, %v4382
          %v4390 = vadd.f32 %v4061, %v4383
          %v4391 = vadd.f32 %v4062, %v4384
          %v4392 = vadd.f32 %v4063, %v4385
          %v4393 = vadd.f32 %v4064, %v4386
          %v4394 = vadd.f32 %v4065, %v4387
          %v4395 = vmul.f32 %v4388, 0.70710677
          %v4396 = vmul.f32 %v4389, 0.70710677
          %v4397 = vmul.f32 %v4390, 0.70710677
          %v4398 = vmul.f32 %v4391, 0.70710677
          %v4399 = vmul.f32 %v4392, 0.70710677
          %v4400 = vmul.f32 %v4393, 0.70710677
          %v4401 = vmul.f32 %v4394, 0.70710677
          %v4402 = vpack.c.bf16 %v4396, %v4395
          %v4403 = vpack.c.bf16 %v4398, %v4397
          %v4404 = vpack.c.bf16 %v4400, %v4399
          %v4405 = vpack.c.bf16 %v4401, %v4401
          %v4406 = vld [vmem:[%s7] sm:$0xf]
          %v4407 = vld [vmem:[%s7 + $0x4] sm:$0xf]
          %v4408 = vld [vmem:[%s7 + $0x8] sm:$0xf]
          %v4409 = vld [vmem:[%s7 + $0xc] sm:$0xf]
          %v4410 = vld [vmem:[%s7 + $0x10] sm:$0xf]
          %v4411 = vld [vmem:[%s7 + $0x14] sm:$0xf]
          %v4412 = vld [vmem:[%s7 + $0x18] sm:$0xf]
          %v4413 = vld [vmem:[%s7 + $0x1c] sm:$0xf]
          %v4422 = vunpack.c.l.b16 %v4406
          %v4423 = vunpack.c.l.b16 %v4407
          %v4424 = vunpack.c.l.b16 %v4408
          %v4425 = vunpack.c.l.b16 %v4409
          %v4426 = vunpack.c.l.b16 %v4410
          %v4427 = vunpack.c.l.b16 %v4411
          %v4428 = vunpack.c.l.b16 %v4412
          %v4429 = vunpack.c.l.b16 %v4413
          %v4430 = vpack.c.b16 %v4423, %v4422
          %v4431 = vpack.c.b16 %v4425, %v4424
          %v4432 = vpack.c.b16 %v4427, %v4426
          %v4433 = vpack.c.b16 %v4429, %v4428
          %v4439 = vsel %vm1080, %v4402, 0
          %v4442 = vsel %vm1080, %v4403, 0
          %v4445 = vsel %vm1080, %v4404, 0
          %v4448 = vsel %vm1080, %v4405, 0
          %4450 = vmatprep.subr.bf16.mxu0 0
          %4451 = vmatpush1.bf16.msra.mxu0 %v4430
          %4452 = vmatprep.subr.bf16.mxu0 0
          %4453 = vmatpush1.bf16.msra.mxu0 %v4431
          %4454 = vmatprep.subr.bf16.mxu0 0
          %4455 = vmatpush1.bf16.msra.mxu0 %v4432
          %4456 = vmatprep.subr.bf16.mxu0 0
          %4457 = vmatpush1.bf16.msra.mxu0 %v4433
          %4458 = vmatprep.subr.bf16.mxu0 0
          %4459 = vmatpush1.bf16.msra.mxu0 0
          %4460 = vmatprep.subr.bf16.mxu0 0
          %4461 = vmatpush1.bf16.msra.mxu0 0
          %4462 = vmatprep.subr.bf16.mxu0 0
          %4463 = vmatpush1.bf16.msra.mxu0 0
          %4464 = vmatprep.subr.bf16.mxu0 0
          %4465 = vmatpush1.bf16.msra.mxu0 0
          %4466 = vmatprep.subr.bf16.mxu0 0
          %4467 = vmatpush1.bf16.msra.mxu0 0
          %4468 = vmatprep.subr.bf16.mxu0 0
          %4469 = vmatpush1.bf16.msra.mxu0 0
          %4470 = vmatprep.subr.bf16.mxu0 0
          %4471 = vmatpush1.bf16.msra.mxu0 0
          %4472 = vmatprep.subr.bf16.mxu0 0
          %4473 = vmatpush1.bf16.msra.mxu0 0
          %4474 = vmatprep.subr.bf16.mxu0 0
          %4475 = vmatpush1.bf16.msra.mxu0 0
          %4476 = vmatprep.subr.bf16.mxu0 0
          %4477 = vmatpush1.bf16.msra.mxu0 0
          %4478 = vmatprep.subr.bf16.mxu0 0
          %4479 = vmatpush1.bf16.msra.mxu0 0
          %4480 = vmatprep.subr.bf16.mxu0 0
          %4481 = vmatpush1.bf16.msra.mxu0 0
          %4482 = vmatprep.mubr.bf16.mxu0 0
          %4483 = vmatmul.mubr.bf16.gmra.mrb[0].mxu0 %v4439
          %v4484 = vpop.f32.mrb[0].mxu0
          %v4485 = vadd.f32 0.0, %v4484
          %v4486 = vpop.f32.mrb[0].mxu0
          %v4487 = vpop.f32.mrb[0].mxu0
          %v4488 = vadd.f32 0.0, %v4487
          %v4489 = vpop.f32.mrb[0].mxu0
          %4490 = vmatprep.mubr.bf16.mxu0 0
          %4491 = vmatmul.mubr.bf16.gmra.mrb[0].mxu0 %v4442
          %v4492 = vpop.f32.mrb[0].mxu0
          %v4493 = vadd.f32 0.0, %v4492
          %v4494 = vpop.f32.mrb[0].mxu0
          %v4495 = vpop.f32.mrb[0].mxu0
          %v4496 = vadd.f32 0.0, %v4495
          %v4497 = vpop.f32.mrb[0].mxu0
          %4498 = vmatprep.mubr.bf16.mxu0 0
          %4499 = vmatmul.mubr.bf16.gmra.mrb[0].mxu0 %v4445
          %v4500 = vpop.f32.mrb[0].mxu0
          %v4501 = vadd.f32 0.0, %v4500
          %v4502 = vpop.f32.mrb[0].mxu0
          %v4503 = vpop.f32.mrb[0].mxu0
          %v4504 = vadd.f32 0.0, %v4503
          %v4505 = vpop.f32.mrb[0].mxu0
          %4506 = vmatprep.mubr.bf16.mxu0 0
          %4507 = vmatmul.mubr.bf16.gmra.mrb[0].mxu0 %v4448
          %v4508 = vpop.f32.mrb[0].mxu0
          %v4509 = vadd.f32 0.0, %v4508
          %v4510 = vpop.f32.mrb[0].mxu0
          %v4511 = vpop.f32.mrb[0].mxu0
          %v4512 = vpop.f32.mrb[0].mxu0
          %4513 = vdwg.mxu0
          %v4514 = vsub.f32 0.0, %v4485
          %v4515 = vsub.f32 0.0, %v4488
          %v4516 = vsub.f32 0.0, %v4493
          %v4517 = vsub.f32 0.0, %v4496
          %v4518 = vsub.f32 0.0, %v4501
          %v4519 = vsub.f32 0.0, %v4504
          %v4520 = vsub.f32 0.0, %v4509
          %v4521 = vmul.f32 %v4514, 1.442695
          %v4522 = vpow.pop %v4521
          %v4523 = vmul.f32 %v4515, 1.442695
          %v4524 = vpow.pop %v4523
          %v4525 = vmul.f32 %v4516, 1.442695
          %v4526 = vpow.pop %v4525
          %v4527 = vmul.f32 %v4517, 1.442695
          %v4528 = vpow.pop %v4527
          %v4529 = vmul.f32 %v4518, 1.442695
          %v4530 = vpow.pop %v4529
          %v4531 = vmul.f32 %v4519, 1.442695
          %v4532 = vpow.pop %v4531
          %v4533 = vmul.f32 %v4520, 1.442695
          %v4534 = vpow.pop %v4533
          %v4535 = vadd.f32 %v4522, 1.0
          %v4536 = vadd.f32 %v4524, 1.0
          %v4537 = vadd.f32 %v4526, 1.0
          %v4538 = vadd.f32 %v4528, 1.0
          %v4539 = vadd.f32 %v4530, 1.0
          %v4540 = vadd.f32 %v4532, 1.0
          %v4541 = vadd.f32 %v4534, 1.0
          %v4542 = vrcp.pop %v4535
          %v4543 = vmul.f32 1.0, %v4542
          %v4544 = vrcp.pop %v4536
          %v4545 = vmul.f32 1.0, %v4544
          %v4546 = vrcp.pop %v4537
          %v4547 = vmul.f32 1.0, %v4546
          %v4548 = vrcp.pop %v4538
          %v4549 = vmul.f32 1.0, %v4548
          %v4550 = vrcp.pop %v4539
          %v4551 = vmul.f32 1.0, %v4550
          %v4552 = vrcp.pop %v4540
          %v4553 = vmul.f32 1.0, %v4552
          %v4554 = vrcp.pop %v4541
          %v4555 = vmul.f32 1.0, %v4554
          %v4556 = vmul.f32 %v4485, %v4543
          %v4557 = vmul.f32 %v4488, %v4545
          %v4558 = vmul.f32 %v4493, %v4547
          %v4559 = vmul.f32 %v4496, %v4549
          %v4560 = vmul.f32 %v4501, %v4551
          %v4561 = vmul.f32 %v4504, %v4553
          %v4562 = vmul.f32 %v4509, %v4555
          %v4563 = vpack.c.bf16 %v4557, %v4556
          %v4564 = vpack.c.bf16 %v4559, %v4558
          %v4565 = vpack.c.bf16 %v4561, %v4560
          %v4566 = vpack.c.bf16 %v4562, %v4562
          %v4567 = vld [vmem:[%s8] sm:$0xf]
          %v4568 = vld [vmem:[%s8 + $0x4] sm:$0xf]
          %v4569 = vld [vmem:[%s8 + $0x8] sm:$0xf]
          %v4570 = vld [vmem:[%s8 + $0xc] sm:$0xf]
          %v4571 = vld [vmem:[%s8 + $0x10] sm:$0xf]
          %v4572 = vld [vmem:[%s8 + $0x14] sm:$0xf]
          %v4573 = vld [vmem:[%s8 + $0x18] sm:$0xf]
          %v4574 = vld [vmem:[%s8 + $0x1c] sm:$0xf]
          %v4583 = vunpack.c.l.b16 %v4567
          %v4584 = vunpack.c.l.b16 %v4568
          %v4585 = vunpack.c.l.b16 %v4569
          %v4586 = vunpack.c.l.b16 %v4570
          %v4587 = vunpack.c.l.b16 %v4571
          %v4588 = vunpack.c.l.b16 %v4572
          %v4589 = vunpack.c.l.b16 %v4573
          %v4590 = vunpack.c.l.b16 %v4574
          %v4591 = vpack.c.b16 %v4584, %v4583
          %v4592 = vpack.c.b16 %v4586, %v4585
          %v4593 = vpack.c.b16 %v4588, %v4587
          %v4594 = vpack.c.b16 %v4590, %v4589
          %v4600 = vsel %vm1080, %v4563, 0
          %v4603 = vsel %vm1080, %v4564, 0
          %v4606 = vsel %vm1080, %v4565, 0
          %v4609 = vsel %vm1080, %v4566, 0
          %4611 = vmatprep.subr.bf16.mxu0 0
          %4612 = vmatpush1.bf16.msra.mxu0 %v4591
          %4613 = vmatprep.subr.bf16.mxu0 0
          %4614 = vmatpush1.bf16.msra.mxu0 %v4592
          %4615 = vmatprep.subr.bf16.mxu0 0
          %4616 = vmatpush1.bf16.msra.mxu0 %v4593
          %4617 = vmatprep.subr.bf16.mxu0 0
          %4618 = vmatpush1.bf16.msra.mxu0 %v4594
          %4619 = vmatprep.subr.bf16.mxu0 0
          %4620 = vmatpush1.bf16.msra.mxu0 0
          %4621 = vmatprep.subr.bf16.mxu0 0
          %4622 = vmatpush1.bf16.msra.mxu0 0
          %4623 = vmatprep.subr.bf16.mxu0 0
          %4624 = vmatpush1.bf16.msra.mxu0 0
          %4625 = vmatprep.subr.bf16.mxu0 0
          %4626 = vmatpush1.bf16.msra.mxu0 0
          %4627 = vmatprep.subr.bf16.mxu0 0
          %4628 = vmatpush1.bf16.msra.mxu0 0
          %4629 = vmatprep.subr.bf16.mxu0 0
          %4630 = vmatpush1.bf16.msra.mxu0 0
          %4631 = vmatprep.subr.bf16.mxu0 0
          %4632 = vmatpush1.bf16.msra.mxu0 0
          %4633 = vmatprep.subr.bf16.mxu0 0
          %4634 = vmatpush1.bf16.msra.mxu0 0
          %4635 = vmatprep.subr.bf16.mxu0 0
          %4636 = vmatpush1.bf16.msra.mxu0 0
          %4637 = vmatprep.subr.bf16.mxu0 0
          %4638 = vmatpush1.bf16.msra.mxu0 0
          %4639 = vmatprep.subr.bf16.mxu0 0
          %4640 = vmatpush1.bf16.msra.mxu0 0
          %4641 = vmatprep.subr.bf16.mxu0 0
          %4642 = vmatpush1.bf16.msra.mxu0 0
          %4643 = vmatprep.mubr.bf16.mxu0 0
          %4644 = vmatmul.mubr.bf16.gmra.mrb[0].mxu0 %v4600
          %v4645 = vpop.f32.mrb[0].mxu0
          %v4646 = vadd.f32 0.0, %v4645
          %v4647 = vpop.f32.mrb[0].mxu0
          %v4648 = vpop.f32.mrb[0].mxu0
          %v4649 = vadd.f32 0.0, %v4648
          %v4650 = vpop.f32.mrb[0].mxu0
          %4651 = vmatprep.mubr.bf16.mxu0 0
          %4652 = vmatmul.mubr.bf16.gmra.mrb[0].mxu0 %v4603
          %v4653 = vpop.f32.mrb[0].mxu0
          %v4654 = vadd.f32 0.0, %v4653
          %v4655 = vpop.f32.mrb[0].mxu0
          %v4656 = vpop.f32.mrb[0].mxu0
          %v4657 = vadd.f32 0.0, %v4656
          %v4658 = vpop.f32.mrb[0].mxu0
          %4659 = vmatprep.mubr.bf16.mxu0 0
          %4660 = vmatmul.mubr.bf16.gmra.mrb[0].mxu0 %v4606
          %v4661 = vpop.f32.mrb[0].mxu0
          %v4662 = vadd.f32 0.0, %v4661
          %v4663 = vpop.f32.mrb[0].mxu0
          %v4664 = vpop.f32.mrb[0].mxu0
          %v4665 = vadd.f32 0.0, %v4664
          %v4666 = vpop.f32.mrb[0].mxu0
          %4667 = vmatprep.mubr.bf16.mxu0 0
          %4668 = vmatmul.mubr.bf16.gmra.mrb[0].mxu0 %v4609
          %v4669 = vpop.f32.mrb[0].mxu0
          %v4670 = vadd.f32 0.0, %v4669
          %v4671 = vpop.f32.mrb[0].mxu0
          %v4672 = vpop.f32.mrb[0].mxu0
          %v4673 = vpop.f32.mrb[0].mxu0
          %4674 = vdwg.mxu0
          %v4675 = vsub.f32 0.0, %v4646
          %v4676 = vsub.f32 0.0, %v4649
          %v4677 = vsub.f32 0.0, %v4654
          %v4678 = vsub.f32 0.0, %v4657
          %v4679 = vsub.f32 0.0, %v4662
          %v4680 = vsub.f32 0.0, %v4665
          %v4681 = vsub.f32 0.0, %v4670
          %v4682 = vmul.f32 %v4675, 1.442695
          %v4683 = vpow.pop %v4682
          %v4684 = vmul.f32 %v4676, 1.442695
          %v4685 = vpow.pop %v4684
          %v4686 = vmul.f32 %v4677, 1.442695
          %v4687 = vpow.pop %v4686
          %v4688 = vmul.f32 %v4678, 1.442695
          %v4689 = vpow.pop %v4688
          %v4690 = vmul.f32 %v4679, 1.442695
          %v4691 = vpow.pop %v4690
          %v4692 = vmul.f32 %v4680, 1.442695
          %v4693 = vpow.pop %v4692
          %v4694 = vmul.f32 %v4681, 1.442695
          %v4695 = vpow.pop %v4694
          %v4696 = vadd.f32 %v4683, 1.0
          %v4697 = vadd.f32 %v4685, 1.0
          %v4698 = vadd.f32 %v4687, 1.0
          %v4699 = vadd.f32 %v4689, 1.0
          %v4700 = vadd.f32 %v4691, 1.0
          %v4701 = vadd.f32 %v4693, 1.0
          %v4702 = vadd.f32 %v4695, 1.0
          %v4703 = vrcp.pop %v4696
          %v4704 = vmul.f32 1.0, %v4703
          %v4705 = vrcp.pop %v4697
          %v4706 = vmul.f32 1.0, %v4705
          %v4707 = vrcp.pop %v4698
          %v4708 = vmul.f32 1.0, %v4707
          %v4709 = vrcp.pop %v4699
          %v4710 = vmul.f32 1.0, %v4709
          %v4711 = vrcp.pop %v4700
          %v4712 = vmul.f32 1.0, %v4711
          %v4713 = vrcp.pop %v4701
          %v4714 = vmul.f32 1.0, %v4713
          %v4715 = vrcp.pop %v4702
          %v4716 = vmul.f32 1.0, %v4715
          %v4717 = vmul.f32 %v4646, %v4704
          %v4718 = vmul.f32 %v4649, %v4706
          %v4719 = vmul.f32 %v4654, %v4708
          %v4720 = vmul.f32 %v4657, %v4710
          %v4721 = vmul.f32 %v4662, %v4712
          %v4722 = vmul.f32 %v4665, %v4714
          %v4723 = vmul.f32 %v4670, %v4716
          %v4724 = vadd.f32 %v4395, %v4717
          %v4725 = vadd.f32 %v4396, %v4718
          %v4726 = vadd.f32 %v4397, %v4719
          %v4727 = vadd.f32 %v4398, %v4720
          %v4728 = vadd.f32 %v4399, %v4721
          %v4729 = vadd.f32 %v4400, %v4722
          %v4730 = vadd.f32 %v4401, %v4723
          %v4731 = vmul.f32 %v4724, 0.70710677
          %v4732 = vmul.f32 %v4725, 0.70710677
          %v4733 = vmul.f32 %v4726, 0.70710677
          %v4734 = vmul.f32 %v4727, 0.70710677
          %v4735 = vmul.f32 %v4728, 0.70710677
          %v4736 = vmul.f32 %v4729, 0.70710677
          %v4737 = vmul.f32 %v4730, 0.70710677
          %v4738 = vpack.c.bf16 %v4732, %v4731
          %v4739 = vpack.c.bf16 %v4734, %v4733
          %v4740 = vpack.c.bf16 %v4736, %v4735
          %v4741 = vpack.c.bf16 %v4737, %v4737
          %v4742 = vld [vmem:[%s9] sm:$0xf]
          %v4743 = vld [vmem:[%s9 + $0x4] sm:$0xf]
          %v4744 = vld [vmem:[%s9 + $0x8] sm:$0xf]
          %v4745 = vld [vmem:[%s9 + $0xc] sm:$0xf]
          %v4746 = vld [vmem:[%s9 + $0x10] sm:$0xf]
          %v4747 = vld [vmem:[%s9 + $0x14] sm:$0xf]
          %v4748 = vld [vmem:[%s9 + $0x18] sm:$0xf]
          %v4749 = vld [vmem:[%s9 + $0x1c] sm:$0xf]
          %v4758 = vunpack.c.l.b16 %v4742
          %v4759 = vunpack.c.l.b16 %v4743
          %v4760 = vunpack.c.l.b16 %v4744
          %v4761 = vunpack.c.l.b16 %v4745
          %v4762 = vunpack.c.l.b16 %v4746
          %v4763 = vunpack.c.l.b16 %v4747
          %v4764 = vunpack.c.l.b16 %v4748
          %v4765 = vunpack.c.l.b16 %v4749
          %v4766 = vpack.c.b16 %v4759, %v4758
          %v4767 = vpack.c.b16 %v4761, %v4760
          %v4768 = vpack.c.b16 %v4763, %v4762
          %v4769 = vpack.c.b16 %v4765, %v4764
          %v4775 = vsel %vm1080, %v4738, 0
          %v4778 = vsel %vm1080, %v4739, 0
          %v4781 = vsel %vm1080, %v4740, 0
          %v4784 = vsel %vm1080, %v4741, 0
          %4786 = vmatprep.subr.bf16.mxu0 0
          %4787 = vmatpush1.bf16.msra.mxu0 %v4766
          %4788 = vmatprep.subr.bf16.mxu0 0
          %4789 = vmatpush1.bf16.msra.mxu0 %v4767
          %4790 = vmatprep.subr.bf16.mxu0 0
          %4791 = vmatpush1.bf16.msra.mxu0 %v4768
          %4792 = vmatprep.subr.bf16.mxu0 0
          %4793 = vmatpush1.bf16.msra.mxu0 %v4769
          %4794 = vmatprep.subr.bf16.mxu0 0
          %4795 = vmatpush1.bf16.msra.mxu0 0
          %4796 = vmatprep.subr.bf16.mxu0 0
          %4797 = vmatpush1.bf16.msra.mxu0 0
          %4798 = vmatprep.subr.bf16.mxu0 0
          %4799 = vmatpush1.bf16.msra.mxu0 0
          %4800 = vmatprep.subr.bf16.mxu0 0
          %4801 = vmatpush1.bf16.msra.mxu0 0
          %4802 = vmatprep.subr.bf16.mxu0 0
          %4803 = vmatpush1.bf16.msra.mxu0 0
          %4804 = vmatprep.subr.bf16.mxu0 0
          %4805 = vmatpush1.bf16.msra.mxu0 0
          %4806 = vmatprep.subr.bf16.mxu0 0
          %4807 = vmatpush1.bf16.msra.mxu0 0
          %4808 = vmatprep.subr.bf16.mxu0 0
          %4809 = vmatpush1.bf16.msra.mxu0 0
          %4810 = vmatprep.subr.bf16.mxu0 0
          %4811 = vmatpush1.bf16.msra.mxu0 0
          %4812 = vmatprep.subr.bf16.mxu0 0
          %4813 = vmatpush1.bf16.msra.mxu0 0
          %4814 = vmatprep.subr.bf16.mxu0 0
          %4815 = vmatpush1.bf16.msra.mxu0 0
          %4816 = vmatprep.subr.bf16.mxu0 0
          %4817 = vmatpush1.bf16.msra.mxu0 0
          %4818 = vmatprep.mubr.bf16.mxu0 0
          %4819 = vmatmul.mubr.bf16.gmra.mrb[0].mxu0 %v4775
          %v4820 = vpop.f32.mrb[0].mxu0
          %v4821 = vadd.f32 0.0, %v4820
          %v4822 = vpop.f32.mrb[0].mxu0
          %v4823 = vpop.f32.mrb[0].mxu0
          %v4824 = vadd.f32 0.0, %v4823
          %v4825 = vpop.f32.mrb[0].mxu0
          %4826 = vmatprep.mubr.bf16.mxu0 0
          %4827 = vmatmul.mubr.bf16.gmra.mrb[0].mxu0 %v4778
          %v4828 = vpop.f32.mrb[0].mxu0
          %v4829 = vadd.f32 0.0, %v4828
          %v4830 = vpop.f32.mrb[0].mxu0
          %v4831 = vpop.f32.mrb[0].mxu0
          %v4832 = vadd.f32 0.0, %v4831
          %v4833 = vpop.f32.mrb[0].mxu0
          %4834 = vmatprep.mubr.bf16.mxu0 0
          %4835 = vmatmul.mubr.bf16.gmra.mrb[0].mxu0 %v4781
          %v4836 = vpop.f32.mrb[0].mxu0
          %v4837 = vadd.f32 0.0, %v4836
          %v4838 = vpop.f32.mrb[0].mxu0
          %v4839 = vpop.f32.mrb[0].mxu0
          %v4840 = vadd.f32 0.0, %v4839
          %v4841 = vpop.f32.mrb[0].mxu0
          %4842 = vmatprep.mubr.bf16.mxu0 0
          %4843 = vmatmul.mubr.bf16.gmra.mrb[0].mxu0 %v4784
          %v4844 = vpop.f32.mrb[0].mxu0
          %v4845 = vadd.f32 0.0, %v4844
          %v4846 = vpop.f32.mrb[0].mxu0
          %v4847 = vpop.f32.mrb[0].mxu0
          %v4848 = vpop.f32.mrb[0].mxu0
          %4849 = vdwg.mxu0
          %4850 = vst [vmem:[#allocation3] sm:$0xff] %v4821
          %4851 = vst [vmem:[#allocation3 + $0x8] sm:$0xff] %v4824
          %4852 = vst [vmem:[#allocation3 + $0x10] sm:$0xff] %v4829
          %4853 = vst [vmem:[#allocation3 + $0x18] sm:$0xff] %v4832
          %4854 = vst [vmem:[#allocation3 + $0x20] sm:$0xff] %v4837
          %4855 = vst [vmem:[#allocation3 + $0x28] sm:$0xff] %v4840
          %4856 = vst [vmem:[#allocation3 + $0x30] sm:$0xff] %v4845
        $region92: #{tpu_custom_call.1} parent=83 // pred_fallthru
          _
        %s4857 = sand.u32 %s413, 1
        %s4858 = scalar_lea.sflag [#allocation6], %s4857
        %s4859 = sand.u32 %s413, 1
        %s4860 = smul.addr %s4859, 256
        %s4861 = scalar_lea.vmem [#allocation5], %s4860
        // Predicated region
        $region93: #{tpu_custom_call.1} parent=83 // pred_check
          %p4862 = pneg %p397
        $region94: #{tpu_custom_call.1} parent=83 // pred_check_branch
          %4864 = sbr.rel (%p4862) target = $region96
        $region95: #{tpu_custom_call.1} parent=83 // pred_region
          %s4866 = ssub.s32 896, 896
          %4867 = vsyncadd [#allocation4], %s4866
          %s4868 = sshll.u32 [#allocation3], 4
          %s4869 = int_to_ptr.vmem [resolvable:$true] %s4868
          %4874 = dma.vmem_to_hbm [thread:$0]  %s4869, 896, %s16, [#allocation4], 128, 128, 8
        $region96: #{tpu_custom_call.1} parent=83 // pred_fallthru
          _
        // Predicated region
        $region97: #{tpu_custom_call.1} parent=83 // pred_check
          %p4875 = pneg %p423
        $region98: #{tpu_custom_call.1} parent=83 // pred_check_branch
          %4877 = sbr.rel (%p4875) target = $region100
        $region99: #{tpu_custom_call.1} parent=83 // pred_region
          %s4878 = smul.u32 32, %s33
          %s4880 = ssub.s32 4096, 4096
          %4881 = vsyncadd %s4858, %s4880
          %s4882 = smul.addr %s4878, 128
          %s4883 = scalar_lea.hbm %s17, %s4882
          %s4884 = sshll.u32 %s4861, 4
          %s4885 = int_to_ptr.vmem [resolvable:$true] %s4884
          %4890 = dma.vmem_to_hbm [thread:$0]  %s4885, 4096, %s4883, %s4858, 128, 128, 8
        $region100: #{tpu_custom_call.1} parent=83 // pred_fallthru
          _
        // Predicated region
        $region101: #{tpu_custom_call.1} parent=83 // pred_check
          %p4891 = pneg %p397
        $region102: #{tpu_custom_call.1} parent=83 // pred_check_branch
          %4893 = sbr.rel (%p4891) target = $region104
        $region103: #{tpu_custom_call.1} parent=83 // pred_region
          %4894 = dma.done [#allocation4], 896
        $region104: #{tpu_custom_call.1} parent=83 // pred_fallthru
          _
      $region84: #{tpu_custom_call.1} parent=5 // pred_fallthru
        _
      %p4895 = scmp.le.s32.totalorder 2, %s28
      // Predicated region
      $region105: #{tpu_custom_call.1} parent=5 // pred_check
        %p4896 = pneg %p4895
      $region106: #{tpu_custom_call.1} parent=5 // pred_check_branch
        %4898 = sbr.rel (%p4896) target = $region108
      $region107: #{tpu_custom_call.1} parent=5 // pred_region
        %s4899 = ssub.s32 %s28, 2
        // Predicated region
        $region109: #{tpu_custom_call.1} parent=107 // pred_check
          %p4900 = pneg %p429
        $region110: #{tpu_custom_call.1} parent=107 // pred_check_branch
          %4902 = sbr.rel (%p4900) target = $region112
        $region111: #{tpu_custom_call.1} parent=107 // pred_region
          %s4903 = sand.u32 %s414, 1
          %s4904 = scalar_lea.sflag [#allocation6], %s4903
          %s4905 = sand.u32 %s414, 1
          %s4906 = smul.addr %s4905, 256
          %s4907 = scalar_lea.vmem [#allocation5], %s4906
          %4908 = dma.done %s4904, 4096
        $region112: #{tpu_custom_call.1} parent=107 // pred_fallthru
          _
      $region108: #{tpu_custom_call.1} parent=5 // pred_fallthru
        _
    $region6: #{tpu_custom_call.1} parent=1 // loop_footer
      %s32 = sadd.s32 1, %s28
    $region7: #{tpu_custom_call.1} parent=1 // loop_footer_branch
      %27 = sbr.rel target = $region3
    $region8: #{tpu_custom_call.1} parent=1 // loop_exit
      _
    %4909 = vsyncpa [#allocation4], 1
    %s4910 = scalar_lea.sflag [#allocation4], 1
    %4911 = vsyncpa %s4910, 1
    %4912 = vsyncpa [#allocation6], 1
    %s4913 = scalar_lea.sflag [#allocation6], 1
    %4914 = vsyncpa %s4913, 1

</llo_original>
